<compile_context>
chip_gen: v7x
topology: tpu7x:2x2x1
jax: 0.10.0
libtpu: 0.0.40
codegen_flags: <defaults>
</compile_context>

<pallas_src>
import functools

import jax
import jax.numpy as jnp
from jax.experimental import pallas as pl
from jax.experimental.pallas import tpu as pltpu

LANE = 128


def _round_up(v, m):
    return (v + m - 1) // m * m


def _bn_train(y, eps=1e-5):
    """BatchNorm2d, training-mode batch stats, gamma=1 / beta=0 (PyTorch
    defaults at init).  Stats are per-channel (per column), computed over all
    N*H*W rows of the f32 accumulator -> exact."""
    mean = jnp.mean(y, axis=0, keepdims=True)
    var = jnp.mean((y - mean) * (y - mean), axis=0, keepdims=True)
    return (y - mean) * jax.lax.rsqrt(var + eps)


# ---------------------------------------------------------------------------
# Single fused kernel: conv_block -> conv_block -> upscale_block
# ---------------------------------------------------------------------------
def _decoder_block_kernel(x_ref, w1_ref, b1_ref, w2_ref, b2_ref,
                          wu_ref, bu_ref, o_ref,
                          col_ref, pad_ref, *, n, h, w, cin):
    """x_ref : (N, H, W, Cin)        bf16   input activation (NHWC)
       w1/w2 : (9*Cin, Cin)          bf16   conv weights, im2col layout
       b1/b2 : (1, Cin)              f32
       wu    : (Cin, Kp)             bf16   ConvTranspose weights, (ky,kx,co)
       bu    : (1, Kp)               f32
       o_ref : (M, Kp)               bf16   lane-dense output slab
       col   : (M, 9*Cin)            bf16   VMEM im2col slab (built once/conv)
       pad   : (N, H+2, W+2, Cin)    bf16   VMEM zero-padded activation
    """
    m = n * h * w

    def im2col_from_pad():
        # Build the (M, 9*Cin) im2col slab ONCE from the resident padded
        # activation.  Each shifted window is a single VMEM re-pack done once
        # per conv (not once per output-channel tile as before).
        for t in range(9):
            dy, dx = t // 3, t % 3
            col_ref[:, t * cin:(t + 1) * cin] = (
                pad_ref[:, dy:dy + h, dx:dx + w, :].reshape(m, cin))

    def write_interior(vals):
        # 'same' padding handled entirely in VMEM: interior write, the border
        # stays zero from the one-time memset below.
        pad_ref[:, 1:h + 1, 1:w + 1, :] = (
            vals.reshape(n, h, w, cin).astype(pad_ref.dtype))

    # ---- conv_block 1: Conv2d(3x3,'same') -> ReLU -> BatchNorm2d ---------
    pad_ref[...] = jnp.zeros_like(pad_ref)          # zero border (once)
    write_interior(x_ref[...])
    im2col_from_pad()
    y = jnp.dot(col_ref[...], w1_ref[...], preferred_element_type=jnp.float32)
    y = _bn_train(jnp.maximum(y + b1_ref[...], 0.0))

    # ---- conv_block 2 (intermediate never leaves VMEM) -------------------
    write_interior(y)                                # border still zero
    im2col_from_pad()
    z = jnp.dot(col_ref[...], w2_ref[...], preferred_element_type=jnp.float32)
    z = _bn_train(jnp.maximum(z + b2_ref[...], 0.0))

    # ---- upscale_block: ConvTranspose2d(k=2, s=2, pad=0) -> ReLU ---------
    u = jnp.dot(z.astype(jnp.bfloat16), wu_ref[...],
                preferred_element_type=jnp.float32)
    o_ref[...] = jnp.maximum(u + bu_ref[...], 0.0).astype(o_ref.dtype)


# ---------------------------------------------------------------------------
# decoder_block forward (NCHW in / NCHW out, matching PyTorch)
# ---------------------------------------------------------------------------
def decoder_block_forward(params, x_nchw):
    x = jnp.transpose(x_nchw, (0, 2, 3, 1)).astype(jnp.bfloat16)   # -> NHWC
    N, H, W, Cin = x.shape
    M = N * H * W
    K9 = 9 * Cin

    w1, b1 = params["conv1"]["w9"], params["conv1"]["b"]
    w2, b2 = params["conv2"]["w9"], params["conv2"]["b"]
    wu, bu = params["up"]["w2"], params["up"]["b2"]
    K4 = wu.shape[-1]                       # 4 * Cout
    Cout = K4 // 4
    Kp = _round_up(K4, LANE)                # lane-dense output slab
    if Kp != K4:
        wu = jnp.pad(wu, ((0, 0), (0, Kp - K4)))
        bu = jnp.pad(bu, ((0, 0), (0, Kp - K4)))

    kern = functools.partial(_decoder_block_kernel, n=N, h=H, w=W, cin=Cin)
    out = pl.pallas_call(
        kern,
        out_shape=jax.ShapeDtypeStruct((M, Kp), jnp.bfloat16),
        grid=(1,),
        in_specs=[
            pl.BlockSpec((N, H, W, Cin), lambda i: (0, 0, 0, 0)),
            pl.BlockSpec((K9, Cin), lambda i: (0, 0)),
            pl.BlockSpec((1, Cin), lambda i: (0, 0)),
            pl.BlockSpec((K9, Cin), lambda i: (0, 0)),
            pl.BlockSpec((1, Cin), lambda i: (0, 0)),
            pl.BlockSpec((Cin, Kp), lambda i: (0, 0)),
            pl.BlockSpec((1, Kp), lambda i: (0, 0)),
        ],
        out_specs=pl.BlockSpec((M, Kp), lambda i: (0, 0)),
        scratch_shapes=[
            pltpu.VMEM((M, K9), jnp.bfloat16),                 # im2col slab
            pltpu.VMEM((N, H + 2, W + 2, Cin), jnp.bfloat16),  # padded act.
        ],
        # Working set ~1.6 MiB: well under the 16/32 MiB scoped VMEM defaults
        # on v5e / v6e / v7x, so no explicit vmem_limit_bytes is needed.
        compiler_params=pltpu.CompilerParams(
            dimension_semantics=("arbitrary",)),
    )(x, w1, b1, w2, b2, wu, bu)

    out = out[:, :K4]
    # Lane-dense slab -> 2x2 pixel shuffle, done once at the boundary (bf16),
    # then cast + NCHW transpose at the module boundary.
    out = (out.reshape(N, H, W, 2, 2, Cout)
              .transpose(0, 1, 3, 2, 4, 5)
              .reshape(N, 2 * H, 2 * W, Cout))
    return jnp.transpose(out, (0, 3, 1, 2)).astype(jnp.float32)   # -> NCHW


# ---------------------------------------------------------------------------
# Parameter construction (PyTorch layouts kept for the reference check;
# kernel layouts pre-transposed + bf16 once at init)
# ---------------------------------------------------------------------------
def init_decoder_block_params(key, in_channels, out_channels):
    def conv_p(k, cin, cout):
        kw, kb = jax.random.split(k)
        w = 0.05 * jax.random.normal(kw, (cout, cin, 3, 3), jnp.float32)
        b = 0.05 * jax.random.normal(kb, (cout,), jnp.float32)
        # (Cout, Cin, 3, 3) -> (ky, kx, Cin, Cout) -> (9*Cin, Cout), bf16.
        w9 = jnp.transpose(w, (2, 3, 1, 0)).reshape(9 * cin, cout)
        return {"w_pt": w, "b_pt": b,
                "w9": w9.astype(jnp.bfloat16),
                "b": b.reshape(1, cout).astype(jnp.float32)}

    def convT_p(k, cin, cout):
        kw, kb = jax.random.split(k)
        w = 0.05 * jax.random.normal(kw, (cin, cout, 2, 2), jnp.float32)
        b = 0.05 * jax.random.normal(kb, (cout,), jnp.float32)
        # (Cin, Cout, 2, 2) -> (Cin, ky, kx, Cout) -> (Cin, 4*Cout), bf16.
        w2 = jnp.transpose(w, (0, 2, 3, 1)).reshape(cin, 4 * cout)
        b2 = jnp.tile(b, 4).reshape(1, 4 * cout)
        return {"w_pt": w, "b_pt": b,
                "w2": w2.astype(jnp.bfloat16), "b2": b2.astype(jnp.float32)}

    k1, k2, k3 = jax.random.split(key, 3)
    return {"conv1": conv_p(k1, in_channels, in_channels),
            "conv2": conv_p(k2, in_channels, in_channels),
            "up": convT_p(k3, in_channels, out_channels)}


# ---------------------------------------------------------------------------
# Pure-JAX f32 reference (independent formulation) for a loose sanity check
# ---------------------------------------------------------------------------
def _reference_decoder_block(params, x_nchw):
    x = jnp.transpose(x_nchw, (0, 2, 3, 1)).astype(jnp.float32)

    def conv_block_ref(h, w_pt, b_pt):
        y = jax.lax.conv_general_dilated(
            h, jnp.transpose(w_pt, (2, 3, 1, 0)),        # OIHW -> HWIO
            window_strides=(1, 1), padding="SAME",
            dimension_numbers=("NHWC", "HWIO", "NHWC"))
        y = jnp.maximum(y + b_pt, 0.0)
        mean = jnp.mean(y, axis=(0, 1, 2), keepdims=True)
        var = jnp.mean((y - mean) ** 2, axis=(0, 1, 2), keepdims=True)
        return (y - mean) * jax.lax.rsqrt(var + 1e-5)

    def upscale_ref(h, w_pt, b_pt):
        n, hh, ww, _ = h.shape
        cout = w_pt.shape[1]
        t = jnp.einsum("nhwc,coyx->nhwyxo", h, w_pt)
        t = t.transpose(0, 1, 3, 2, 4, 5).reshape(n, 2 * hh, 2 * ww, cout)
        return jnp.maximum(t + b_pt, 0.0)

    h = conv_block_ref(x, params["conv1"]["w_pt"], params["conv1"]["b_pt"])
    h = conv_block_ref(h, params["conv2"]["w_pt"], params["conv2"]["b_pt"])
    y = upscale_ref(h, params["up"]["w_pt"], params["up"]["b_pt"])
    return jnp.transpose(y, (0, 3, 1, 2))


if __name__ == "__main__":
    key = jax.random.PRNGKey(0)
    k_x, k_p = jax.random.split(key)

    # decoder_block(in_channels=128, out_channels=64) on a small NCHW input
    # (channel counts match a real decoder stage and keep lanes dense).
    in_channels, out_channels = 128, 64
    N, H, W = 2, 8, 8
    x = jax.random.normal(k_x, (N, in_channels, H, W), jnp.float32)
    params = init_decoder_block_params(k_p, in_channels, out_channels)

    fwd = jax.jit(decoder_block_forward)
    y = jax.block_until_ready(fwd(params, x))

    assert y.shape == (N, out_channels, 2 * H, 2 * W), y.shape
    assert bool(jnp.all(jnp.isfinite(y)))
    assert bool(jnp.all(y >= 0.0))                      # post-ReLU output

    # Loose check vs. the f32 reference (kernel uses bf16 MXU operands).
    y_ref = _reference_decoder_block(params, x)
    err = float(jnp.max(jnp.abs(y - y_ref)))
    scale = float(jnp.max(jnp.abs(y_ref))) + 1e-6
    assert err <= 0.1 * scale, (err, scale)

    print("KERNEL_OK")
</pallas_src>

<mosaic_0001>
module attributes {stable_mosaic.version = 11 : i64} {
  func.func @_decoder_block_kernel(%arg0: i32, %arg1: memref<2x8x8x128xbf16, #tpu.memory_space<vmem>>, %arg2: memref<1152x128xbf16, #tpu.memory_space<vmem>>, %arg3: memref<1x128xf32, #tpu.memory_space<vmem>>, %arg4: memref<1152x128xbf16, #tpu.memory_space<vmem>>, %arg5: memref<1x128xf32, #tpu.memory_space<vmem>>, %arg6: memref<128x256xbf16, #tpu.memory_space<vmem>>, %arg7: memref<1x256xf32, #tpu.memory_space<vmem>>, %arg8: memref<128x256xbf16, #tpu.memory_space<vmem>>, %arg9: memref<128x1152xbf16, #tpu.memory_space<vmem>>, %arg10: memref<2x10x10x128xbf16, #tpu.memory_space<vmem>>) attributes {dimension_semantics = [#tpu.dimension_semantics<arbitrary>], iteration_bounds = array<i64: 1>, scalar_prefetch = 0 : i64, scratch_operands = 2 : i64, tpu.core_type = #tpu.core_type<tc>, window_params = [{pipeline_mode = #tpu.pipeline_mode<synchronous>, transform_indices = @transform_0, window_bounds = array<i64: 2, 8, 8, 128>}, {pipeline_mode = #tpu.pipeline_mode<synchronous>, transform_indices = @transform_1, window_bounds = array<i64: 1152, 128>}, {pipeline_mode = #tpu.pipeline_mode<synchronous>, transform_indices = @transform_2, window_bounds = array<i64: 1, 128>}, {pipeline_mode = #tpu.pipeline_mode<synchronous>, transform_indices = @transform_3, window_bounds = array<i64: 1152, 128>}, {pipeline_mode = #tpu.pipeline_mode<synchronous>, transform_indices = @transform_4, window_bounds = array<i64: 1, 128>}, {pipeline_mode = #tpu.pipeline_mode<synchronous>, transform_indices = @transform_5, window_bounds = array<i64: 128, 256>}, {pipeline_mode = #tpu.pipeline_mode<synchronous>, transform_indices = @transform_6, window_bounds = array<i64: 1, 256>}, {pipeline_mode = #tpu.pipeline_mode<synchronous>, transform_indices = @transform_7, window_bounds = array<i64: 128, 256>}]} {
    %cst = arith.constant 0.000000e+00 : bf16
    %0 = vector.broadcast %cst : bf16 to vector<2x10x10x128xbf16>
    %c0 = arith.constant 0 : index
    %c0_0 = arith.constant 0 : index
    %c0_1 = arith.constant 0 : index
    %c0_2 = arith.constant 0 : index
    %1 = vector.load %arg10[%c0, %c0_0, %c0_1, %c0_2] : memref<2x10x10x128xbf16, #tpu.memory_space<vmem>>, vector<2x10x10x128xbf16>
    tpu.vector_store %arg10[%c0, %c0_0, %c0_1, %c0_2], %0 {strides = array<i32>} : memref<2x10x10x128xbf16, #tpu.memory_space<vmem>>, vector<2x10x10x128xbf16>,
    %c0_3 = arith.constant 0 : index
    %c0_4 = arith.constant 0 : index
    %c0_5 = arith.constant 0 : index
    %c0_6 = arith.constant 0 : index
    %2 = vector.load %arg1[%c0_3, %c0_4, %c0_5, %c0_6] : memref<2x8x8x128xbf16, #tpu.memory_space<vmem>>, vector<2x8x8x128xbf16>
    %c0_7 = arith.constant 0 : index
    %c1 = arith.constant 1 : index
    %c1_8 = arith.constant 1 : index
    %c0_9 = arith.constant 0 : index
    %3 = vector.load %arg10[%c0_7, %c1, %c1_8, %c0_9] : memref<2x10x10x128xbf16, #tpu.memory_space<vmem>>, vector<2x8x8x128xbf16>
    tpu.vector_store %arg10[%c0_7, %c1, %c1_8, %c0_9], %2 {strides = array<i32>} : memref<2x10x10x128xbf16, #tpu.memory_space<vmem>>, vector<2x8x8x128xbf16>,
    %c0_10 = arith.constant 0 : index
    %c0_11 = arith.constant 0 : index
    %c0_12 = arith.constant 0 : index
    %c0_13 = arith.constant 0 : index
    %4 = vector.load %arg10[%c0_10, %c0_11, %c0_12, %c0_13] : memref<2x10x10x128xbf16, #tpu.memory_space<vmem>>, vector<2x8x8x128xbf16>
    %5 = vector.shape_cast %4 : vector<2x8x8x128xbf16> to vector<128x128xbf16>
    %c0_14 = arith.constant 0 : index
    %c0_15 = arith.constant 0 : index
    %6 = vector.load %arg9[%c0_14, %c0_15] : memref<128x1152xbf16, #tpu.memory_space<vmem>>, vector<128x128xbf16>
    tpu.vector_store %arg9[%c0_14, %c0_15], %5 {strides = array<i32>} : memref<128x1152xbf16, #tpu.memory_space<vmem>>, vector<128x128xbf16>,
    %c0_16 = arith.constant 0 : index
    %c0_17 = arith.constant 0 : index
    %c1_18 = arith.constant 1 : index
    %c0_19 = arith.constant 0 : index
    %7 = vector.load %arg10[%c0_16, %c0_17, %c1_18, %c0_19] : memref<2x10x10x128xbf16, #tpu.memory_space<vmem>>, vector<2x8x8x128xbf16>
    %8 = vector.shape_cast %7 : vector<2x8x8x128xbf16> to vector<128x128xbf16>
    %c0_20 = arith.constant 0 : index
    %c128 = arith.constant 128 : index
    %9 = vector.load %arg9[%c0_20, %c128] : memref<128x1152xbf16, #tpu.memory_space<vmem>>, vector<128x128xbf16>
    tpu.vector_store %arg9[%c0_20, %c128], %8 {strides = array<i32>} : memref<128x1152xbf16, #tpu.memory_space<vmem>>, vector<128x128xbf16>,
    %c0_21 = arith.constant 0 : index
    %c0_22 = arith.constant 0 : index
    %c2 = arith.constant 2 : index
    %c0_23 = arith.constant 0 : index
    %10 = vector.load %arg10[%c0_21, %c0_22, %c2, %c0_23] : memref<2x10x10x128xbf16, #tpu.memory_space<vmem>>, vector<2x8x8x128xbf16>
    %11 = vector.shape_cast %10 : vector<2x8x8x128xbf16> to vector<128x128xbf16>
    %c0_24 = arith.constant 0 : index
    %c256 = arith.constant 256 : index
    %12 = vector.load %arg9[%c0_24, %c256] : memref<128x1152xbf16, #tpu.memory_space<vmem>>, vector<128x128xbf16>
    tpu.vector_store %arg9[%c0_24, %c256], %11 {strides = array<i32>} : memref<128x1152xbf16, #tpu.memory_space<vmem>>, vector<128x128xbf16>,
    %c0_25 = arith.constant 0 : index
    %c1_26 = arith.constant 1 : index
    %c0_27 = arith.constant 0 : index
    %c0_28 = arith.constant 0 : index
    %13 = vector.load %arg10[%c0_25, %c1_26, %c0_27, %c0_28] : memref<2x10x10x128xbf16, #tpu.memory_space<vmem>>, vector<2x8x8x128xbf16>
    %14 = vector.shape_cast %13 : vector<2x8x8x128xbf16> to vector<128x128xbf16>
    %c0_29 = arith.constant 0 : index
    %c384 = arith.constant 384 : index
    %15 = vector.load %arg9[%c0_29, %c384] : memref<128x1152xbf16, #tpu.memory_space<vmem>>, vector<128x128xbf16>
    tpu.vector_store %arg9[%c0_29, %c384], %14 {strides = array<i32>} : memref<128x1152xbf16, #tpu.memory_space<vmem>>, vector<128x128xbf16>,
    %c0_30 = arith.constant 0 : index
    %c1_31 = arith.constant 1 : index
    %c1_32 = arith.constant 1 : index
    %c0_33 = arith.constant 0 : index
    %16 = vector.load %arg10[%c0_30, %c1_31, %c1_32, %c0_33] : memref<2x10x10x128xbf16, #tpu.memory_space<vmem>>, vector<2x8x8x128xbf16>
    %17 = vector.shape_cast %16 : vector<2x8x8x128xbf16> to vector<128x128xbf16>
    %c0_34 = arith.constant 0 : index
    %c512 = arith.constant 512 : index
    %18 = vector.load %arg9[%c0_34, %c512] : memref<128x1152xbf16, #tpu.memory_space<vmem>>, vector<128x128xbf16>
    tpu.vector_store %arg9[%c0_34, %c512], %17 {strides = array<i32>} : memref<128x1152xbf16, #tpu.memory_space<vmem>>, vector<128x128xbf16>,
    %c0_35 = arith.constant 0 : index
    %c1_36 = arith.constant 1 : index
    %c2_37 = arith.constant 2 : index
    %c0_38 = arith.constant 0 : index
    %19 = vector.load %arg10[%c0_35, %c1_36, %c2_37, %c0_38] : memref<2x10x10x128xbf16, #tpu.memory_space<vmem>>, vector<2x8x8x128xbf16>
    %20 = vector.shape_cast %19 : vector<2x8x8x128xbf16> to vector<128x128xbf16>
    %c0_39 = arith.constant 0 : index
    %c640 = arith.constant 640 : index
    %21 = vector.load %arg9[%c0_39, %c640] : memref<128x1152xbf16, #tpu.memory_space<vmem>>, vector<128x128xbf16>
    tpu.vector_store %arg9[%c0_39, %c640], %20 {strides = array<i32>} : memref<128x1152xbf16, #tpu.memory_space<vmem>>, vector<128x128xbf16>,
    %c0_40 = arith.constant 0 : index
    %c2_41 = arith.constant 2 : index
    %c0_42 = arith.constant 0 : index
    %c0_43 = arith.constant 0 : index
    %22 = vector.load %arg10[%c0_40, %c2_41, %c0_42, %c0_43] : memref<2x10x10x128xbf16, #tpu.memory_space<vmem>>, vector<2x8x8x128xbf16>
    %23 = vector.shape_cast %22 : vector<2x8x8x128xbf16> to vector<128x128xbf16>
    %c0_44 = arith.constant 0 : index
    %c768 = arith.constant 768 : index
    %24 = vector.load %arg9[%c0_44, %c768] : memref<128x1152xbf16, #tpu.memory_space<vmem>>, vector<128x128xbf16>
    tpu.vector_store %arg9[%c0_44, %c768], %23 {strides = array<i32>} : memref<128x1152xbf16, #tpu.memory_space<vmem>>, vector<128x128xbf16>,
    %c0_45 = arith.constant 0 : index
    %c2_46 = arith.constant 2 : index
    %c1_47 = arith.constant 1 : index
    %c0_48 = arith.constant 0 : index
    %25 = vector.load %arg10[%c0_45, %c2_46, %c1_47, %c0_48] : memref<2x10x10x128xbf16, #tpu.memory_space<vmem>>, vector<2x8x8x128xbf16>
    %26 = vector.shape_cast %25 : vector<2x8x8x128xbf16> to vector<128x128xbf16>
    %c0_49 = arith.constant 0 : index
    %c896 = arith.constant 896 : index
    %27 = vector.load %arg9[%c0_49, %c896] : memref<128x1152xbf16, #tpu.memory_space<vmem>>, vector<128x128xbf16>
    tpu.vector_store %arg9[%c0_49, %c896], %26 {strides = array<i32>} : memref<128x1152xbf16, #tpu.memory_space<vmem>>, vector<128x128xbf16>,
    %c0_50 = arith.constant 0 : index
    %c2_51 = arith.constant 2 : index
    %c2_52 = arith.constant 2 : index
    %c0_53 = arith.constant 0 : index
    %28 = vector.load %arg10[%c0_50, %c2_51, %c2_52, %c0_53] : memref<2x10x10x128xbf16, #tpu.memory_space<vmem>>, vector<2x8x8x128xbf16>
    %29 = vector.shape_cast %28 : vector<2x8x8x128xbf16> to vector<128x128xbf16>
    %c0_54 = arith.constant 0 : index
    %c1024 = arith.constant 1024 : index
    %30 = vector.load %arg9[%c0_54, %c1024] : memref<128x1152xbf16, #tpu.memory_space<vmem>>, vector<128x128xbf16>
    tpu.vector_store %arg9[%c0_54, %c1024], %29 {strides = array<i32>} : memref<128x1152xbf16, #tpu.memory_space<vmem>>, vector<128x128xbf16>,
    %c0_55 = arith.constant 0 : index
    %c0_56 = arith.constant 0 : index
    %31 = vector.load %arg9[%c0_55, %c0_56] : memref<128x1152xbf16, #tpu.memory_space<vmem>>, vector<128x1152xbf16>
    %c0_57 = arith.constant 0 : index
    %c0_58 = arith.constant 0 : index
    %32 = vector.load %arg2[%c0_57, %c0_58] : memref<1152x128xbf16, #tpu.memory_space<vmem>>, vector<1152x128xbf16>
    %cst_59 = arith.constant dense<0.000000e+00> : vector<128x128xf32>
    %33 = tpu.matmul %31, %32, %cst_59 {dimension_numbers = #tpu.dot_dimension_numbers<[1], [0], [0], [1], [0, 0, 1, 1], [], []>} : vector<128x1152xbf16>, vector<1152x128xbf16>, vector<128x128xf32> -> vector<128x128xf32>
    %c0_60 = arith.constant 0 : index
    %c0_61 = arith.constant 0 : index
    %34 = vector.load %arg3[%c0_60, %c0_61] : memref<1x128xf32, #tpu.memory_space<vmem>>, vector<1x128xf32>
    %35 = vector.broadcast %34 : vector<1x128xf32> to vector<128x128xf32>
    %36 = arith.addf %33, %35 : vector<128x128xf32>
    %cst_62 = arith.constant 0.000000e+00 : f32
    %37 = vector.broadcast %cst_62 : f32 to vector<128x128xf32>
    %38 = arith.maximumf %36, %37 : vector<128x128xf32>
    %cst_63 = arith.constant dense<0.000000e+00> : vector<128xf32>
    %39 = vector.multi_reduction <add>, %38, %cst_63 [0] : vector<128x128xf32> to vector<128xf32>
    %40 = vector.shape_cast %39 : vector<128xf32> to vector<1x128xf32>
    %cst_64 = arith.constant 1.280000e+02 : f32
    %41 = vector.broadcast %cst_64 : f32 to vector<1x128xf32>
    %42 = arith.divf %40, %41 : vector<1x128xf32>
    %43 = vector.broadcast %42 : vector<1x128xf32> to vector<128x128xf32>
    %44 = arith.subf %38, %43 : vector<128x128xf32>
    %45 = vector.broadcast %42 : vector<1x128xf32> to vector<128x128xf32>
    %46 = arith.subf %38, %45 : vector<128x128xf32>
    %47 = arith.mulf %44, %46 : vector<128x128xf32>
    %cst_65 = arith.constant dense<0.000000e+00> : vector<128xf32>
    %48 = vector.multi_reduction <add>, %47, %cst_65 [0] : vector<128x128xf32> to vector<128xf32>
    %49 = vector.shape_cast %48 : vector<128xf32> to vector<1x128xf32>
    %cst_66 = arith.constant 1.280000e+02 : f32
    %50 = vector.broadcast %cst_66 : f32 to vector<1x128xf32>
    %51 = arith.divf %49, %50 : vector<1x128xf32>
    %52 = vector.broadcast %42 : vector<1x128xf32> to vector<128x128xf32>
    %53 = arith.subf %38, %52 : vector<128x128xf32>
    %cst_67 = arith.constant 9.99999974E-6 : f32
    %54 = vector.broadcast %cst_67 : f32 to vector<1x128xf32>
    %55 = arith.addf %51, %54 : vector<1x128xf32>
    %56 = math.rsqrt %55 : vector<1x128xf32>
    %57 = vector.broadcast %56 : vector<1x128xf32> to vector<128x128xf32>
    %58 = arith.mulf %53, %57 : vector<128x128xf32>
    %59 = vector.shape_cast %58 : vector<128x128xf32> to vector<2x8x8x128xf32>
    %60 = arith.truncf %59 : vector<2x8x8x128xf32> to vector<2x8x8x128xbf16>
    %c0_68 = arith.constant 0 : index
    %c1_69 = arith.constant 1 : index
    %c1_70 = arith.constant 1 : index
    %c0_71 = arith.constant 0 : index
    %61 = vector.load %arg10[%c0_68, %c1_69, %c1_70, %c0_71] : memref<2x10x10x128xbf16, #tpu.memory_space<vmem>>, vector<2x8x8x128xbf16>
    tpu.vector_store %arg10[%c0_68, %c1_69, %c1_70, %c0_71], %60 {strides = array<i32>} : memref<2x10x10x128xbf16, #tpu.memory_space<vmem>>, vector<2x8x8x128xbf16>,
    %c0_72 = arith.constant 0 : index
    %c0_73 = arith.constant 0 : index
    %c0_74 = arith.constant 0 : index
    %c0_75 = arith.constant 0 : index
    %62 = vector.load %arg10[%c0_72, %c0_73, %c0_74, %c0_75] : memref<2x10x10x128xbf16, #tpu.memory_space<vmem>>, vector<2x8x8x128xbf16>
    %63 = vector.shape_cast %62 : vector<2x8x8x128xbf16> to vector<128x128xbf16>
    %c0_76 = arith.constant 0 : index
    %c0_77 = arith.constant 0 : index
    %64 = vector.load %arg9[%c0_76, %c0_77] : memref<128x1152xbf16, #tpu.memory_space<vmem>>, vector<128x128xbf16>
    tpu.vector_store %arg9[%c0_76, %c0_77], %63 {strides = array<i32>} : memref<128x1152xbf16, #tpu.memory_space<vmem>>, vector<128x128xbf16>,
    %c0_78 = arith.constant 0 : index
    %c0_79 = arith.constant 0 : index
    %c1_80 = arith.constant 1 : index
    %c0_81 = arith.constant 0 : index
    %65 = vector.load %arg10[%c0_78, %c0_79, %c1_80, %c0_81] : memref<2x10x10x128xbf16, #tpu.memory_space<vmem>>, vector<2x8x8x128xbf16>
    %66 = vector.shape_cast %65 : vector<2x8x8x128xbf16> to vector<128x128xbf16>
    %c0_82 = arith.constant 0 : index
    %c128_83 = arith.constant 128 : index
    %67 = vector.load %arg9[%c0_82, %c128_83] : memref<128x1152xbf16, #tpu.memory_space<vmem>>, vector<128x128xbf16>
    tpu.vector_store %arg9[%c0_82, %c128_83], %66 {strides = array<i32>} : memref<128x1152xbf16, #tpu.memory_space<vmem>>, vector<128x128xbf16>,
    %c0_84 = arith.constant 0 : index
    %c0_85 = arith.constant 0 : index
    %c2_86 = arith.constant 2 : index
    %c0_87 = arith.constant 0 : index
    %68 = vector.load %arg10[%c0_84, %c0_85, %c2_86, %c0_87] : memref<2x10x10x128xbf16, #tpu.memory_space<vmem>>, vector<2x8x8x128xbf16>
    %69 = vector.shape_cast %68 : vector<2x8x8x128xbf16> to vector<128x128xbf16>
    %c0_88 = arith.constant 0 : index
    %c256_89 = arith.constant 256 : index
    %70 = vector.load %arg9[%c0_88, %c256_89] : memref<128x1152xbf16, #tpu.memory_space<vmem>>, vector<128x128xbf16>
    tpu.vector_store %arg9[%c0_88, %c256_89], %69 {strides = array<i32>} : memref<128x1152xbf16, #tpu.memory_space<vmem>>, vector<128x128xbf16>,
    %c0_90 = arith.constant 0 : index
    %c1_91 = arith.constant 1 : index
    %c0_92 = arith.constant 0 : index
    %c0_93 = arith.constant 0 : index
    %71 = vector.load %arg10[%c0_90, %c1_91, %c0_92, %c0_93] : memref<2x10x10x128xbf16, #tpu.memory_space<vmem>>, vector<2x8x8x128xbf16>
    %72 = vector.shape_cast %71 : vector<2x8x8x128xbf16> to vector<128x128xbf16>
    %c0_94 = arith.constant 0 : index
    %c384_95 = arith.constant 384 : index
    %73 = vector.load %arg9[%c0_94, %c384_95] : memref<128x1152xbf16, #tpu.memory_space<vmem>>, vector<128x128xbf16>
    tpu.vector_store %arg9[%c0_94, %c384_95], %72 {strides = array<i32>} : memref<128x1152xbf16, #tpu.memory_space<vmem>>, vector<128x128xbf16>,
    %c0_96 = arith.constant 0 : index
    %c1_97 = arith.constant 1 : index
    %c1_98 = arith.constant 1 : index
    %c0_99 = arith.constant 0 : index
    %74 = vector.load %arg10[%c0_96, %c1_97, %c1_98, %c0_99] : memref<2x10x10x128xbf16, #tpu.memory_space<vmem>>, vector<2x8x8x128xbf16>
    %75 = vector.shape_cast %74 : vector<2x8x8x128xbf16> to vector<128x128xbf16>
    %c0_100 = arith.constant 0 : index
    %c512_101 = arith.constant 512 : index
    %76 = vector.load %arg9[%c0_100, %c512_101] : memref<128x1152xbf16, #tpu.memory_space<vmem>>, vector<128x128xbf16>
    tpu.vector_store %arg9[%c0_100, %c512_101], %75 {strides = array<i32>} : memref<128x1152xbf16, #tpu.memory_space<vmem>>, vector<128x128xbf16>,
    %c0_102 = arith.constant 0 : index
    %c1_103 = arith.constant 1 : index
    %c2_104 = arith.constant 2 : index
    %c0_105 = arith.constant 0 : index
    %77 = vector.load %arg10[%c0_102, %c1_103, %c2_104, %c0_105] : memref<2x10x10x128xbf16, #tpu.memory_space<vmem>>, vector<2x8x8x128xbf16>
    %78 = vector.shape_cast %77 : vector<2x8x8x128xbf16> to vector<128x128xbf16>
    %c0_106 = arith.constant 0 : index
    %c640_107 = arith.constant 640 : index
    %79 = vector.load %arg9[%c0_106, %c640_107] : memref<128x1152xbf16, #tpu.memory_space<vmem>>, vector<128x128xbf16>
    tpu.vector_store %arg9[%c0_106, %c640_107], %78 {strides = array<i32>} : memref<128x1152xbf16, #tpu.memory_space<vmem>>, vector<128x128xbf16>,
    %c0_108 = arith.constant 0 : index
    %c2_109 = arith.constant 2 : index
    %c0_110 = arith.constant 0 : index
    %c0_111 = arith.constant 0 : index
    %80 = vector.load %arg10[%c0_108, %c2_109, %c0_110, %c0_111] : memref<2x10x10x128xbf16, #tpu.memory_space<vmem>>, vector<2x8x8x128xbf16>
    %81 = vector.shape_cast %80 : vector<2x8x8x128xbf16> to vector<128x128xbf16>
    %c0_112 = arith.constant 0 : index
    %c768_113 = arith.constant 768 : index
    %82 = vector.load %arg9[%c0_112, %c768_113] : memref<128x1152xbf16, #tpu.memory_space<vmem>>, vector<128x128xbf16>
    tpu.vector_store %arg9[%c0_112, %c768_113], %81 {strides = array<i32>} : memref<128x1152xbf16, #tpu.memory_space<vmem>>, vector<128x128xbf16>,
    %c0_114 = arith.constant 0 : index
    %c2_115 = arith.constant 2 : index
    %c1_116 = arith.constant 1 : index
    %c0_117 = arith.constant 0 : index
    %83 = vector.load %arg10[%c0_114, %c2_115, %c1_116, %c0_117] : memref<2x10x10x128xbf16, #tpu.memory_space<vmem>>, vector<2x8x8x128xbf16>
    %84 = vector.shape_cast %83 : vector<2x8x8x128xbf16> to vector<128x128xbf16>
    %c0_118 = arith.constant 0 : index
    %c896_119 = arith.constant 896 : index
    %85 = vector.load %arg9[%c0_118, %c896_119] : memref<128x1152xbf16, #tpu.memory_space<vmem>>, vector<128x128xbf16>
    tpu.vector_store %arg9[%c0_118, %c896_119], %84 {strides = array<i32>} : memref<128x1152xbf16, #tpu.memory_space<vmem>>, vector<128x128xbf16>,
    %c0_120 = arith.constant 0 : index
    %c2_121 = arith.constant 2 : index
    %c2_122 = arith.constant 2 : index
    %c0_123 = arith.constant 0 : index
    %86 = vector.load %arg10[%c0_120, %c2_121, %c2_122, %c0_123] : memref<2x10x10x128xbf16, #tpu.memory_space<vmem>>, vector<2x8x8x128xbf16>
    %87 = vector.shape_cast %86 : vector<2x8x8x128xbf16> to vector<128x128xbf16>
    %c0_124 = arith.constant 0 : index
    %c1024_125 = arith.constant 1024 : index
    %88 = vector.load %arg9[%c0_124, %c1024_125] : memref<128x1152xbf16, #tpu.memory_space<vmem>>, vector<128x128xbf16>
    tpu.vector_store %arg9[%c0_124, %c1024_125], %87 {strides = array<i32>} : memref<128x1152xbf16, #tpu.memory_space<vmem>>, vector<128x128xbf16>,
    %c0_126 = arith.constant 0 : index
    %c0_127 = arith.constant 0 : index
    %89 = vector.load %arg9[%c0_126, %c0_127] : memref<128x1152xbf16, #tpu.memory_space<vmem>>, vector<128x1152xbf16>
    %c0_128 = arith.constant 0 : index
    %c0_129 = arith.constant 0 : index
    %90 = vector.load %arg4[%c0_128, %c0_129] : memref<1152x128xbf16, #tpu.memory_space<vmem>>, vector<1152x128xbf16>
    %cst_130 = arith.constant dense<0.000000e+00> : vector<128x128xf32>
    %91 = tpu.matmul %89, %90, %cst_130 {dimension_numbers = #tpu.dot_dimension_numbers<[1], [0], [0], [1], [0, 0, 1, 1], [], []>} : vector<128x1152xbf16>, vector<1152x128xbf16>, vector<128x128xf32> -> vector<128x128xf32>
    %c0_131 = arith.constant 0 : index
    %c0_132 = arith.constant 0 : index
    %92 = vector.load %arg5[%c0_131, %c0_132] : memref<1x128xf32, #tpu.memory_space<vmem>>, vector<1x128xf32>
    %93 = vector.broadcast %92 : vector<1x128xf32> to vector<128x128xf32>
    %94 = arith.addf %91, %93 : vector<128x128xf32>
    %cst_133 = arith.constant 0.000000e+00 : f32
    %95 = vector.broadcast %cst_133 : f32 to vector<128x128xf32>
    %96 = arith.maximumf %94, %95 : vector<128x128xf32>
    %cst_134 = arith.constant dense<0.000000e+00> : vector<128xf32>
    %97 = vector.multi_reduction <add>, %96, %cst_134 [0] : vector<128x128xf32> to vector<128xf32>
    %98 = vector.shape_cast %97 : vector<128xf32> to vector<1x128xf32>
    %cst_135 = arith.constant 1.280000e+02 : f32
    %99 = vector.broadcast %cst_135 : f32 to vector<1x128xf32>
    %100 = arith.divf %98, %99 : vector<1x128xf32>
    %101 = vector.broadcast %100 : vector<1x128xf32> to vector<128x128xf32>
    %102 = arith.subf %96, %101 : vector<128x128xf32>
    %103 = vector.broadcast %100 : vector<1x128xf32> to vector<128x128xf32>
    %104 = arith.subf %96, %103 : vector<128x128xf32>
    %105 = arith.mulf %102, %104 : vector<128x128xf32>
    %cst_136 = arith.constant dense<0.000000e+00> : vector<128xf32>
    %106 = vector.multi_reduction <add>, %105, %cst_136 [0] : vector<128x128xf32> to vector<128xf32>
    %107 = vector.shape_cast %106 : vector<128xf32> to vector<1x128xf32>
    %cst_137 = arith.constant 1.280000e+02 : f32
    %108 = vector.broadcast %cst_137 : f32 to vector<1x128xf32>
    %109 = arith.divf %107, %108 : vector<1x128xf32>
    %110 = vector.broadcast %100 : vector<1x128xf32> to vector<128x128xf32>
    %111 = arith.subf %96, %110 : vector<128x128xf32>
    %cst_138 = arith.constant 9.99999974E-6 : f32
    %112 = vector.broadcast %cst_138 : f32 to vector<1x128xf32>
    %113 = arith.addf %109, %112 : vector<1x128xf32>
    %114 = math.rsqrt %113 : vector<1x128xf32>
    %115 = vector.broadcast %114 : vector<1x128xf32> to vector<128x128xf32>
    %116 = arith.mulf %111, %115 : vector<128x128xf32>
    %117 = arith.truncf %116 : vector<128x128xf32> to vector<128x128xbf16>
    %c0_139 = arith.constant 0 : index
    %c0_140 = arith.constant 0 : index
    %118 = vector.load %arg6[%c0_139, %c0_140] : memref<128x256xbf16, #tpu.memory_space<vmem>>, vector<128x256xbf16>
    %cst_141 = arith.constant dense<0.000000e+00> : vector<128x256xf32>
    %119 = tpu.matmul %117, %118, %cst_141 {dimension_numbers = #tpu.dot_dimension_numbers<[1], [0], [0], [1], [0, 0, 1, 1], [], []>} : vector<128x128xbf16>, vector<128x256xbf16>, vector<128x256xf32> -> vector<128x256xf32>
    %c0_142 = arith.constant 0 : index
    %c0_143 = arith.constant 0 : index
    %120 = vector.load %arg7[%c0_142, %c0_143] : memref<1x256xf32, #tpu.memory_space<vmem>>, vector<1x256xf32>
    %121 = vector.broadcast %120 : vector<1x256xf32> to vector<128x256xf32>
    %122 = arith.addf %119, %121 : vector<128x256xf32>
    %cst_144 = arith.constant 0.000000e+00 : f32
    %123 = vector.broadcast %cst_144 : f32 to vector<128x256xf32>
    %124 = arith.maximumf %122, %123 : vector<128x256xf32>
    %125 = arith.truncf %124 : vector<128x256xf32> to vector<128x256xbf16>
    %c0_145 = arith.constant 0 : index
    %c0_146 = arith.constant 0 : index
    %126 = vector.load %arg8[%c0_145, %c0_146] : memref<128x256xbf16, #tpu.memory_space<vmem>>, vector<128x256xbf16>
    tpu.vector_store %arg8[%c0_145, %c0_146], %125 {strides = array<i32>} : memref<128x256xbf16, #tpu.memory_space<vmem>>, vector<128x256xbf16>,
    return
  }
  func.func @transform_0(%arg0: i32) -> (i32, i32, i32, i32) {
    %c0_i32 = arith.constant 0 : i32
    %c0_i32_0 = arith.constant 0 : i32
    %c0_i32_1 = arith.constant 0 : i32
    %c0_i32_2 = arith.constant 0 : i32
    %c0_i32_3 = arith.constant 0 : i32
    return %c0_i32, %c0_i32_0, %c0_i32_1, %c0_i32_2 : i32, i32, i32, i32
  }
  func.func @transform_1(%arg0: i32) -> (i32, i32) {
    %c0_i32 = arith.constant 0 : i32
    %c0_i32_0 = arith.constant 0 : i32
    %c0_i32_1 = arith.constant 0 : i32
    return %c0_i32, %c0_i32_0 : i32, i32
  }
  func.func @transform_2(%arg0: i32) -> (i32, i32) {
    %c0_i32 = arith.constant 0 : i32
    %c0_i32_0 = arith.constant 0 : i32
    %c0_i32_1 = arith.constant 0 : i32
    return %c0_i32, %c0_i32_0 : i32, i32
  }
  func.func @transform_3(%arg0: i32) -> (i32, i32) {
    %c0_i32 = arith.constant 0 : i32
    %c0_i32_0 = arith.constant 0 : i32
    %c0_i32_1 = arith.constant 0 : i32
    return %c0_i32, %c0_i32_0 : i32, i32
  }
  func.func @transform_4(%arg0: i32) -> (i32, i32) {
    %c0_i32 = arith.constant 0 : i32
    %c0_i32_0 = arith.constant 0 : i32
    %c0_i32_1 = arith.constant 0 : i32
    return %c0_i32, %c0_i32_0 : i32, i32
  }
  func.func @transform_5(%arg0: i32) -> (i32, i32) {
    %c0_i32 = arith.constant 0 : i32
    %c0_i32_0 = arith.constant 0 : i32
    %c0_i32_1 = arith.constant 0 : i32
    return %c0_i32, %c0_i32_0 : i32, i32
  }
  func.func @transform_6(%arg0: i32) -> (i32, i32) {
    %c0_i32 = arith.constant 0 : i32
    %c0_i32_0 = arith.constant 0 : i32
    %c0_i32_1 = arith.constant 0 : i32
    return %c0_i32, %c0_i32_0 : i32, i32
  }
  func.func @transform_7(%arg0: i32) -> (i32, i32) {
    %c0_i32 = arith.constant 0 : i32
    %c0_i32_0 = arith.constant 0 : i32
    %c0_i32_1 = arith.constant 0 : i32
    return %c0_i32, %c0_i32_0 : i32, i32
  }
}

</mosaic_0001>

<llo_original>
// kernel: decoder_block_forward.1
$region0: #{decoder_block_forward.1}
  #allocation0 [shape = 'u32[]', space=smem, size = 0x4, offset = 0x4, fixed_abs, tag = 'smem constant byte address 0x4 - core index']
  #allocation1 [shape = 'u32[144,128]{1,0:T(1,128)}', space=vmem, size = 0x12000, scoped, tag = 'internal scratch']
  #allocation2 [shape = 'bf16[128,1152]{1,0:T(16,128)(2,1)}', space=vmem, size = 0x48000, scoped, tag = 'scratch operand']
  #allocation3 [shape = 'bf16[2,10,10,128]{3,2,1,0:T(8,128)(2,1)}', space=vmem, size = 0x14000, scoped, tag = 'scratch operand']
  %s0 = inlined_call_operand.vmem [shape: bf16[2,8,8,128], index: 0, kind: input, shape index: {}]
  %s1 = inlined_call_operand.hbm [shape: bf16[1152,128], index: 1, kind: input, shape index: {}]
  %s2 = inlined_call_operand.vmem [shape: f32[1,128], index: 2, kind: input, shape index: {}]
  %s3 = inlined_call_operand.hbm [shape: bf16[1152,128], index: 3, kind: input, shape index: {}]
  %s4 = inlined_call_operand.vmem [shape: f32[1,128], index: 4, kind: input, shape index: {}]
  %s5 = inlined_call_operand.vmem [shape: bf16[128,256], index: 5, kind: input, shape index: {}]
  %s6 = inlined_call_operand.vmem [shape: f32[1,256], index: 6, kind: input, shape index: {}]
  %s7 = inlined_call_operand.vmem [shape: bf16[128,256], index: 7, kind: output, shape index: {}]
  %s8 = sld [smem:[#allocation0]]
  $region46: #{decoder_block_forward.1} parent=0
    _
  %s10 = ssub.s32 1, %s8
  %s11 = scalar_select 0, %s10, %s8
  $region1: #{decoder_block_forward.1} parent=0
    #allocation4 [shape = 'u8[294912]{0}', space=vmem, size = 0x48000, scoped, tag = 'input window, operand 1, single buffered']
    #allocation5 [shape = 's32[1]{0}', space=sflag, size = 0x4, scoped, tag = 'scoped memory for decoder_block_forward.1']
    #allocation6 [shape = 'u8[294912]{0}', space=vmem, size = 0x48000, scoped, tag = 'input window, operand 3, single buffered']
    #allocation7 [shape = 's32[1]{0}', space=sflag, size = 0x4, scoped, tag = 'scoped memory for decoder_block_forward.1']
    %12 = vsyncpa [#allocation5], 0
    %13 = vsyncpa [#allocation7], 0
    // Predicated region
    $region2: #{decoder_block_forward.1} parent=1 // pred_check
      _
    $region3: #{decoder_block_forward.1} parent=1 // pred_check_branch
      %15 = sbr.rel (0) target = $region5
    $region4: #{decoder_block_forward.1} parent=1 // pred_region
      _
    $region5: #{decoder_block_forward.1} parent=1 // pred_fallthru
      _
    // Predicated region
    $region6: #{decoder_block_forward.1} parent=1 // pred_check
      _
    $region7: #{decoder_block_forward.1} parent=1 // pred_check_branch
      %17 = sbr.rel (0) target = $region9
    $region8: #{decoder_block_forward.1} parent=1 // pred_region
      %s19 = ssub.s32 9216, 9216
      %20 = vsyncadd [#allocation5], %s19
      %s21 = sshll.u32 [#allocation4], 4
      %s22 = int_to_ptr.vmem [resolvable:$true] %s21
      %27 = dma.hbm_to_vmem [thread:$0]  %s1, 9216, %s22, [#allocation5], 64, 64, 4
    $region9: #{decoder_block_forward.1} parent=1 // pred_fallthru
      _
    // Predicated region
    $region10: #{decoder_block_forward.1} parent=1 // pred_check
      _
    $region11: #{decoder_block_forward.1} parent=1 // pred_check_branch
      %29 = sbr.rel (0) target = $region13
    $region12: #{decoder_block_forward.1} parent=1 // pred_region
      _
    $region13: #{decoder_block_forward.1} parent=1 // pred_fallthru
      _
    // Predicated region
    $region14: #{decoder_block_forward.1} parent=1 // pred_check
      _
    $region15: #{decoder_block_forward.1} parent=1 // pred_check_branch
      %31 = sbr.rel (0) target = $region17
    $region16: #{decoder_block_forward.1} parent=1 // pred_region
      %s33 = ssub.s32 9216, 9216
      %34 = vsyncadd [#allocation7], %s33
      %s35 = sshll.u32 [#allocation6], 4
      %s36 = int_to_ptr.vmem [resolvable:$true] %s35
      %41 = dma.hbm_to_vmem [thread:$0]  %s3, 9216, %s36, [#allocation7], 64, 64, 4
    $region17: #{decoder_block_forward.1} parent=1 // pred_fallthru
      _
    // Predicated region
    $region18: #{decoder_block_forward.1} parent=1 // pred_check
      _
    $region19: #{decoder_block_forward.1} parent=1 // pred_check_branch
      %43 = sbr.rel (0) target = $region21
    $region20: #{decoder_block_forward.1} parent=1 // pred_region
      _
    $region21: #{decoder_block_forward.1} parent=1 // pred_fallthru
      _
    // Predicated region
    $region22: #{decoder_block_forward.1} parent=1 // pred_check
      _
    $region23: #{decoder_block_forward.1} parent=1 // pred_check_branch
      %45 = sbr.rel (0) target = $region25
    $region24: #{decoder_block_forward.1} parent=1 // pred_region
      _
    $region25: #{decoder_block_forward.1} parent=1 // pred_fallthru
      _
    // Predicated region
    $region26: #{decoder_block_forward.1} parent=1 // pred_check
      _
    $region27: #{decoder_block_forward.1} parent=1 // pred_check_branch
      %47 = sbr.rel (0) target = $region29
    $region28: #{decoder_block_forward.1} parent=1 // pred_region
      _
    $region29: #{decoder_block_forward.1} parent=1 // pred_fallthru
      _
    // Predicated region
    $region30: #{decoder_block_forward.1} parent=1 // pred_check
      _
    $region31: #{decoder_block_forward.1} parent=1 // pred_check_branch
      %49 = sbr.rel (0) target = $region33
    $region32: #{decoder_block_forward.1} parent=1 // pred_region
      %50 = dma.done [#allocation5], 9216
    $region33: #{decoder_block_forward.1} parent=1 // pred_fallthru
      _
    // Predicated region
    $region34: #{decoder_block_forward.1} parent=1 // pred_check
      _
    $region35: #{decoder_block_forward.1} parent=1 // pred_check_branch
      %52 = sbr.rel (0) target = $region37
    $region36: #{decoder_block_forward.1} parent=1 // pred_region
      %53 = dma.done [#allocation7], 9216
    $region37: #{decoder_block_forward.1} parent=1 // pred_fallthru
      _
    %55 = vst [vmem:[#allocation3] sm:$0xf] 0
    %56 = vst [vmem:[#allocation3 + $0x4] sm:$0x1] 0
    %57 = vst [vmem:[#allocation3 + $0x8] sm:$0xf] 0
    %58 = vst [vmem:[#allocation3 + $0xc] sm:$0x1] 0
    %59 = vst [vmem:[#allocation3 + $0x10] sm:$0xf] 0
    %60 = vst [vmem:[#allocation3 + $0x14] sm:$0x1] 0
    %61 = vst [vmem:[#allocation3 + $0x18] sm:$0xf] 0
    %62 = vst [vmem:[#allocation3 + $0x1c] sm:$0x1] 0
    %63 = vst [vmem:[#allocation3 + $0x20] sm:$0xf] 0
    %64 = vst [vmem:[#allocation3 + $0x24] sm:$0x1] 0
    %65 = vst [vmem:[#allocation3 + $0x28] sm:$0xf] 0
    %66 = vst [vmem:[#allocation3 + $0x2c] sm:$0x1] 0
    %67 = vst [vmem:[#allocation3 + $0x30] sm:$0xf] 0
    %68 = vst [vmem:[#allocation3 + $0x34] sm:$0x1] 0
    %69 = vst [vmem:[#allocation3 + $0x38] sm:$0xf] 0
    %70 = vst [vmem:[#allocation3 + $0x3c] sm:$0x1] 0
    %71 = vst [vmem:[#allocation3 + $0x40] sm:$0xf] 0
    %72 = vst [vmem:[#allocation3 + $0x44] sm:$0x1] 0
    %73 = vst [vmem:[#allocation3 + $0x48] sm:$0xf] 0
    %74 = vst [vmem:[#allocation3 + $0x4c] sm:$0x1] 0
    %75 = vst [vmem:[#allocation3 + $0x50] sm:$0xf] 0
    %76 = vst [vmem:[#allocation3 + $0x54] sm:$0x1] 0
    %77 = vst [vmem:[#allocation3 + $0x58] sm:$0xf] 0
    %78 = vst [vmem:[#allocation3 + $0x5c] sm:$0x1] 0
    %79 = vst [vmem:[#allocation3 + $0x60] sm:$0xf] 0
    %80 = vst [vmem:[#allocation3 + $0x64] sm:$0x1] 0
    %81 = vst [vmem:[#allocation3 + $0x68] sm:$0xf] 0
    %82 = vst [vmem:[#allocation3 + $0x6c] sm:$0x1] 0
    %83 = vst [vmem:[#allocation3 + $0x70] sm:$0xf] 0
    %84 = vst [vmem:[#allocation3 + $0x74] sm:$0x1] 0
    %85 = vst [vmem:[#allocation3 + $0x78] sm:$0xf] 0
    %86 = vst [vmem:[#allocation3 + $0x7c] sm:$0x1] 0
    %87 = vst [vmem:[#allocation3 + $0x80] sm:$0xf] 0
    %88 = vst [vmem:[#allocation3 + $0x84] sm:$0x1] 0
    %89 = vst [vmem:[#allocation3 + $0x88] sm:$0xf] 0
    %90 = vst [vmem:[#allocation3 + $0x8c] sm:$0x1] 0
    %91 = vst [vmem:[#allocation3 + $0x90] sm:$0xf] 0
    %92 = vst [vmem:[#allocation3 + $0x94] sm:$0x1] 0
    %93 = vst [vmem:[#allocation3 + $0x98] sm:$0xf] 0
    %94 = vst [vmem:[#allocation3 + $0x9c] sm:$0x1] 0
    %v95 = vld [vmem:[%s0] sm:$0xf]
    %v96 = vld [vmem:[%s0 + $0x4] sm:$0xf]
    %v97 = vld [vmem:[%s0 + $0x8] sm:$0xf]
    %v98 = vld [vmem:[%s0 + $0xc] sm:$0xf]
    %v99 = vld [vmem:[%s0 + $0x10] sm:$0xf]
    %v100 = vld [vmem:[%s0 + $0x14] sm:$0xf]
    %v101 = vld [vmem:[%s0 + $0x18] sm:$0xf]
    %v102 = vld [vmem:[%s0 + $0x1c] sm:$0xf]
    %v103 = vld [vmem:[%s0 + $0x20] sm:$0xf]
    %v104 = vld [vmem:[%s0 + $0x24] sm:$0xf]
    %v105 = vld [vmem:[%s0 + $0x28] sm:$0xf]
    %v106 = vld [vmem:[%s0 + $0x2c] sm:$0xf]
    %v107 = vld [vmem:[%s0 + $0x30] sm:$0xf]
    %v108 = vld [vmem:[%s0 + $0x34] sm:$0xf]
    %v109 = vld [vmem:[%s0 + $0x38] sm:$0xf]
    %v110 = vld [vmem:[%s0 + $0x3c] sm:$0xf]
    %v112 = vshrl.u32 %v95, 16
    %v114 = vrot.slane %v112, 7
    %v115 = vshll.u32 %v95, 16
    %v117 = vor.u32 %v114, %v115
    %v118 = vrot.slane %v114, 4
    %v120 = vshrl.u32 %v96, 16
    %v122 = vrot.slane %v120, 7
    %v123 = vshll.u32 %v96, 16
    %v125 = vor.u32 %v122, %v123
    %v126 = vrot.slane %v122, 4
    %v128 = vshrl.u32 %v97, 16
    %v130 = vrot.slane %v128, 7
    %v131 = vshll.u32 %v97, 16
    %v133 = vor.u32 %v130, %v131
    %v134 = vrot.slane %v130, 4
    %v136 = vshrl.u32 %v98, 16
    %v138 = vrot.slane %v136, 7
    %v139 = vshll.u32 %v98, 16
    %v141 = vor.u32 %v138, %v139
    %v142 = vrot.slane %v138, 4
    %v144 = vshrl.u32 %v99, 16
    %v146 = vrot.slane %v144, 7
    %v147 = vshll.u32 %v99, 16
    %v149 = vor.u32 %v146, %v147
    %v150 = vrot.slane %v146, 4
    %v152 = vshrl.u32 %v100, 16
    %v154 = vrot.slane %v152, 7
    %v155 = vshll.u32 %v100, 16
    %v157 = vor.u32 %v154, %v155
    %v158 = vrot.slane %v154, 4
    %v160 = vshrl.u32 %v101, 16
    %v162 = vrot.slane %v160, 7
    %v163 = vshll.u32 %v101, 16
    %v165 = vor.u32 %v162, %v163
    %v166 = vrot.slane %v162, 4
    %v168 = vshrl.u32 %v102, 16
    %v170 = vrot.slane %v168, 7
    %v171 = vshll.u32 %v102, 16
    %v173 = vor.u32 %v170, %v171
    %v174 = vrot.slane %v170, 4
    %v176 = vshrl.u32 %v103, 16
    %v178 = vrot.slane %v176, 7
    %v179 = vshll.u32 %v103, 16
    %v181 = vor.u32 %v178, %v179
    %v182 = vrot.slane %v178, 4
    %v184 = vshrl.u32 %v104, 16
    %v186 = vrot.slane %v184, 7
    %v187 = vshll.u32 %v104, 16
    %v189 = vor.u32 %v186, %v187
    %v190 = vrot.slane %v186, 4
    %v192 = vshrl.u32 %v105, 16
    %v194 = vrot.slane %v192, 7
    %v195 = vshll.u32 %v105, 16
    %v197 = vor.u32 %v194, %v195
    %v198 = vrot.slane %v194, 4
    %v200 = vshrl.u32 %v106, 16
    %v202 = vrot.slane %v200, 7
    %v203 = vshll.u32 %v106, 16
    %v205 = vor.u32 %v202, %v203
    %v206 = vrot.slane %v202, 4
    %v208 = vshrl.u32 %v107, 16
    %v210 = vrot.slane %v208, 7
    %v211 = vshll.u32 %v107, 16
    %v213 = vor.u32 %v210, %v211
    %v214 = vrot.slane %v210, 4
    %v216 = vshrl.u32 %v108, 16
    %v218 = vrot.slane %v216, 7
    %v219 = vshll.u32 %v108, 16
    %v221 = vor.u32 %v218, %v219
    %v222 = vrot.slane %v218, 4
    %v224 = vshrl.u32 %v109, 16
    %v226 = vrot.slane %v224, 7
    %v227 = vshll.u32 %v109, 16
    %v229 = vor.u32 %v226, %v227
    %v230 = vrot.slane %v226, 4
    %v232 = vshrl.u32 %v110, 16
    %v234 = vrot.slane %v232, 7
    %v235 = vshll.u32 %v110, 16
    %v237 = vor.u32 %v234, %v235
    %v238 = vrot.slane %v234, 4
    %s271 = scalar_lea.vmem [#allocation3], 8
    %vm272 = vcmask 1043456
    %vm273 = vsmask.f32 7938
    %vm274 = vmand %vm272, %vm273
    %v275 = vld [vmem:[%s271] sm:$0xf]
    %v276 = vsel %vm274, %v117, %v275
    %277 = vst [vmem:[%s271] sm:$0xf] %v276
    %vm278 = vcmask 1040384
    %vm279 = vsmask.f32 256
    %vm280 = vmand %vm278, %vm279
    %v281 = vld [vmem:[%s271 + $0x4] sm:$0x1]
    %v282 = vsel %vm280, %v118, %v281
    %283 = vst [vmem:[%s271 + $0x4] sm:$0x1] %v282
    %v284 = vld [vmem:[%s271 + $0x8] sm:$0xf]
    %v285 = vsel %vm274, %v125, %v284
    %286 = vst [vmem:[%s271 + $0x8] sm:$0xf] %v285
    %v287 = vld [vmem:[%s271 + $0xc] sm:$0x1]
    %v288 = vsel %vm280, %v126, %v287
    %289 = vst [vmem:[%s271 + $0xc] sm:$0x1] %v288
    %v290 = vld [vmem:[%s271 + $0x10] sm:$0xf]
    %v291 = vsel %vm274, %v133, %v290
    %292 = vst [vmem:[%s271 + $0x10] sm:$0xf] %v291
    %v293 = vld [vmem:[%s271 + $0x14] sm:$0x1]
    %v294 = vsel %vm280, %v134, %v293
    %295 = vst [vmem:[%s271 + $0x14] sm:$0x1] %v294
    %v296 = vld [vmem:[%s271 + $0x18] sm:$0xf]
    %v297 = vsel %vm274, %v141, %v296
    %298 = vst [vmem:[%s271 + $0x18] sm:$0xf] %v297
    %v299 = vld [vmem:[%s271 + $0x1c] sm:$0x1]
    %v300 = vsel %vm280, %v142, %v299
    %301 = vst [vmem:[%s271 + $0x1c] sm:$0x1] %v300
    %v302 = vld [vmem:[%s271 + $0x20] sm:$0xf]
    %v303 = vsel %vm274, %v149, %v302
    %304 = vst [vmem:[%s271 + $0x20] sm:$0xf] %v303
    %v305 = vld [vmem:[%s271 + $0x24] sm:$0x1]
    %v306 = vsel %vm280, %v150, %v305
    %307 = vst [vmem:[%s271 + $0x24] sm:$0x1] %v306
    %v308 = vld [vmem:[%s271 + $0x28] sm:$0xf]
    %v309 = vsel %vm274, %v157, %v308
    %310 = vst [vmem:[%s271 + $0x28] sm:$0xf] %v309
    %v311 = vld [vmem:[%s271 + $0x2c] sm:$0x1]
    %v312 = vsel %vm280, %v158, %v311
    %313 = vst [vmem:[%s271 + $0x2c] sm:$0x1] %v312
    %v314 = vld [vmem:[%s271 + $0x30] sm:$0xf]
    %v315 = vsel %vm274, %v165, %v314
    %316 = vst [vmem:[%s271 + $0x30] sm:$0xf] %v315
    %v317 = vld [vmem:[%s271 + $0x34] sm:$0x1]
    %v318 = vsel %vm280, %v166, %v317
    %319 = vst [vmem:[%s271 + $0x34] sm:$0x1] %v318
    %v320 = vld [vmem:[%s271 + $0x38] sm:$0xf]
    %v321 = vsel %vm274, %v173, %v320
    %322 = vst [vmem:[%s271 + $0x38] sm:$0xf] %v321
    %v323 = vld [vmem:[%s271 + $0x3c] sm:$0x1]
    %v324 = vsel %vm280, %v174, %v323
    %325 = vst [vmem:[%s271 + $0x3c] sm:$0x1] %v324
    %v326 = vld [vmem:[%s271 + $0x50] sm:$0xf]
    %v327 = vsel %vm274, %v181, %v326
    %328 = vst [vmem:[%s271 + $0x50] sm:$0xf] %v327
    %v329 = vld [vmem:[%s271 + $0x54] sm:$0x1]
    %v330 = vsel %vm280, %v182, %v329
    %331 = vst [vmem:[%s271 + $0x54] sm:$0x1] %v330
    %v332 = vld [vmem:[%s271 + $0x58] sm:$0xf]
    %v333 = vsel %vm274, %v189, %v332
    %334 = vst [vmem:[%s271 + $0x58] sm:$0xf] %v333
    %v335 = vld [vmem:[%s271 + $0x5c] sm:$0x1]
    %v336 = vsel %vm280, %v190, %v335
    %337 = vst [vmem:[%s271 + $0x5c] sm:$0x1] %v336
    %v338 = vld [vmem:[%s271 + $0x60] sm:$0xf]
    %v339 = vsel %vm274, %v197, %v338
    %340 = vst [vmem:[%s271 + $0x60] sm:$0xf] %v339
    %v341 = vld [vmem:[%s271 + $0x64] sm:$0x1]
    %v342 = vsel %vm280, %v198, %v341
    %343 = vst [vmem:[%s271 + $0x64] sm:$0x1] %v342
    %v344 = vld [vmem:[%s271 + $0x68] sm:$0xf]
    %v345 = vsel %vm274, %v205, %v344
    %346 = vst [vmem:[%s271 + $0x68] sm:$0xf] %v345
    %v347 = vld [vmem:[%s271 + $0x6c] sm:$0x1]
    %v348 = vsel %vm280, %v206, %v347
    %349 = vst [vmem:[%s271 + $0x6c] sm:$0x1] %v348
    %v350 = vld [vmem:[%s271 + $0x70] sm:$0xf]
    %v351 = vsel %vm274, %v213, %v350
    %352 = vst [vmem:[%s271 + $0x70] sm:$0xf] %v351
    %v353 = vld [vmem:[%s271 + $0x74] sm:$0x1]
    %v354 = vsel %vm280, %v214, %v353
    %355 = vst [vmem:[%s271 + $0x74] sm:$0x1] %v354
    %v356 = vld [vmem:[%s271 + $0x78] sm:$0xf]
    %v357 = vsel %vm274, %v221, %v356
    %358 = vst [vmem:[%s271 + $0x78] sm:$0xf] %v357
    %v359 = vld [vmem:[%s271 + $0x7c] sm:$0x1]
    %v360 = vsel %vm280, %v222, %v359
    %361 = vst [vmem:[%s271 + $0x7c] sm:$0x1] %v360
    %v362 = vld [vmem:[%s271 + $0x80] sm:$0xf]
    %v363 = vsel %vm274, %v229, %v362
    %364 = vst [vmem:[%s271 + $0x80] sm:$0xf] %v363
    %v365 = vld [vmem:[%s271 + $0x84] sm:$0x1]
    %v366 = vsel %vm280, %v230, %v365
    %367 = vst [vmem:[%s271 + $0x84] sm:$0x1] %v366
    %v368 = vld [vmem:[%s271 + $0x88] sm:$0xf]
    %v369 = vsel %vm274, %v237, %v368
    %370 = vst [vmem:[%s271 + $0x88] sm:$0xf] %v369
    %v371 = vld [vmem:[%s271 + $0x8c] sm:$0x1]
    %v372 = vsel %vm280, %v238, %v371
    %373 = vst [vmem:[%s271 + $0x8c] sm:$0x1] %v372
    %v374 = vld [vmem:[#allocation3] sm:$0xf]
    %v375 = vld [vmem:[#allocation3 + $0x8] sm:$0xf]
    %v376 = vld [vmem:[#allocation3 + $0x10] sm:$0xf]
    %v377 = vld [vmem:[#allocation3 + $0x18] sm:$0xf]
    %v378 = vld [vmem:[#allocation3 + $0x20] sm:$0xf]
    %v379 = vld [vmem:[#allocation3 + $0x28] sm:$0xf]
    %v380 = vld [vmem:[#allocation3 + $0x30] sm:$0xf]
    %v381 = vld [vmem:[#allocation3 + $0x38] sm:$0xf]
    %v382 = vld [vmem:[#allocation3 + $0x50] sm:$0xf]
    %v383 = vld [vmem:[#allocation3 + $0x58] sm:$0xf]
    %v384 = vld [vmem:[#allocation3 + $0x60] sm:$0xf]
    %v385 = vld [vmem:[#allocation3 + $0x68] sm:$0xf]
    %v386 = vld [vmem:[#allocation3 + $0x70] sm:$0xf]
    %v387 = vld [vmem:[#allocation3 + $0x78] sm:$0xf]
    %v388 = vld [vmem:[#allocation3 + $0x80] sm:$0xf]
    %v389 = vld [vmem:[#allocation3 + $0x88] sm:$0xf]
    %v406 = vunpack.c.l.b16 %v374
    %v407 = vunpack.c.l.b16 %v375
    %v408 = vunpack.c.l.b16 %v376
    %v409 = vunpack.c.l.b16 %v377
    %v410 = vunpack.c.l.b16 %v378
    %v411 = vunpack.c.l.b16 %v379
    %v412 = vunpack.c.l.b16 %v380
    %v413 = vunpack.c.l.b16 %v381
    %v414 = vunpack.c.l.b16 %v382
    %v415 = vunpack.c.l.b16 %v383
    %v416 = vunpack.c.l.b16 %v384
    %v417 = vunpack.c.l.b16 %v385
    %v418 = vunpack.c.l.b16 %v386
    %v419 = vunpack.c.l.b16 %v387
    %v420 = vunpack.c.l.b16 %v388
    %v421 = vunpack.c.l.b16 %v389
    %v422 = vpack.c.b16 %v407, %v406
    %v423 = vpack.c.b16 %v409, %v408
    %v424 = vpack.c.b16 %v411, %v410
    %v425 = vpack.c.b16 %v413, %v412
    %v426 = vpack.c.b16 %v415, %v414
    %v427 = vpack.c.b16 %v417, %v416
    %v428 = vpack.c.b16 %v419, %v418
    %v429 = vpack.c.b16 %v421, %v420
    %438 = vst [vmem:[#allocation2] sm:$0xff] %v422
    %439 = vst [vmem:[#allocation2 + $0x48] sm:$0xff] %v423
    %440 = vst [vmem:[#allocation2 + $0x90] sm:$0xff] %v424
    %441 = vst [vmem:[#allocation2 + $0xd8] sm:$0xff] %v425
    %442 = vst [vmem:[#allocation2 + $0x120] sm:$0xff] %v426
    %443 = vst [vmem:[#allocation2 + $0x168] sm:$0xff] %v427
    %444 = vst [vmem:[#allocation2 + $0x1b0] sm:$0xff] %v428
    %445 = vst [vmem:[#allocation2 + $0x1f8] sm:$0xff] %v429
    %v446 = vld [vmem:[#allocation3] sm:$0xf]
    %v447 = vld [vmem:[#allocation3 + $0x4] sm:$0x1]
    %v448 = vld [vmem:[#allocation3 + $0x8] sm:$0xf]
    %v449 = vld [vmem:[#allocation3 + $0xc] sm:$0x1]
    %v450 = vld [vmem:[#allocation3 + $0x10] sm:$0xf]
    %v451 = vld [vmem:[#allocation3 + $0x14] sm:$0x1]
    %v452 = vld [vmem:[#allocation3 + $0x18] sm:$0xf]
    %v453 = vld [vmem:[#allocation3 + $0x1c] sm:$0x1]
    %v454 = vld [vmem:[#allocation3 + $0x20] sm:$0xf]
    %v455 = vld [vmem:[#allocation3 + $0x24] sm:$0x1]
    %v456 = vld [vmem:[#allocation3 + $0x28] sm:$0xf]
    %v457 = vld [vmem:[#allocation3 + $0x2c] sm:$0x1]
    %v458 = vld [vmem:[#allocation3 + $0x30] sm:$0xf]
    %v459 = vld [vmem:[#allocation3 + $0x34] sm:$0x1]
    %v460 = vld [vmem:[#allocation3 + $0x38] sm:$0xf]
    %v461 = vld [vmem:[#allocation3 + $0x3c] sm:$0x1]
    %v462 = vld [vmem:[#allocation3 + $0x50] sm:$0xf]
    %v463 = vld [vmem:[#allocation3 + $0x54] sm:$0x1]
    %v464 = vld [vmem:[#allocation3 + $0x58] sm:$0xf]
    %v465 = vld [vmem:[#allocation3 + $0x5c] sm:$0x1]
    %v466 = vld [vmem:[#allocation3 + $0x60] sm:$0xf]
    %v467 = vld [vmem:[#allocation3 + $0x64] sm:$0x1]
    %v468 = vld [vmem:[#allocation3 + $0x68] sm:$0xf]
    %v469 = vld [vmem:[#allocation3 + $0x6c] sm:$0x1]
    %v470 = vld [vmem:[#allocation3 + $0x70] sm:$0xf]
    %v471 = vld [vmem:[#allocation3 + $0x74] sm:$0x1]
    %v472 = vld [vmem:[#allocation3 + $0x78] sm:$0xf]
    %v473 = vld [vmem:[#allocation3 + $0x7c] sm:$0x1]
    %v474 = vld [vmem:[#allocation3 + $0x80] sm:$0xf]
    %v475 = vld [vmem:[#allocation3 + $0x84] sm:$0x1]
    %v476 = vld [vmem:[#allocation3 + $0x88] sm:$0xf]
    %v477 = vld [vmem:[#allocation3 + $0x8c] sm:$0x1]
    %vm478 = vsmask.f32 3328
    %vm479 = vsmask.f32 7440
    %vm480 = vmor %vm478, %vm479
    %v482 = vshrl.u32 %v446, 16
    %v484 = vrot.slane %v482, 4
    %v485 = vshll.u32 %v446, 16
    %v487 = vrot.slane %v485, 5
    %v488 = vor.u32 %v484, %v487
    %v489 = vrot.slane %v488, 4
    %v491 = vshll.u32 %v447, 16
    %v493 = vrot.slane %v491, 5
    %v494 = vsel %vm480, %v489, %v493
    %v496 = vshrl.u32 %v448, 16
    %v498 = vrot.slane %v496, 4
    %v499 = vshll.u32 %v448, 16
    %v501 = vrot.slane %v499, 5
    %v502 = vor.u32 %v498, %v501
    %v503 = vrot.slane %v502, 4
    %v505 = vshll.u32 %v449, 16
    %v507 = vrot.slane %v505, 5
    %v508 = vsel %vm480, %v503, %v507
    %v510 = vshrl.u32 %v450, 16
    %v512 = vrot.slane %v510, 4
    %v513 = vshll.u32 %v450, 16
    %v515 = vrot.slane %v513, 5
    %v516 = vor.u32 %v512, %v515
    %v517 = vrot.slane %v516, 4
    %v519 = vshll.u32 %v451, 16
    %v521 = vrot.slane %v519, 5
    %v522 = vsel %vm480, %v517, %v521
    %v524 = vshrl.u32 %v452, 16
    %v526 = vrot.slane %v524, 4
    %v527 = vshll.u32 %v452, 16
    %v529 = vrot.slane %v527, 5
    %v530 = vor.u32 %v526, %v529
    %v531 = vrot.slane %v530, 4
    %v533 = vshll.u32 %v453, 16
    %v535 = vrot.slane %v533, 5
    %v536 = vsel %vm480, %v531, %v535
    %v538 = vshrl.u32 %v454, 16
    %v540 = vrot.slane %v538, 4
    %v541 = vshll.u32 %v454, 16
    %v543 = vrot.slane %v541, 5
    %v544 = vor.u32 %v540, %v543
    %v545 = vrot.slane %v544, 4
    %v547 = vshll.u32 %v455, 16
    %v549 = vrot.slane %v547, 5
    %v550 = vsel %vm480, %v545, %v549
    %v552 = vshrl.u32 %v456, 16
    %v554 = vrot.slane %v552, 4
    %v555 = vshll.u32 %v456, 16
    %v557 = vrot.slane %v555, 5
    %v558 = vor.u32 %v554, %v557
    %v559 = vrot.slane %v558, 4
    %v561 = vshll.u32 %v457, 16
    %v563 = vrot.slane %v561, 5
    %v564 = vsel %vm480, %v559, %v563
    %v566 = vshrl.u32 %v458, 16
    %v568 = vrot.slane %v566, 4
    %v569 = vshll.u32 %v458, 16
    %v571 = vrot.slane %v569, 5
    %v572 = vor.u32 %v568, %v571
    %v573 = vrot.slane %v572, 4
    %v575 = vshll.u32 %v459, 16
    %v577 = vrot.slane %v575, 5
    %v578 = vsel %vm480, %v573, %v577
    %v580 = vshrl.u32 %v460, 16
    %v582 = vrot.slane %v580, 4
    %v583 = vshll.u32 %v460, 16
    %v585 = vrot.slane %v583, 5
    %v586 = vor.u32 %v582, %v585
    %v587 = vrot.slane %v586, 4
    %v589 = vshll.u32 %v461, 16
    %v591 = vrot.slane %v589, 5
    %v592 = vsel %vm480, %v587, %v591
    %v594 = vshrl.u32 %v462, 16
    %v596 = vrot.slane %v594, 4
    %v597 = vshll.u32 %v462, 16
    %v599 = vrot.slane %v597, 5
    %v600 = vor.u32 %v596, %v599
    %v601 = vrot.slane %v600, 4
    %v603 = vshll.u32 %v463, 16
    %v605 = vrot.slane %v603, 5
    %v606 = vsel %vm480, %v601, %v605
    %v608 = vshrl.u32 %v464, 16
    %v610 = vrot.slane %v608, 4
    %v611 = vshll.u32 %v464, 16
    %v613 = vrot.slane %v611, 5
    %v614 = vor.u32 %v610, %v613
    %v615 = vrot.slane %v614, 4
    %v617 = vshll.u32 %v465, 16
    %v619 = vrot.slane %v617, 5
    %v620 = vsel %vm480, %v615, %v619
    %v622 = vshrl.u32 %v466, 16
    %v624 = vrot.slane %v622, 4
    %v625 = vshll.u32 %v466, 16
    %v627 = vrot.slane %v625, 5
    %v628 = vor.u32 %v624, %v627
    %v629 = vrot.slane %v628, 4
    %v631 = vshll.u32 %v467, 16
    %v633 = vrot.slane %v631, 5
    %v634 = vsel %vm480, %v629, %v633
    %v636 = vshrl.u32 %v468, 16
    %v638 = vrot.slane %v636, 4
    %v639 = vshll.u32 %v468, 16
    %v641 = vrot.slane %v639, 5
    %v642 = vor.u32 %v638, %v641
    %v643 = vrot.slane %v642, 4
    %v645 = vshll.u32 %v469, 16
    %v647 = vrot.slane %v645, 5
    %v648 = vsel %vm480, %v643, %v647
    %v650 = vshrl.u32 %v470, 16
    %v652 = vrot.slane %v650, 4
    %v653 = vshll.u32 %v470, 16
    %v655 = vrot.slane %v653, 5
    %v656 = vor.u32 %v652, %v655
    %v657 = vrot.slane %v656, 4
    %v659 = vshll.u32 %v471, 16
    %v661 = vrot.slane %v659, 5
    %v662 = vsel %vm480, %v657, %v661
    %v664 = vshrl.u32 %v472, 16
    %v666 = vrot.slane %v664, 4
    %v667 = vshll.u32 %v472, 16
    %v669 = vrot.slane %v667, 5
    %v670 = vor.u32 %v666, %v669
    %v671 = vrot.slane %v670, 4
    %v673 = vshll.u32 %v473, 16
    %v675 = vrot.slane %v673, 5
    %v676 = vsel %vm480, %v671, %v675
    %v678 = vshrl.u32 %v474, 16
    %v680 = vrot.slane %v678, 4
    %v681 = vshll.u32 %v474, 16
    %v683 = vrot.slane %v681, 5
    %v684 = vor.u32 %v680, %v683
    %v685 = vrot.slane %v684, 4
    %v687 = vshll.u32 %v475, 16
    %v689 = vrot.slane %v687, 5
    %v690 = vsel %vm480, %v685, %v689
    %v692 = vshrl.u32 %v476, 16
    %v694 = vrot.slane %v692, 4
    %v695 = vshll.u32 %v476, 16
    %v697 = vrot.slane %v695, 5
    %v698 = vor.u32 %v694, %v697
    %v699 = vrot.slane %v698, 4
    %v701 = vshll.u32 %v477, 16
    %v703 = vrot.slane %v701, 5
    %v704 = vsel %vm480, %v699, %v703
    %v705 = vunpack.c.l.b16 %v494
    %v706 = vunpack.c.l.b16 %v508
    %v707 = vunpack.c.l.b16 %v522
    %v708 = vunpack.c.l.b16 %v536
    %v709 = vunpack.c.l.b16 %v550
    %v710 = vunpack.c.l.b16 %v564
    %v711 = vunpack.c.l.b16 %v578
    %v712 = vunpack.c.l.b16 %v592
    %v713 = vunpack.c.l.b16 %v606
    %v714 = vunpack.c.l.b16 %v620
    %v715 = vunpack.c.l.b16 %v634
    %v716 = vunpack.c.l.b16 %v648
    %v717 = vunpack.c.l.b16 %v662
    %v718 = vunpack.c.l.b16 %v676
    %v719 = vunpack.c.l.b16 %v690
    %v720 = vunpack.c.l.b16 %v704
    %v721 = vpack.c.b16 %v706, %v705
    %v722 = vpack.c.b16 %v708, %v707
    %v723 = vpack.c.b16 %v710, %v709
    %v724 = vpack.c.b16 %v712, %v711
    %v725 = vpack.c.b16 %v714, %v713
    %v726 = vpack.c.b16 %v716, %v715
    %v727 = vpack.c.b16 %v718, %v717
    %v728 = vpack.c.b16 %v720, %v719
    %737 = vst [vmem:[#allocation2 + $0x8] sm:$0xff] %v721
    %738 = vst [vmem:[#allocation2 + $0x50] sm:$0xff] %v722
    %739 = vst [vmem:[#allocation2 + $0x98] sm:$0xff] %v723
    %740 = vst [vmem:[#allocation2 + $0xe0] sm:$0xff] %v724
    %741 = vst [vmem:[#allocation2 + $0x128] sm:$0xff] %v725
    %742 = vst [vmem:[#allocation2 + $0x170] sm:$0xff] %v726
    %743 = vst [vmem:[#allocation2 + $0x1b8] sm:$0xff] %v727
    %744 = vst [vmem:[#allocation2 + $0x200] sm:$0xff] %v728
    %v745 = vld [vmem:[#allocation3] sm:$0xe]
    %v746 = vld [vmem:[#allocation3 + $0x4] sm:$0x1]
    %v747 = vld [vmem:[#allocation3 + $0x8] sm:$0xe]
    %v748 = vld [vmem:[#allocation3 + $0xc] sm:$0x1]
    %v749 = vld [vmem:[#allocation3 + $0x10] sm:$0xe]
    %v750 = vld [vmem:[#allocation3 + $0x14] sm:$0x1]
    %v751 = vld [vmem:[#allocation3 + $0x18] sm:$0xe]
    %v752 = vld [vmem:[#allocation3 + $0x1c] sm:$0x1]
    %v753 = vld [vmem:[#allocation3 + $0x20] sm:$0xe]
    %v754 = vld [vmem:[#allocation3 + $0x24] sm:$0x1]
    %v755 = vld [vmem:[#allocation3 + $0x28] sm:$0xe]
    %v756 = vld [vmem:[#allocation3 + $0x2c] sm:$0x1]
    %v757 = vld [vmem:[#allocation3 + $0x30] sm:$0xe]
    %v758 = vld [vmem:[#allocation3 + $0x34] sm:$0x1]
    %v759 = vld [vmem:[#allocation3 + $0x38] sm:$0xe]
    %v760 = vld [vmem:[#allocation3 + $0x3c] sm:$0x1]
    %v761 = vld [vmem:[#allocation3 + $0x50] sm:$0xe]
    %v762 = vld [vmem:[#allocation3 + $0x54] sm:$0x1]
    %v763 = vld [vmem:[#allocation3 + $0x58] sm:$0xe]
    %v764 = vld [vmem:[#allocation3 + $0x5c] sm:$0x1]
    %v765 = vld [vmem:[#allocation3 + $0x60] sm:$0xe]
    %v766 = vld [vmem:[#allocation3 + $0x64] sm:$0x1]
    %v767 = vld [vmem:[#allocation3 + $0x68] sm:$0xe]
    %v768 = vld [vmem:[#allocation3 + $0x6c] sm:$0x1]
    %v769 = vld [vmem:[#allocation3 + $0x70] sm:$0xe]
    %v770 = vld [vmem:[#allocation3 + $0x74] sm:$0x1]
    %v771 = vld [vmem:[#allocation3 + $0x78] sm:$0xe]
    %v772 = vld [vmem:[#allocation3 + $0x7c] sm:$0x1]
    %v773 = vld [vmem:[#allocation3 + $0x80] sm:$0xe]
    %v774 = vld [vmem:[#allocation3 + $0x84] sm:$0x1]
    %v775 = vld [vmem:[#allocation3 + $0x88] sm:$0xe]
    %v776 = vld [vmem:[#allocation3 + $0x8c] sm:$0x1]
    %vm809 = vcmask 1042432
    %vm810 = vcmask 1046532
    %vm811 = vmor %vm809, %vm810
    %v812 = vrot.slane %v745, 5
    %v813 = vrot.slane %v812, 4
    %v814 = vrot.slane %v746, 5
    %v815 = vsel %vm811, %v813, %v814
    %v816 = vrot.slane %v747, 5
    %v817 = vrot.slane %v816, 4
    %v818 = vrot.slane %v748, 5
    %v819 = vsel %vm811, %v817, %v818
    %v820 = vrot.slane %v749, 5
    %v821 = vrot.slane %v820, 4
    %v822 = vrot.slane %v750, 5
    %v823 = vsel %vm811, %v821, %v822
    %v824 = vrot.slane %v751, 5
    %v825 = vrot.slane %v824, 4
    %v826 = vrot.slane %v752, 5
    %v827 = vsel %vm811, %v825, %v826
    %v828 = vrot.slane %v753, 5
    %v829 = vrot.slane %v828, 4
    %v830 = vrot.slane %v754, 5
    %v831 = vsel %vm811, %v829, %v830
    %v832 = vrot.slane %v755, 5
    %v833 = vrot.slane %v832, 4
    %v834 = vrot.slane %v756, 5
    %v835 = vsel %vm811, %v833, %v834
    %v836 = vrot.slane %v757, 5
    %v837 = vrot.slane %v836, 4
    %v838 = vrot.slane %v758, 5
    %v839 = vsel %vm811, %v837, %v838
    %v840 = vrot.slane %v759, 5
    %v841 = vrot.slane %v840, 4
    %v842 = vrot.slane %v760, 5
    %v843 = vsel %vm811, %v841, %v842
    %v844 = vrot.slane %v761, 5
    %v845 = vrot.slane %v844, 4
    %v846 = vrot.slane %v762, 5
    %v847 = vsel %vm811, %v845, %v846
    %v848 = vrot.slane %v763, 5
    %v849 = vrot.slane %v848, 4
    %v850 = vrot.slane %v764, 5
    %v851 = vsel %vm811, %v849, %v850
    %v852 = vrot.slane %v765, 5
    %v853 = vrot.slane %v852, 4
    %v854 = vrot.slane %v766, 5
    %v855 = vsel %vm811, %v853, %v854
    %v856 = vrot.slane %v767, 5
    %v857 = vrot.slane %v856, 4
    %v858 = vrot.slane %v768, 5
    %v859 = vsel %vm811, %v857, %v858
    %v860 = vrot.slane %v769, 5
    %v861 = vrot.slane %v860, 4
    %v862 = vrot.slane %v770, 5
    %v863 = vsel %vm811, %v861, %v862
    %v864 = vrot.slane %v771, 5
    %v865 = vrot.slane %v864, 4
    %v866 = vrot.slane %v772, 5
    %v867 = vsel %vm811, %v865, %v866
    %v868 = vrot.slane %v773, 5
    %v869 = vrot.slane %v868, 4
    %v870 = vrot.slane %v774, 5
    %v871 = vsel %vm811, %v869, %v870
    %v872 = vrot.slane %v775, 5
    %v873 = vrot.slane %v872, 4
    %v874 = vrot.slane %v776, 5
    %v875 = vsel %vm811, %v873, %v874
    %v876 = vunpack.c.l.b16 %v815
    %v877 = vunpack.c.l.b16 %v819
    %v878 = vunpack.c.l.b16 %v823
    %v879 = vunpack.c.l.b16 %v827
    %v880 = vunpack.c.l.b16 %v831
    %v881 = vunpack.c.l.b16 %v835
    %v882 = vunpack.c.l.b16 %v839
    %v883 = vunpack.c.l.b16 %v843
    %v884 = vunpack.c.l.b16 %v847
    %v885 = vunpack.c.l.b16 %v851
    %v886 = vunpack.c.l.b16 %v855
    %v887 = vunpack.c.l.b16 %v859
    %v888 = vunpack.c.l.b16 %v863
    %v889 = vunpack.c.l.b16 %v867
    %v890 = vunpack.c.l.b16 %v871
    %v891 = vunpack.c.l.b16 %v875
    %v892 = vpack.c.b16 %v877, %v876
    %v893 = vpack.c.b16 %v879, %v878
    %v894 = vpack.c.b16 %v881, %v880
    %v895 = vpack.c.b16 %v883, %v882
    %v896 = vpack.c.b16 %v885, %v884
    %v897 = vpack.c.b16 %v887, %v886
    %v898 = vpack.c.b16 %v889, %v888
    %v899 = vpack.c.b16 %v891, %v890
    %908 = vst [vmem:[#allocation2 + $0x10] sm:$0xff] %v892
    %909 = vst [vmem:[#allocation2 + $0x58] sm:$0xff] %v893
    %910 = vst [vmem:[#allocation2 + $0xa0] sm:$0xff] %v894
    %911 = vst [vmem:[#allocation2 + $0xe8] sm:$0xff] %v895
    %912 = vst [vmem:[#allocation2 + $0x130] sm:$0xff] %v896
    %913 = vst [vmem:[#allocation2 + $0x178] sm:$0xff] %v897
    %914 = vst [vmem:[#allocation2 + $0x1c0] sm:$0xff] %v898
    %915 = vst [vmem:[#allocation2 + $0x208] sm:$0xff] %v899
    %v916 = vld [vmem:[%s271] sm:$0xf]
    %v917 = vld [vmem:[%s271 + $0x8] sm:$0xf]
    %v918 = vld [vmem:[%s271 + $0x10] sm:$0xf]
    %v919 = vld [vmem:[%s271 + $0x18] sm:$0xf]
    %v920 = vld [vmem:[%s271 + $0x20] sm:$0xf]
    %v921 = vld [vmem:[%s271 + $0x28] sm:$0xf]
    %v922 = vld [vmem:[%s271 + $0x30] sm:$0xf]
    %v923 = vld [vmem:[%s271 + $0x38] sm:$0xf]
    %v924 = vld [vmem:[%s271 + $0x50] sm:$0xf]
    %v925 = vld [vmem:[%s271 + $0x58] sm:$0xf]
    %v926 = vld [vmem:[%s271 + $0x60] sm:$0xf]
    %v927 = vld [vmem:[%s271 + $0x68] sm:$0xf]
    %v928 = vld [vmem:[%s271 + $0x70] sm:$0xf]
    %v929 = vld [vmem:[%s271 + $0x78] sm:$0xf]
    %v930 = vld [vmem:[%s271 + $0x80] sm:$0xf]
    %v931 = vld [vmem:[%s271 + $0x88] sm:$0xf]
    %v948 = vunpack.c.l.b16 %v916
    %v949 = vunpack.c.l.b16 %v917
    %v950 = vunpack.c.l.b16 %v918
    %v951 = vunpack.c.l.b16 %v919
    %v952 = vunpack.c.l.b16 %v920
    %v953 = vunpack.c.l.b16 %v921
    %v954 = vunpack.c.l.b16 %v922
    %v955 = vunpack.c.l.b16 %v923
    %v956 = vunpack.c.l.b16 %v924
    %v957 = vunpack.c.l.b16 %v925
    %v958 = vunpack.c.l.b16 %v926
    %v959 = vunpack.c.l.b16 %v927
    %v960 = vunpack.c.l.b16 %v928
    %v961 = vunpack.c.l.b16 %v929
    %v962 = vunpack.c.l.b16 %v930
    %v963 = vunpack.c.l.b16 %v931
    %v964 = vpack.c.b16 %v949, %v948
    %v965 = vpack.c.b16 %v951, %v950
    %v966 = vpack.c.b16 %v953, %v952
    %v967 = vpack.c.b16 %v955, %v954
    %v968 = vpack.c.b16 %v957, %v956
    %v969 = vpack.c.b16 %v959, %v958
    %v970 = vpack.c.b16 %v961, %v960
    %v971 = vpack.c.b16 %v963, %v962
    %980 = vst [vmem:[#allocation2 + $0x18] sm:$0xff] %v964
    %981 = vst [vmem:[#allocation2 + $0x60] sm:$0xff] %v965
    %982 = vst [vmem:[#allocation2 + $0xa8] sm:$0xff] %v966
    %983 = vst [vmem:[#allocation2 + $0xf0] sm:$0xff] %v967
    %984 = vst [vmem:[#allocation2 + $0x138] sm:$0xff] %v968
    %985 = vst [vmem:[#allocation2 + $0x180] sm:$0xff] %v969
    %986 = vst [vmem:[#allocation2 + $0x1c8] sm:$0xff] %v970
    %987 = vst [vmem:[#allocation2 + $0x210] sm:$0xff] %v971
    %v988 = vld [vmem:[%s271] sm:$0xf]
    %v989 = vld [vmem:[%s271 + $0x4] sm:$0x1]
    %v990 = vld [vmem:[%s271 + $0x8] sm:$0xf]
    %v991 = vld [vmem:[%s271 + $0xc] sm:$0x1]
    %v992 = vld [vmem:[%s271 + $0x10] sm:$0xf]
    %v993 = vld [vmem:[%s271 + $0x14] sm:$0x1]
    %v994 = vld [vmem:[%s271 + $0x18] sm:$0xf]
    %v995 = vld [vmem:[%s271 + $0x1c] sm:$0x1]
    %v996 = vld [vmem:[%s271 + $0x20] sm:$0xf]
    %v997 = vld [vmem:[%s271 + $0x24] sm:$0x1]
    %v998 = vld [vmem:[%s271 + $0x28] sm:$0xf]
    %v999 = vld [vmem:[%s271 + $0x2c] sm:$0x1]
    %v1000 = vld [vmem:[%s271 + $0x30] sm:$0xf]
    %v1001 = vld [vmem:[%s271 + $0x34] sm:$0x1]
    %v1002 = vld [vmem:[%s271 + $0x38] sm:$0xf]
    %v1003 = vld [vmem:[%s271 + $0x3c] sm:$0x1]
    %v1004 = vld [vmem:[%s271 + $0x50] sm:$0xf]
    %v1005 = vld [vmem:[%s271 + $0x54] sm:$0x1]
    %v1006 = vld [vmem:[%s271 + $0x58] sm:$0xf]
    %v1007 = vld [vmem:[%s271 + $0x5c] sm:$0x1]
    %v1008 = vld [vmem:[%s271 + $0x60] sm:$0xf]
    %v1009 = vld [vmem:[%s271 + $0x64] sm:$0x1]
    %v1010 = vld [vmem:[%s271 + $0x68] sm:$0xf]
    %v1011 = vld [vmem:[%s271 + $0x6c] sm:$0x1]
    %v1012 = vld [vmem:[%s271 + $0x70] sm:$0xf]
    %v1013 = vld [vmem:[%s271 + $0x74] sm:$0x1]
    %v1014 = vld [vmem:[%s271 + $0x78] sm:$0xf]
    %v1015 = vld [vmem:[%s271 + $0x7c] sm:$0x1]
    %v1016 = vld [vmem:[%s271 + $0x80] sm:$0xf]
    %v1017 = vld [vmem:[%s271 + $0x84] sm:$0x1]
    %v1018 = vld [vmem:[%s271 + $0x88] sm:$0xf]
    %v1019 = vld [vmem:[%s271 + $0x8c] sm:$0x1]
    %v1021 = vshrl.u32 %v988, 16
    %v1023 = vrot.slane %v1021, 4
    %v1024 = vshll.u32 %v988, 16
    %v1026 = vrot.slane %v1024, 5
    %v1027 = vor.u32 %v1023, %v1026
    %v1028 = vrot.slane %v1027, 4
    %v1030 = vshll.u32 %v989, 16
    %v1032 = vrot.slane %v1030, 5
    %v1033 = vsel %vm480, %v1028, %v1032
    %v1035 = vshrl.u32 %v990, 16
    %v1037 = vrot.slane %v1035, 4
    %v1038 = vshll.u32 %v990, 16
    %v1040 = vrot.slane %v1038, 5
    %v1041 = vor.u32 %v1037, %v1040
    %v1042 = vrot.slane %v1041, 4
    %v1044 = vshll.u32 %v991, 16
    %v1046 = vrot.slane %v1044, 5
    %v1047 = vsel %vm480, %v1042, %v1046
    %v1049 = vshrl.u32 %v992, 16
    %v1051 = vrot.slane %v1049, 4
    %v1052 = vshll.u32 %v992, 16
    %v1054 = vrot.slane %v1052, 5
    %v1055 = vor.u32 %v1051, %v1054
    %v1056 = vrot.slane %v1055, 4
    %v1058 = vshll.u32 %v993, 16
    %v1060 = vrot.slane %v1058, 5
    %v1061 = vsel %vm480, %v1056, %v1060
    %v1063 = vshrl.u32 %v994, 16
    %v1065 = vrot.slane %v1063, 4
    %v1066 = vshll.u32 %v994, 16
    %v1068 = vrot.slane %v1066, 5
    %v1069 = vor.u32 %v1065, %v1068
    %v1070 = vrot.slane %v1069, 4
    %v1072 = vshll.u32 %v995, 16
    %v1074 = vrot.slane %v1072, 5
    %v1075 = vsel %vm480, %v1070, %v1074
    %v1077 = vshrl.u32 %v996, 16
    %v1079 = vrot.slane %v1077, 4
    %v1080 = vshll.u32 %v996, 16
    %v1082 = vrot.slane %v1080, 5
    %v1083 = vor.u32 %v1079, %v1082
    %v1084 = vrot.slane %v1083, 4
    %v1086 = vshll.u32 %v997, 16
    %v1088 = vrot.slane %v1086, 5
    %v1089 = vsel %vm480, %v1084, %v1088
    %v1091 = vshrl.u32 %v998, 16
    %v1093 = vrot.slane %v1091, 4
    %v1094 = vshll.u32 %v998, 16
    %v1096 = vrot.slane %v1094, 5
    %v1097 = vor.u32 %v1093, %v1096
    %v1098 = vrot.slane %v1097, 4
    %v1100 = vshll.u32 %v999, 16
    %v1102 = vrot.slane %v1100, 5
    %v1103 = vsel %vm480, %v1098, %v1102
    %v1105 = vshrl.u32 %v1000, 16
    %v1107 = vrot.slane %v1105, 4
    %v1108 = vshll.u32 %v1000, 16
    %v1110 = vrot.slane %v1108, 5
    %v1111 = vor.u32 %v1107, %v1110
    %v1112 = vrot.slane %v1111, 4
    %v1114 = vshll.u32 %v1001, 16
    %v1116 = vrot.slane %v1114, 5
    %v1117 = vsel %vm480, %v1112, %v1116
    %v1119 = vshrl.u32 %v1002, 16
    %v1121 = vrot.slane %v1119, 4
    %v1122 = vshll.u32 %v1002, 16
    %v1124 = vrot.slane %v1122, 5
    %v1125 = vor.u32 %v1121, %v1124
    %v1126 = vrot.slane %v1125, 4
    %v1128 = vshll.u32 %v1003, 16
    %v1130 = vrot.slane %v1128, 5
    %v1131 = vsel %vm480, %v1126, %v1130
    %v1133 = vshrl.u32 %v1004, 16
    %v1135 = vrot.slane %v1133, 4
    %v1136 = vshll.u32 %v1004, 16
    %v1138 = vrot.slane %v1136, 5
    %v1139 = vor.u32 %v1135, %v1138
    %v1140 = vrot.slane %v1139, 4
    %v1142 = vshll.u32 %v1005, 16
    %v1144 = vrot.slane %v1142, 5
    %v1145 = vsel %vm480, %v1140, %v1144
    %v1147 = vshrl.u32 %v1006, 16
    %v1149 = vrot.slane %v1147, 4
    %v1150 = vshll.u32 %v1006, 16
    %v1152 = vrot.slane %v1150, 5
    %v1153 = vor.u32 %v1149, %v1152
    %v1154 = vrot.slane %v1153, 4
    %v1156 = vshll.u32 %v1007, 16
    %v1158 = vrot.slane %v1156, 5
    %v1159 = vsel %vm480, %v1154, %v1158
    %v1161 = vshrl.u32 %v1008, 16
    %v1163 = vrot.slane %v1161, 4
    %v1164 = vshll.u32 %v1008, 16
    %v1166 = vrot.slane %v1164, 5
    %v1167 = vor.u32 %v1163, %v1166
    %v1168 = vrot.slane %v1167, 4
    %v1170 = vshll.u32 %v1009, 16
    %v1172 = vrot.slane %v1170, 5
    %v1173 = vsel %vm480, %v1168, %v1172
    %v1175 = vshrl.u32 %v1010, 16
    %v1177 = vrot.slane %v1175, 4
    %v1178 = vshll.u32 %v1010, 16
    %v1180 = vrot.slane %v1178, 5
    %v1181 = vor.u32 %v1177, %v1180
    %v1182 = vrot.slane %v1181, 4
    %v1184 = vshll.u32 %v1011, 16
    %v1186 = vrot.slane %v1184, 5
    %v1187 = vsel %vm480, %v1182, %v1186
    %v1189 = vshrl.u32 %v1012, 16
    %v1191 = vrot.slane %v1189, 4
    %v1192 = vshll.u32 %v1012, 16
    %v1194 = vrot.slane %v1192, 5
    %v1195 = vor.u32 %v1191, %v1194
    %v1196 = vrot.slane %v1195, 4
    %v1198 = vshll.u32 %v1013, 16
    %v1200 = vrot.slane %v1198, 5
    %v1201 = vsel %vm480, %v1196, %v1200
    %v1203 = vshrl.u32 %v1014, 16
    %v1205 = vrot.slane %v1203, 4
    %v1206 = vshll.u32 %v1014, 16
    %v1208 = vrot.slane %v1206, 5
    %v1209 = vor.u32 %v1205, %v1208
    %v1210 = vrot.slane %v1209, 4
    %v1212 = vshll.u32 %v1015, 16
    %v1214 = vrot.slane %v1212, 5
    %v1215 = vsel %vm480, %v1210, %v1214
    %v1217 = vshrl.u32 %v1016, 16
    %v1219 = vrot.slane %v1217, 4
    %v1220 = vshll.u32 %v1016, 16
    %v1222 = vrot.slane %v1220, 5
    %v1223 = vor.u32 %v1219, %v1222
    %v1224 = vrot.slane %v1223, 4
    %v1226 = vshll.u32 %v1017, 16
    %v1228 = vrot.slane %v1226, 5
    %v1229 = vsel %vm480, %v1224, %v1228
    %v1231 = vshrl.u32 %v1018, 16
    %v1233 = vrot.slane %v1231, 4
    %v1234 = vshll.u32 %v1018, 16
    %v1236 = vrot.slane %v1234, 5
    %v1237 = vor.u32 %v1233, %v1236
    %v1238 = vrot.slane %v1237, 4
    %v1240 = vshll.u32 %v1019, 16
    %v1242 = vrot.slane %v1240, 5
    %v1243 = vsel %vm480, %v1238, %v1242
    %v1244 = vunpack.c.l.b16 %v1033
    %v1245 = vunpack.c.l.b16 %v1047
    %v1246 = vunpack.c.l.b16 %v1061
    %v1247 = vunpack.c.l.b16 %v1075
    %v1248 = vunpack.c.l.b16 %v1089
    %v1249 = vunpack.c.l.b16 %v1103
    %v1250 = vunpack.c.l.b16 %v1117
    %v1251 = vunpack.c.l.b16 %v1131
    %v1252 = vunpack.c.l.b16 %v1145
    %v1253 = vunpack.c.l.b16 %v1159
    %v1254 = vunpack.c.l.b16 %v1173
    %v1255 = vunpack.c.l.b16 %v1187
    %v1256 = vunpack.c.l.b16 %v1201
    %v1257 = vunpack.c.l.b16 %v1215
    %v1258 = vunpack.c.l.b16 %v1229
    %v1259 = vunpack.c.l.b16 %v1243
    %v1260 = vpack.c.b16 %v1245, %v1244
    %v1261 = vpack.c.b16 %v1247, %v1246
    %v1262 = vpack.c.b16 %v1249, %v1248
    %v1263 = vpack.c.b16 %v1251, %v1250
    %v1264 = vpack.c.b16 %v1253, %v1252
    %v1265 = vpack.c.b16 %v1255, %v1254
    %v1266 = vpack.c.b16 %v1257, %v1256
    %v1267 = vpack.c.b16 %v1259, %v1258
    %1276 = vst [vmem:[#allocation2 + $0x20] sm:$0xff] %v1260
    %1277 = vst [vmem:[#allocation2 + $0x68] sm:$0xff] %v1261
    %1278 = vst [vmem:[#allocation2 + $0xb0] sm:$0xff] %v1262
    %1279 = vst [vmem:[#allocation2 + $0xf8] sm:$0xff] %v1263
    %1280 = vst [vmem:[#allocation2 + $0x140] sm:$0xff] %v1264
    %1281 = vst [vmem:[#allocation2 + $0x188] sm:$0xff] %v1265
    %1282 = vst [vmem:[#allocation2 + $0x1d0] sm:$0xff] %v1266
    %1283 = vst [vmem:[#allocation2 + $0x218] sm:$0xff] %v1267
    %v1284 = vld [vmem:[%s271] sm:$0xe]
    %v1285 = vld [vmem:[%s271 + $0x4] sm:$0x1]
    %v1286 = vld [vmem:[%s271 + $0x8] sm:$0xe]
    %v1287 = vld [vmem:[%s271 + $0xc] sm:$0x1]
    %v1288 = vld [vmem:[%s271 + $0x10] sm:$0xe]
    %v1289 = vld [vmem:[%s271 + $0x14] sm:$0x1]
    %v1290 = vld [vmem:[%s271 + $0x18] sm:$0xe]
    %v1291 = vld [vmem:[%s271 + $0x1c] sm:$0x1]
    %v1292 = vld [vmem:[%s271 + $0x20] sm:$0xe]
    %v1293 = vld [vmem:[%s271 + $0x24] sm:$0x1]
    %v1294 = vld [vmem:[%s271 + $0x28] sm:$0xe]
    %v1295 = vld [vmem:[%s271 + $0x2c] sm:$0x1]
    %v1296 = vld [vmem:[%s271 + $0x30] sm:$0xe]
    %v1297 = vld [vmem:[%s271 + $0x34] sm:$0x1]
    %v1298 = vld [vmem:[%s271 + $0x38] sm:$0xe]
    %v1299 = vld [vmem:[%s271 + $0x3c] sm:$0x1]
    %v1300 = vld [vmem:[%s271 + $0x50] sm:$0xe]
    %v1301 = vld [vmem:[%s271 + $0x54] sm:$0x1]
    %v1302 = vld [vmem:[%s271 + $0x58] sm:$0xe]
    %v1303 = vld [vmem:[%s271 + $0x5c] sm:$0x1]
    %v1304 = vld [vmem:[%s271 + $0x60] sm:$0xe]
    %v1305 = vld [vmem:[%s271 + $0x64] sm:$0x1]
    %v1306 = vld [vmem:[%s271 + $0x68] sm:$0xe]
    %v1307 = vld [vmem:[%s271 + $0x6c] sm:$0x1]
    %v1308 = vld [vmem:[%s271 + $0x70] sm:$0xe]
    %v1309 = vld [vmem:[%s271 + $0x74] sm:$0x1]
    %v1310 = vld [vmem:[%s271 + $0x78] sm:$0xe]
    %v1311 = vld [vmem:[%s271 + $0x7c] sm:$0x1]
    %v1312 = vld [vmem:[%s271 + $0x80] sm:$0xe]
    %v1313 = vld [vmem:[%s271 + $0x84] sm:$0x1]
    %v1314 = vld [vmem:[%s271 + $0x88] sm:$0xe]
    %v1315 = vld [vmem:[%s271 + $0x8c] sm:$0x1]
    %v1348 = vrot.slane %v1284, 5
    %v1349 = vrot.slane %v1348, 4
    %v1350 = vrot.slane %v1285, 5
    %v1351 = vsel %vm811, %v1349, %v1350
    %v1352 = vrot.slane %v1286, 5
    %v1353 = vrot.slane %v1352, 4
    %v1354 = vrot.slane %v1287, 5
    %v1355 = vsel %vm811, %v1353, %v1354
    %v1356 = vrot.slane %v1288, 5
    %v1357 = vrot.slane %v1356, 4
    %v1358 = vrot.slane %v1289, 5
    %v1359 = vsel %vm811, %v1357, %v1358
    %v1360 = vrot.slane %v1290, 5
    %v1361 = vrot.slane %v1360, 4
    %v1362 = vrot.slane %v1291, 5
    %v1363 = vsel %vm811, %v1361, %v1362
    %v1364 = vrot.slane %v1292, 5
    %v1365 = vrot.slane %v1364, 4
    %v1366 = vrot.slane %v1293, 5
    %v1367 = vsel %vm811, %v1365, %v1366
    %v1368 = vrot.slane %v1294, 5
    %v1369 = vrot.slane %v1368, 4
    %v1370 = vrot.slane %v1295, 5
    %v1371 = vsel %vm811, %v1369, %v1370
    %v1372 = vrot.slane %v1296, 5
    %v1373 = vrot.slane %v1372, 4
    %v1374 = vrot.slane %v1297, 5
    %v1375 = vsel %vm811, %v1373, %v1374
    %v1376 = vrot.slane %v1298, 5
    %v1377 = vrot.slane %v1376, 4
    %v1378 = vrot.slane %v1299, 5
    %v1379 = vsel %vm811, %v1377, %v1378
    %v1380 = vrot.slane %v1300, 5
    %v1381 = vrot.slane %v1380, 4
    %v1382 = vrot.slane %v1301, 5
    %v1383 = vsel %vm811, %v1381, %v1382
    %v1384 = vrot.slane %v1302, 5
    %v1385 = vrot.slane %v1384, 4
    %v1386 = vrot.slane %v1303, 5
    %v1387 = vsel %vm811, %v1385, %v1386
    %v1388 = vrot.slane %v1304, 5
    %v1389 = vrot.slane %v1388, 4
    %v1390 = vrot.slane %v1305, 5
    %v1391 = vsel %vm811, %v1389, %v1390
    %v1392 = vrot.slane %v1306, 5
    %v1393 = vrot.slane %v1392, 4
    %v1394 = vrot.slane %v1307, 5
    %v1395 = vsel %vm811, %v1393, %v1394
    %v1396 = vrot.slane %v1308, 5
    %v1397 = vrot.slane %v1396, 4
    %v1398 = vrot.slane %v1309, 5
    %v1399 = vsel %vm811, %v1397, %v1398
    %v1400 = vrot.slane %v1310, 5
    %v1401 = vrot.slane %v1400, 4
    %v1402 = vrot.slane %v1311, 5
    %v1403 = vsel %vm811, %v1401, %v1402
    %v1404 = vrot.slane %v1312, 5
    %v1405 = vrot.slane %v1404, 4
    %v1406 = vrot.slane %v1313, 5
    %v1407 = vsel %vm811, %v1405, %v1406
    %v1408 = vrot.slane %v1314, 5
    %v1409 = vrot.slane %v1408, 4
    %v1410 = vrot.slane %v1315, 5
    %v1411 = vsel %vm811, %v1409, %v1410
    %v1412 = vunpack.c.l.b16 %v1351
    %v1413 = vunpack.c.l.b16 %v1355
    %v1414 = vunpack.c.l.b16 %v1359
    %v1415 = vunpack.c.l.b16 %v1363
    %v1416 = vunpack.c.l.b16 %v1367
    %v1417 = vunpack.c.l.b16 %v1371
    %v1418 = vunpack.c.l.b16 %v1375
    %v1419 = vunpack.c.l.b16 %v1379
    %v1420 = vunpack.c.l.b16 %v1383
    %v1421 = vunpack.c.l.b16 %v1387
    %v1422 = vunpack.c.l.b16 %v1391
    %v1423 = vunpack.c.l.b16 %v1395
    %v1424 = vunpack.c.l.b16 %v1399
    %v1425 = vunpack.c.l.b16 %v1403
    %v1426 = vunpack.c.l.b16 %v1407
    %v1427 = vunpack.c.l.b16 %v1411
    %v1428 = vpack.c.b16 %v1413, %v1412
    %v1429 = vpack.c.b16 %v1415, %v1414
    %v1430 = vpack.c.b16 %v1417, %v1416
    %v1431 = vpack.c.b16 %v1419, %v1418
    %v1432 = vpack.c.b16 %v1421, %v1420
    %v1433 = vpack.c.b16 %v1423, %v1422
    %v1434 = vpack.c.b16 %v1425, %v1424
    %v1435 = vpack.c.b16 %v1427, %v1426
    %1444 = vst [vmem:[#allocation2 + $0x28] sm:$0xff] %v1428
    %1445 = vst [vmem:[#allocation2 + $0x70] sm:$0xff] %v1429
    %1446 = vst [vmem:[#allocation2 + $0xb8] sm:$0xff] %v1430
    %1447 = vst [vmem:[#allocation2 + $0x100] sm:$0xff] %v1431
    %1448 = vst [vmem:[#allocation2 + $0x148] sm:$0xff] %v1432
    %1449 = vst [vmem:[#allocation2 + $0x190] sm:$0xff] %v1433
    %1450 = vst [vmem:[#allocation2 + $0x1d8] sm:$0xff] %v1434
    %1451 = vst [vmem:[#allocation2 + $0x220] sm:$0xff] %v1435
    %s1452 = scalar_lea.vmem [#allocation3], 16
    %v1453 = vld [vmem:[%s1452] sm:$0xf]
    %v1454 = vld [vmem:[%s1452 + $0x8] sm:$0xf]
    %v1455 = vld [vmem:[%s1452 + $0x10] sm:$0xf]
    %v1456 = vld [vmem:[%s1452 + $0x18] sm:$0xf]
    %v1457 = vld [vmem:[%s1452 + $0x20] sm:$0xf]
    %v1458 = vld [vmem:[%s1452 + $0x28] sm:$0xf]
    %v1459 = vld [vmem:[%s1452 + $0x30] sm:$0xf]
    %v1460 = vld [vmem:[%s1452 + $0x38] sm:$0xf]
    %v1461 = vld [vmem:[%s1452 + $0x50] sm:$0xf]
    %v1462 = vld [vmem:[%s1452 + $0x58] sm:$0xf]
    %v1463 = vld [vmem:[%s1452 + $0x60] sm:$0xf]
    %v1464 = vld [vmem:[%s1452 + $0x68] sm:$0xf]
    %v1465 = vld [vmem:[%s1452 + $0x70] sm:$0xf]
    %v1466 = vld [vmem:[%s1452 + $0x78] sm:$0xf]
    %v1467 = vld [vmem:[%s1452 + $0x80] sm:$0xf]
    %v1468 = vld [vmem:[%s1452 + $0x88] sm:$0xf]
    %v1485 = vunpack.c.l.b16 %v1453
    %v1486 = vunpack.c.l.b16 %v1454
    %v1487 = vunpack.c.l.b16 %v1455
    %v1488 = vunpack.c.l.b16 %v1456
    %v1489 = vunpack.c.l.b16 %v1457
    %v1490 = vunpack.c.l.b16 %v1458
    %v1491 = vunpack.c.l.b16 %v1459
    %v1492 = vunpack.c.l.b16 %v1460
    %v1493 = vunpack.c.l.b16 %v1461
    %v1494 = vunpack.c.l.b16 %v1462
    %v1495 = vunpack.c.l.b16 %v1463
    %v1496 = vunpack.c.l.b16 %v1464
    %v1497 = vunpack.c.l.b16 %v1465
    %v1498 = vunpack.c.l.b16 %v1466
    %v1499 = vunpack.c.l.b16 %v1467
    %v1500 = vunpack.c.l.b16 %v1468
    %v1501 = vpack.c.b16 %v1486, %v1485
    %v1502 = vpack.c.b16 %v1488, %v1487
    %v1503 = vpack.c.b16 %v1490, %v1489
    %v1504 = vpack.c.b16 %v1492, %v1491
    %v1505 = vpack.c.b16 %v1494, %v1493
    %v1506 = vpack.c.b16 %v1496, %v1495
    %v1507 = vpack.c.b16 %v1498, %v1497
    %v1508 = vpack.c.b16 %v1500, %v1499
    %1517 = vst [vmem:[#allocation2 + $0x30] sm:$0xff] %v1501
    %1518 = vst [vmem:[#allocation2 + $0x78] sm:$0xff] %v1502
    %1519 = vst [vmem:[#allocation2 + $0xc0] sm:$0xff] %v1503
    %1520 = vst [vmem:[#allocation2 + $0x108] sm:$0xff] %v1504
    %1521 = vst [vmem:[#allocation2 + $0x150] sm:$0xff] %v1505
    %1522 = vst [vmem:[#allocation2 + $0x198] sm:$0xff] %v1506
    %1523 = vst [vmem:[#allocation2 + $0x1e0] sm:$0xff] %v1507
    %1524 = vst [vmem:[#allocation2 + $0x228] sm:$0xff] %v1508
    %v1525 = vld [vmem:[%s1452] sm:$0xf]
    %v1526 = vld [vmem:[%s1452 + $0x4] sm:$0x1]
    %v1527 = vld [vmem:[%s1452 + $0x8] sm:$0xf]
    %v1528 = vld [vmem:[%s1452 + $0xc] sm:$0x1]
    %v1529 = vld [vmem:[%s1452 + $0x10] sm:$0xf]
    %v1530 = vld [vmem:[%s1452 + $0x14] sm:$0x1]
    %v1531 = vld [vmem:[%s1452 + $0x18] sm:$0xf]
    %v1532 = vld [vmem:[%s1452 + $0x1c] sm:$0x1]
    %v1533 = vld [vmem:[%s1452 + $0x20] sm:$0xf]
    %v1534 = vld [vmem:[%s1452 + $0x24] sm:$0x1]
    %v1535 = vld [vmem:[%s1452 + $0x28] sm:$0xf]
    %v1536 = vld [vmem:[%s1452 + $0x2c] sm:$0x1]
    %v1537 = vld [vmem:[%s1452 + $0x30] sm:$0xf]
    %v1538 = vld [vmem:[%s1452 + $0x34] sm:$0x1]
    %v1539 = vld [vmem:[%s1452 + $0x38] sm:$0xf]
    %v1540 = vld [vmem:[%s1452 + $0x3c] sm:$0x1]
    %v1541 = vld [vmem:[%s1452 + $0x50] sm:$0xf]
    %v1542 = vld [vmem:[%s1452 + $0x54] sm:$0x1]
    %v1543 = vld [vmem:[%s1452 + $0x58] sm:$0xf]
    %v1544 = vld [vmem:[%s1452 + $0x5c] sm:$0x1]
    %v1545 = vld [vmem:[%s1452 + $0x60] sm:$0xf]
    %v1546 = vld [vmem:[%s1452 + $0x64] sm:$0x1]
    %v1547 = vld [vmem:[%s1452 + $0x68] sm:$0xf]
    %v1548 = vld [vmem:[%s1452 + $0x6c] sm:$0x1]
    %v1549 = vld [vmem:[%s1452 + $0x70] sm:$0xf]
    %v1550 = vld [vmem:[%s1452 + $0x74] sm:$0x1]
    %v1551 = vld [vmem:[%s1452 + $0x78] sm:$0xf]
    %v1552 = vld [vmem:[%s1452 + $0x7c] sm:$0x1]
    %v1553 = vld [vmem:[%s1452 + $0x80] sm:$0xf]
    %v1554 = vld [vmem:[%s1452 + $0x84] sm:$0x1]
    %v1555 = vld [vmem:[%s1452 + $0x88] sm:$0xf]
    %v1556 = vld [vmem:[%s1452 + $0x8c] sm:$0x1]
    %v1558 = vshrl.u32 %v1525, 16
    %v1560 = vrot.slane %v1558, 4
    %v1561 = vshll.u32 %v1525, 16
    %v1563 = vrot.slane %v1561, 5
    %v1564 = vor.u32 %v1560, %v1563
    %v1565 = vrot.slane %v1564, 4
    %v1567 = vshll.u32 %v1526, 16
    %v1569 = vrot.slane %v1567, 5
    %v1570 = vsel %vm480, %v1565, %v1569
    %v1572 = vshrl.u32 %v1527, 16
    %v1574 = vrot.slane %v1572, 4
    %v1575 = vshll.u32 %v1527, 16
    %v1577 = vrot.slane %v1575, 5
    %v1578 = vor.u32 %v1574, %v1577
    %v1579 = vrot.slane %v1578, 4
    %v1581 = vshll.u32 %v1528, 16
    %v1583 = vrot.slane %v1581, 5
    %v1584 = vsel %vm480, %v1579, %v1583
    %v1586 = vshrl.u32 %v1529, 16
    %v1588 = vrot.slane %v1586, 4
    %v1589 = vshll.u32 %v1529, 16
    %v1591 = vrot.slane %v1589, 5
    %v1592 = vor.u32 %v1588, %v1591
    %v1593 = vrot.slane %v1592, 4
    %v1595 = vshll.u32 %v1530, 16
    %v1597 = vrot.slane %v1595, 5
    %v1598 = vsel %vm480, %v1593, %v1597
    %v1600 = vshrl.u32 %v1531, 16
    %v1602 = vrot.slane %v1600, 4
    %v1603 = vshll.u32 %v1531, 16
    %v1605 = vrot.slane %v1603, 5
    %v1606 = vor.u32 %v1602, %v1605
    %v1607 = vrot.slane %v1606, 4
    %v1609 = vshll.u32 %v1532, 16
    %v1611 = vrot.slane %v1609, 5
    %v1612 = vsel %vm480, %v1607, %v1611
    %v1614 = vshrl.u32 %v1533, 16
    %v1616 = vrot.slane %v1614, 4
    %v1617 = vshll.u32 %v1533, 16
    %v1619 = vrot.slane %v1617, 5
    %v1620 = vor.u32 %v1616, %v1619
    %v1621 = vrot.slane %v1620, 4
    %v1623 = vshll.u32 %v1534, 16
    %v1625 = vrot.slane %v1623, 5
    %v1626 = vsel %vm480, %v1621, %v1625
    %v1628 = vshrl.u32 %v1535, 16
    %v1630 = vrot.slane %v1628, 4
    %v1631 = vshll.u32 %v1535, 16
    %v1633 = vrot.slane %v1631, 5
    %v1634 = vor.u32 %v1630, %v1633
    %v1635 = vrot.slane %v1634, 4
    %v1637 = vshll.u32 %v1536, 16
    %v1639 = vrot.slane %v1637, 5
    %v1640 = vsel %vm480, %v1635, %v1639
    %v1642 = vshrl.u32 %v1537, 16
    %v1644 = vrot.slane %v1642, 4
    %v1645 = vshll.u32 %v1537, 16
    %v1647 = vrot.slane %v1645, 5
    %v1648 = vor.u32 %v1644, %v1647
    %v1649 = vrot.slane %v1648, 4
    %v1651 = vshll.u32 %v1538, 16
    %v1653 = vrot.slane %v1651, 5
    %v1654 = vsel %vm480, %v1649, %v1653
    %v1656 = vshrl.u32 %v1539, 16
    %v1658 = vrot.slane %v1656, 4
    %v1659 = vshll.u32 %v1539, 16
    %v1661 = vrot.slane %v1659, 5
    %v1662 = vor.u32 %v1658, %v1661
    %v1663 = vrot.slane %v1662, 4
    %v1665 = vshll.u32 %v1540, 16
    %v1667 = vrot.slane %v1665, 5
    %v1668 = vsel %vm480, %v1663, %v1667
    %v1670 = vshrl.u32 %v1541, 16
    %v1672 = vrot.slane %v1670, 4
    %v1673 = vshll.u32 %v1541, 16
    %v1675 = vrot.slane %v1673, 5
    %v1676 = vor.u32 %v1672, %v1675
    %v1677 = vrot.slane %v1676, 4
    %v1679 = vshll.u32 %v1542, 16
    %v1681 = vrot.slane %v1679, 5
    %v1682 = vsel %vm480, %v1677, %v1681
    %v1684 = vshrl.u32 %v1543, 16
    %v1686 = vrot.slane %v1684, 4
    %v1687 = vshll.u32 %v1543, 16
    %v1689 = vrot.slane %v1687, 5
    %v1690 = vor.u32 %v1686, %v1689
    %v1691 = vrot.slane %v1690, 4
    %v1693 = vshll.u32 %v1544, 16
    %v1695 = vrot.slane %v1693, 5
    %v1696 = vsel %vm480, %v1691, %v1695
    %v1698 = vshrl.u32 %v1545, 16
    %v1700 = vrot.slane %v1698, 4
    %v1701 = vshll.u32 %v1545, 16
    %v1703 = vrot.slane %v1701, 5
    %v1704 = vor.u32 %v1700, %v1703
    %v1705 = vrot.slane %v1704, 4
    %v1707 = vshll.u32 %v1546, 16
    %v1709 = vrot.slane %v1707, 5
    %v1710 = vsel %vm480, %v1705, %v1709
    %v1712 = vshrl.u32 %v1547, 16
    %v1714 = vrot.slane %v1712, 4
    %v1715 = vshll.u32 %v1547, 16
    %v1717 = vrot.slane %v1715, 5
    %v1718 = vor.u32 %v1714, %v1717
    %v1719 = vrot.slane %v1718, 4
    %v1721 = vshll.u32 %v1548, 16
    %v1723 = vrot.slane %v1721, 5
    %v1724 = vsel %vm480, %v1719, %v1723
    %v1726 = vshrl.u32 %v1549, 16
    %v1728 = vrot.slane %v1726, 4
    %v1729 = vshll.u32 %v1549, 16
    %v1731 = vrot.slane %v1729, 5
    %v1732 = vor.u32 %v1728, %v1731
    %v1733 = vrot.slane %v1732, 4
    %v1735 = vshll.u32 %v1550, 16
    %v1737 = vrot.slane %v1735, 5
    %v1738 = vsel %vm480, %v1733, %v1737
    %v1740 = vshrl.u32 %v1551, 16
    %v1742 = vrot.slane %v1740, 4
    %v1743 = vshll.u32 %v1551, 16
    %v1745 = vrot.slane %v1743, 5
    %v1746 = vor.u32 %v1742, %v1745
    %v1747 = vrot.slane %v1746, 4
    %v1749 = vshll.u32 %v1552, 16
    %v1751 = vrot.slane %v1749, 5
    %v1752 = vsel %vm480, %v1747, %v1751
    %v1754 = vshrl.u32 %v1553, 16
    %v1756 = vrot.slane %v1754, 4
    %v1757 = vshll.u32 %v1553, 16
    %v1759 = vrot.slane %v1757, 5
    %v1760 = vor.u32 %v1756, %v1759
    %v1761 = vrot.slane %v1760, 4
    %v1763 = vshll.u32 %v1554, 16
    %v1765 = vrot.slane %v1763, 5
    %v1766 = vsel %vm480, %v1761, %v1765
    %v1768 = vshrl.u32 %v1555, 16
    %v1770 = vrot.slane %v1768, 4
    %v1771 = vshll.u32 %v1555, 16
    %v1773 = vrot.slane %v1771, 5
    %v1774 = vor.u32 %v1770, %v1773
    %v1775 = vrot.slane %v1774, 4
    %v1777 = vshll.u32 %v1556, 16
    %v1779 = vrot.slane %v1777, 5
    %v1780 = vsel %vm480, %v1775, %v1779
    %v1781 = vunpack.c.l.b16 %v1570
    %v1782 = vunpack.c.l.b16 %v1584
    %v1783 = vunpack.c.l.b16 %v1598
    %v1784 = vunpack.c.l.b16 %v1612
    %v1785 = vunpack.c.l.b16 %v1626
    %v1786 = vunpack.c.l.b16 %v1640
    %v1787 = vunpack.c.l.b16 %v1654
    %v1788 = vunpack.c.l.b16 %v1668
    %v1789 = vunpack.c.l.b16 %v1682
    %v1790 = vunpack.c.l.b16 %v1696
    %v1791 = vunpack.c.l.b16 %v1710
    %v1792 = vunpack.c.l.b16 %v1724
    %v1793 = vunpack.c.l.b16 %v1738
    %v1794 = vunpack.c.l.b16 %v1752
    %v1795 = vunpack.c.l.b16 %v1766
    %v1796 = vunpack.c.l.b16 %v1780
    %v1797 = vpack.c.b16 %v1782, %v1781
    %v1798 = vpack.c.b16 %v1784, %v1783
    %v1799 = vpack.c.b16 %v1786, %v1785
    %v1800 = vpack.c.b16 %v1788, %v1787
    %v1801 = vpack.c.b16 %v1790, %v1789
    %v1802 = vpack.c.b16 %v1792, %v1791
    %v1803 = vpack.c.b16 %v1794, %v1793
    %v1804 = vpack.c.b16 %v1796, %v1795
    %1813 = vst [vmem:[#allocation2 + $0x38] sm:$0xff] %v1797
    %1814 = vst [vmem:[#allocation2 + $0x80] sm:$0xff] %v1798
    %1815 = vst [vmem:[#allocation2 + $0xc8] sm:$0xff] %v1799
    %1816 = vst [vmem:[#allocation2 + $0x110] sm:$0xff] %v1800
    %1817 = vst [vmem:[#allocation2 + $0x158] sm:$0xff] %v1801
    %1818 = vst [vmem:[#allocation2 + $0x1a0] sm:$0xff] %v1802
    %1819 = vst [vmem:[#allocation2 + $0x1e8] sm:$0xff] %v1803
    %1820 = vst [vmem:[#allocation2 + $0x230] sm:$0xff] %v1804
    %v1821 = vld [vmem:[%s1452] sm:$0xe]
    %v1822 = vld [vmem:[%s1452 + $0x4] sm:$0x1]
    %v1823 = vld [vmem:[%s1452 + $0x8] sm:$0xe]
    %v1824 = vld [vmem:[%s1452 + $0xc] sm:$0x1]
    %v1825 = vld [vmem:[%s1452 + $0x10] sm:$0xe]
    %v1826 = vld [vmem:[%s1452 + $0x14] sm:$0x1]
    %v1827 = vld [vmem:[%s1452 + $0x18] sm:$0xe]
    %v1828 = vld [vmem:[%s1452 + $0x1c] sm:$0x1]
    %v1829 = vld [vmem:[%s1452 + $0x20] sm:$0xe]
    %v1830 = vld [vmem:[%s1452 + $0x24] sm:$0x1]
    %v1831 = vld [vmem:[%s1452 + $0x28] sm:$0xe]
    %v1832 = vld [vmem:[%s1452 + $0x2c] sm:$0x1]
    %v1833 = vld [vmem:[%s1452 + $0x30] sm:$0xe]
    %v1834 = vld [vmem:[%s1452 + $0x34] sm:$0x1]
    %v1835 = vld [vmem:[%s1452 + $0x38] sm:$0xe]
    %v1836 = vld [vmem:[%s1452 + $0x3c] sm:$0x1]
    %v1837 = vld [vmem:[%s1452 + $0x50] sm:$0xe]
    %v1838 = vld [vmem:[%s1452 + $0x54] sm:$0x1]
    %v1839 = vld [vmem:[%s1452 + $0x58] sm:$0xe]
    %v1840 = vld [vmem:[%s1452 + $0x5c] sm:$0x1]
    %v1841 = vld [vmem:[%s1452 + $0x60] sm:$0xe]
    %v1842 = vld [vmem:[%s1452 + $0x64] sm:$0x1]
    %v1843 = vld [vmem:[%s1452 + $0x68] sm:$0xe]
    %v1844 = vld [vmem:[%s1452 + $0x6c] sm:$0x1]
    %v1845 = vld [vmem:[%s1452 + $0x70] sm:$0xe]
    %v1846 = vld [vmem:[%s1452 + $0x74] sm:$0x1]
    %v1847 = vld [vmem:[%s1452 + $0x78] sm:$0xe]
    %v1848 = vld [vmem:[%s1452 + $0x7c] sm:$0x1]
    %v1849 = vld [vmem:[%s1452 + $0x80] sm:$0xe]
    %v1850 = vld [vmem:[%s1452 + $0x84] sm:$0x1]
    %v1851 = vld [vmem:[%s1452 + $0x88] sm:$0xe]
    %v1852 = vld [vmem:[%s1452 + $0x8c] sm:$0x1]
    %v1885 = vrot.slane %v1821, 5
    %v1886 = vrot.slane %v1885, 4
    %v1887 = vrot.slane %v1822, 5
    %v1888 = vsel %vm811, %v1886, %v1887
    %v1889 = vrot.slane %v1823, 5
    %v1890 = vrot.slane %v1889, 4
    %v1891 = vrot.slane %v1824, 5
    %v1892 = vsel %vm811, %v1890, %v1891
    %v1893 = vrot.slane %v1825, 5
    %v1894 = vrot.slane %v1893, 4
    %v1895 = vrot.slane %v1826, 5
    %v1896 = vsel %vm811, %v1894, %v1895
    %v1897 = vrot.slane %v1827, 5
    %v1898 = vrot.slane %v1897, 4
    %v1899 = vrot.slane %v1828, 5
    %v1900 = vsel %vm811, %v1898, %v1899
    %v1901 = vrot.slane %v1829, 5
    %v1902 = vrot.slane %v1901, 4
    %v1903 = vrot.slane %v1830, 5
    %v1904 = vsel %vm811, %v1902, %v1903
    %v1905 = vrot.slane %v1831, 5
    %v1906 = vrot.slane %v1905, 4
    %v1907 = vrot.slane %v1832, 5
    %v1908 = vsel %vm811, %v1906, %v1907
    %v1909 = vrot.slane %v1833, 5
    %v1910 = vrot.slane %v1909, 4
    %v1911 = vrot.slane %v1834, 5
    %v1912 = vsel %vm811, %v1910, %v1911
    %v1913 = vrot.slane %v1835, 5
    %v1914 = vrot.slane %v1913, 4
    %v1915 = vrot.slane %v1836, 5
    %v1916 = vsel %vm811, %v1914, %v1915
    %v1917 = vrot.slane %v1837, 5
    %v1918 = vrot.slane %v1917, 4
    %v1919 = vrot.slane %v1838, 5
    %v1920 = vsel %vm811, %v1918, %v1919
    %v1921 = vrot.slane %v1839, 5
    %v1922 = vrot.slane %v1921, 4
    %v1923 = vrot.slane %v1840, 5
    %v1924 = vsel %vm811, %v1922, %v1923
    %v1925 = vrot.slane %v1841, 5
    %v1926 = vrot.slane %v1925, 4
    %v1927 = vrot.slane %v1842, 5
    %v1928 = vsel %vm811, %v1926, %v1927
    %v1929 = vrot.slane %v1843, 5
    %v1930 = vrot.slane %v1929, 4
    %v1931 = vrot.slane %v1844, 5
    %v1932 = vsel %vm811, %v1930, %v1931
    %v1933 = vrot.slane %v1845, 5
    %v1934 = vrot.slane %v1933, 4
    %v1935 = vrot.slane %v1846, 5
    %v1936 = vsel %vm811, %v1934, %v1935
    %v1937 = vrot.slane %v1847, 5
    %v1938 = vrot.slane %v1937, 4
    %v1939 = vrot.slane %v1848, 5
    %v1940 = vsel %vm811, %v1938, %v1939
    %v1941 = vrot.slane %v1849, 5
    %v1942 = vrot.slane %v1941, 4
    %v1943 = vrot.slane %v1850, 5
    %v1944 = vsel %vm811, %v1942, %v1943
    %v1945 = vrot.slane %v1851, 5
    %v1946 = vrot.slane %v1945, 4
    %v1947 = vrot.slane %v1852, 5
    %v1948 = vsel %vm811, %v1946, %v1947
    %v1949 = vunpack.c.l.b16 %v1888
    %v1950 = vunpack.c.l.b16 %v1892
    %v1951 = vunpack.c.l.b16 %v1896
    %v1952 = vunpack.c.l.b16 %v1900
    %v1953 = vunpack.c.l.b16 %v1904
    %v1954 = vunpack.c.l.b16 %v1908
    %v1955 = vunpack.c.l.b16 %v1912
    %v1956 = vunpack.c.l.b16 %v1916
    %v1957 = vunpack.c.l.b16 %v1920
    %v1958 = vunpack.c.l.b16 %v1924
    %v1959 = vunpack.c.l.b16 %v1928
    %v1960 = vunpack.c.l.b16 %v1932
    %v1961 = vunpack.c.l.b16 %v1936
    %v1962 = vunpack.c.l.b16 %v1940
    %v1963 = vunpack.c.l.b16 %v1944
    %v1964 = vunpack.c.l.b16 %v1948
    %v1965 = vpack.c.b16 %v1950, %v1949
    %v1966 = vpack.c.b16 %v1952, %v1951
    %v1967 = vpack.c.b16 %v1954, %v1953
    %v1968 = vpack.c.b16 %v1956, %v1955
    %v1969 = vpack.c.b16 %v1958, %v1957
    %v1970 = vpack.c.b16 %v1960, %v1959
    %v1971 = vpack.c.b16 %v1962, %v1961
    %v1972 = vpack.c.b16 %v1964, %v1963
    %1981 = vst [vmem:[#allocation2 + $0x40] sm:$0xff] %v1965
    %1982 = vst [vmem:[#allocation2 + $0x88] sm:$0xff] %v1966
    %1983 = vst [vmem:[#allocation2 + $0xd0] sm:$0xff] %v1967
    %1984 = vst [vmem:[#allocation2 + $0x118] sm:$0xff] %v1968
    %1985 = vst [vmem:[#allocation2 + $0x160] sm:$0xff] %v1969
    %1986 = vst [vmem:[#allocation2 + $0x1a8] sm:$0xff] %v1970
    %1987 = vst [vmem:[#allocation2 + $0x1f0] sm:$0xff] %v1971
    %1988 = vst [vmem:[#allocation2 + $0x238] sm:$0xff] %v1972
    %v1989 = vld [vmem:[#allocation2] sm:$0xff]
    %v1990 = vld [vmem:[#allocation2 + $0x8] sm:$0xff]
    %v1991 = vld [vmem:[#allocation2 + $0x10] sm:$0xff]
    %v1992 = vld [vmem:[#allocation2 + $0x18] sm:$0xff]
    %v1993 = vld [vmem:[#allocation2 + $0x20] sm:$0xff]
    %v1994 = vld [vmem:[#allocation2 + $0x28] sm:$0xff]
    %v1995 = vld [vmem:[#allocation2 + $0x30] sm:$0xff]
    %v1996 = vld [vmem:[#allocation2 + $0x38] sm:$0xff]
    %v1997 = vld [vmem:[#allocation2 + $0x40] sm:$0xff]
    %v1998 = vld [vmem:[#allocation2 + $0x48] sm:$0xff]
    %v1999 = vld [vmem:[#allocation2 + $0x50] sm:$0xff]
    %v2000 = vld [vmem:[#allocation2 + $0x58] sm:$0xff]
    %v2001 = vld [vmem:[#allocation2 + $0x60] sm:$0xff]
    %v2002 = vld [vmem:[#allocation2 + $0x68] sm:$0xff]
    %v2003 = vld [vmem:[#allocation2 + $0x70] sm:$0xff]
    %v2004 = vld [vmem:[#allocation2 + $0x78] sm:$0xff]
    %v2005 = vld [vmem:[#allocation2 + $0x80] sm:$0xff]
    %v2006 = vld [vmem:[#allocation2 + $0x88] sm:$0xff]
    %v2007 = vld [vmem:[#allocation2 + $0x90] sm:$0xff]
    %v2008 = vld [vmem:[#allocation2 + $0x98] sm:$0xff]
    %v2009 = vld [vmem:[#allocation2 + $0xa0] sm:$0xff]
    %v2010 = vld [vmem:[#allocation2 + $0xa8] sm:$0xff]
    %v2011 = vld [vmem:[#allocation2 + $0xb0] sm:$0xff]
    %v2012 = vld [vmem:[#allocation2 + $0xb8] sm:$0xff]
    %v2013 = vld [vmem:[#allocation2 + $0xc0] sm:$0xff]
    %v2014 = vld [vmem:[#allocation2 + $0xc8] sm:$0xff]
    %v2015 = vld [vmem:[#allocation2 + $0xd0] sm:$0xff]
    %v2016 = vld [vmem:[#allocation2 + $0xd8] sm:$0xff]
    %v2017 = vld [vmem:[#allocation2 + $0xe0] sm:$0xff]
    %v2018 = vld [vmem:[#allocation2 + $0xe8] sm:$0xff]
    %v2019 = vld [vmem:[#allocation2 + $0xf0] sm:$0xff]
    %v2020 = vld [vmem:[#allocation2 + $0xf8] sm:$0xff]
    %v2021 = vld [vmem:[#allocation2 + $0x100] sm:$0xff]
    %v2022 = vld [vmem:[#allocation2 + $0x108] sm:$0xff]
    %v2023 = vld [vmem:[#allocation2 + $0x110] sm:$0xff]
    %v2024 = vld [vmem:[#allocation2 + $0x118] sm:$0xff]
    %v2025 = vld [vmem:[#allocation2 + $0x120] sm:$0xff]
    %v2026 = vld [vmem:[#allocation2 + $0x128] sm:$0xff]
    %v2027 = vld [vmem:[#allocation2 + $0x130] sm:$0xff]
    %v2028 = vld [vmem:[#allocation2 + $0x138] sm:$0xff]
    %v2029 = vld [vmem:[#allocation2 + $0x140] sm:$0xff]
    %v2030 = vld [vmem:[#allocation2 + $0x148] sm:$0xff]
    %v2031 = vld [vmem:[#allocation2 + $0x150] sm:$0xff]
    %v2032 = vld [vmem:[#allocation2 + $0x158] sm:$0xff]
    %v2033 = vld [vmem:[#allocation2 + $0x160] sm:$0xff]
    %v2034 = vld [vmem:[#allocation2 + $0x168] sm:$0xff]
    %v2035 = vld [vmem:[#allocation2 + $0x170] sm:$0xff]
    %v2036 = vld [vmem:[#allocation2 + $0x178] sm:$0xff]
    %v2037 = vld [vmem:[#allocation2 + $0x180] sm:$0xff]
    %v2038 = vld [vmem:[#allocation2 + $0x188] sm:$0xff]
    %v2039 = vld [vmem:[#allocation2 + $0x190] sm:$0xff]
    %v2040 = vld [vmem:[#allocation2 + $0x198] sm:$0xff]
    %v2041 = vld [vmem:[#allocation2 + $0x1a0] sm:$0xff]
    %v2042 = vld [vmem:[#allocation2 + $0x1a8] sm:$0xff]
    %v2043 = vld [vmem:[#allocation2 + $0x1b0] sm:$0xff]
    %v2044 = vld [vmem:[#allocation2 + $0x1b8] sm:$0xff]
    %v2045 = vld [vmem:[#allocation2 + $0x1c0] sm:$0xff]
    %v2046 = vld [vmem:[#allocation2 + $0x1c8] sm:$0xff]
    %v2047 = vld [vmem:[#allocation2 + $0x1d0] sm:$0xff]
    %v2048 = vld [vmem:[#allocation2 + $0x1d8] sm:$0xff]
    %v2049 = vld [vmem:[#allocation2 + $0x1e0] sm:$0xff]
    %v2050 = vld [vmem:[#allocation2 + $0x1e8] sm:$0xff]
    %v2051 = vld [vmem:[#allocation2 + $0x1f0] sm:$0xff]
    %v2052 = vld [vmem:[#allocation2 + $0x1f8] sm:$0xff]
    %v2053 = vld [vmem:[#allocation2 + $0x200] sm:$0xff]
    %v2054 = vld [vmem:[#allocation2 + $0x208] sm:$0xff]
    %v2055 = vld [vmem:[#allocation2 + $0x210] sm:$0xff]
    %v2056 = vld [vmem:[#allocation2 + $0x218] sm:$0xff]
    %v2057 = vld [vmem:[#allocation2 + $0x220] sm:$0xff]
    %v2058 = vld [vmem:[#allocation2 + $0x228] sm:$0xff]
    %v2059 = vld [vmem:[#allocation2 + $0x230] sm:$0xff]
    %v2060 = vld [vmem:[#allocation2 + $0x238] sm:$0xff]
    %v2061 = vld [vmem:[#allocation4] sm:$0xf]
    %v2062 = vld [vmem:[#allocation4 + $0x4] sm:$0xf]
    %v2063 = vld [vmem:[#allocation4 + $0x8] sm:$0xf]
    %v2064 = vld [vmem:[#allocation4 + $0xc] sm:$0xf]
    %v2065 = vld [vmem:[#allocation4 + $0x10] sm:$0xf]
    %v2066 = vld [vmem:[#allocation4 + $0x14] sm:$0xf]
    %v2067 = vld [vmem:[#allocation4 + $0x18] sm:$0xf]
    %v2068 = vld [vmem:[#allocation4 + $0x1c] sm:$0xf]
    %v2069 = vld [vmem:[#allocation4 + $0x20] sm:$0xf]
    %v2070 = vld [vmem:[#allocation4 + $0x24] sm:$0xf]
    %v2071 = vld [vmem:[#allocation4 + $0x28] sm:$0xf]
    %v2072 = vld [vmem:[#allocation4 + $0x2c] sm:$0xf]
    %v2073 = vld [vmem:[#allocation4 + $0x30] sm:$0xf]
    %v2074 = vld [vmem:[#allocation4 + $0x34] sm:$0xf]
    %v2075 = vld [vmem:[#allocation4 + $0x38] sm:$0xf]
    %v2076 = vld [vmem:[#allocation4 + $0x3c] sm:$0xf]
    %v2077 = vld [vmem:[#allocation4 + $0x40] sm:$0xf]
    %v2078 = vld [vmem:[#allocation4 + $0x44] sm:$0xf]
    %v2079 = vld [vmem:[#allocation4 + $0x48] sm:$0xf]
    %v2080 = vld [vmem:[#allocation4 + $0x4c] sm:$0xf]
    %v2081 = vld [vmem:[#allocation4 + $0x50] sm:$0xf]
    %v2082 = vld [vmem:[#allocation4 + $0x54] sm:$0xf]
    %v2083 = vld [vmem:[#allocation4 + $0x58] sm:$0xf]
    %v2084 = vld [vmem:[#allocation4 + $0x5c] sm:$0xf]
    %v2085 = vld [vmem:[#allocation4 + $0x60] sm:$0xf]
    %v2086 = vld [vmem:[#allocation4 + $0x64] sm:$0xf]
    %v2087 = vld [vmem:[#allocation4 + $0x68] sm:$0xf]
    %v2088 = vld [vmem:[#allocation4 + $0x6c] sm:$0xf]
    %v2089 = vld [vmem:[#allocation4 + $0x70] sm:$0xf]
    %v2090 = vld [vmem:[#allocation4 + $0x74] sm:$0xf]
    %v2091 = vld [vmem:[#allocation4 + $0x78] sm:$0xf]
    %v2092 = vld [vmem:[#allocation4 + $0x7c] sm:$0xf]
    %v2093 = vld [vmem:[#allocation4 + $0x80] sm:$0xf]
    %v2094 = vld [vmem:[#allocation4 + $0x84] sm:$0xf]
    %v2095 = vld [vmem:[#allocation4 + $0x88] sm:$0xf]
    %v2096 = vld [vmem:[#allocation4 + $0x8c] sm:$0xf]
    %v2097 = vld [vmem:[#allocation4 + $0x90] sm:$0xf]
    %v2098 = vld [vmem:[#allocation4 + $0x94] sm:$0xf]
    %v2099 = vld [vmem:[#allocation4 + $0x98] sm:$0xf]
    %v2100 = vld [vmem:[#allocation4 + $0x9c] sm:$0xf]
    %v2101 = vld [vmem:[#allocation4 + $0xa0] sm:$0xf]
    %v2102 = vld [vmem:[#allocation4 + $0xa4] sm:$0xf]
    %v2103 = vld [vmem:[#allocation4 + $0xa8] sm:$0xf]
    %v2104 = vld [vmem:[#allocation4 + $0xac] sm:$0xf]
    %v2105 = vld [vmem:[#allocation4 + $0xb0] sm:$0xf]
    %v2106 = vld [vmem:[#allocation4 + $0xb4] sm:$0xf]
    %v2107 = vld [vmem:[#allocation4 + $0xb8] sm:$0xf]
    %v2108 = vld [vmem:[#allocation4 + $0xbc] sm:$0xf]
    %v2109 = vld [vmem:[#allocation4 + $0xc0] sm:$0xf]
    %v2110 = vld [vmem:[#allocation4 + $0xc4] sm:$0xf]
    %v2111 = vld [vmem:[#allocation4 + $0xc8] sm:$0xf]
    %v2112 = vld [vmem:[#allocation4 + $0xcc] sm:$0xf]
    %v2113 = vld [vmem:[#allocation4 + $0xd0] sm:$0xf]
    %v2114 = vld [vmem:[#allocation4 + $0xd4] sm:$0xf]
    %v2115 = vld [vmem:[#allocation4 + $0xd8] sm:$0xf]
    %v2116 = vld [vmem:[#allocation4 + $0xdc] sm:$0xf]
    %v2117 = vld [vmem:[#allocation4 + $0xe0] sm:$0xf]
    %v2118 = vld [vmem:[#allocation4 + $0xe4] sm:$0xf]
    %v2119 = vld [vmem:[#allocation4 + $0xe8] sm:$0xf]
    %v2120 = vld [vmem:[#allocation4 + $0xec] sm:$0xf]
    %v2121 = vld [vmem:[#allocation4 + $0xf0] sm:$0xf]
    %v2122 = vld [vmem:[#allocation4 + $0xf4] sm:$0xf]
    %v2123 = vld [vmem:[#allocation4 + $0xf8] sm:$0xf]
    %v2124 = vld [vmem:[#allocation4 + $0xfc] sm:$0xf]
    %v2125 = vld [vmem:[#allocation4 + $0x100] sm:$0xf]
    %v2126 = vld [vmem:[#allocation4 + $0x104] sm:$0xf]
    %v2127 = vld [vmem:[#allocation4 + $0x108] sm:$0xf]
    %v2128 = vld [vmem:[#allocation4 + $0x10c] sm:$0xf]
    %v2129 = vld [vmem:[#allocation4 + $0x110] sm:$0xf]
    %v2130 = vld [vmem:[#allocation4 + $0x114] sm:$0xf]
    %v2131 = vld [vmem:[#allocation4 + $0x118] sm:$0xf]
    %v2132 = vld [vmem:[#allocation4 + $0x11c] sm:$0xf]
    %v2133 = vld [vmem:[#allocation4 + $0x120] sm:$0xf]
    %v2134 = vld [vmem:[#allocation4 + $0x124] sm:$0xf]
    %v2135 = vld [vmem:[#allocation4 + $0x128] sm:$0xf]
    %v2136 = vld [vmem:[#allocation4 + $0x12c] sm:$0xf]
    %v2137 = vld [vmem:[#allocation4 + $0x130] sm:$0xf]
    %v2138 = vld [vmem:[#allocation4 + $0x134] sm:$0xf]
    %v2139 = vld [vmem:[#allocation4 + $0x138] sm:$0xf]
    %v2140 = vld [vmem:[#allocation4 + $0x13c] sm:$0xf]
    %v2141 = vld [vmem:[#allocation4 + $0x140] sm:$0xf]
    %v2142 = vld [vmem:[#allocation4 + $0x144] sm:$0xf]
    %v2143 = vld [vmem:[#allocation4 + $0x148] sm:$0xf]
    %v2144 = vld [vmem:[#allocation4 + $0x14c] sm:$0xf]
    %v2145 = vld [vmem:[#allocation4 + $0x150] sm:$0xf]
    %v2146 = vld [vmem:[#allocation4 + $0x154] sm:$0xf]
    %v2147 = vld [vmem:[#allocation4 + $0x158] sm:$0xf]
    %v2148 = vld [vmem:[#allocation4 + $0x15c] sm:$0xf]
    %v2149 = vld [vmem:[#allocation4 + $0x160] sm:$0xf]
    %v2150 = vld [vmem:[#allocation4 + $0x164] sm:$0xf]
    %v2151 = vld [vmem:[#allocation4 + $0x168] sm:$0xf]
    %v2152 = vld [vmem:[#allocation4 + $0x16c] sm:$0xf]
    %v2153 = vld [vmem:[#allocation4 + $0x170] sm:$0xf]
    %v2154 = vld [vmem:[#allocation4 + $0x174] sm:$0xf]
    %v2155 = vld [vmem:[#allocation4 + $0x178] sm:$0xf]
    %v2156 = vld [vmem:[#allocation4 + $0x17c] sm:$0xf]
    %v2157 = vld [vmem:[#allocation4 + $0x180] sm:$0xf]
    %v2158 = vld [vmem:[#allocation4 + $0x184] sm:$0xf]
    %v2159 = vld [vmem:[#allocation4 + $0x188] sm:$0xf]
    %v2160 = vld [vmem:[#allocation4 + $0x18c] sm:$0xf]
    %v2161 = vld [vmem:[#allocation4 + $0x190] sm:$0xf]
    %v2162 = vld [vmem:[#allocation4 + $0x194] sm:$0xf]
    %v2163 = vld [vmem:[#allocation4 + $0x198] sm:$0xf]
    %v2164 = vld [vmem:[#allocation4 + $0x19c] sm:$0xf]
    %v2165 = vld [vmem:[#allocation4 + $0x1a0] sm:$0xf]
    %v2166 = vld [vmem:[#allocation4 + $0x1a4] sm:$0xf]
    %v2167 = vld [vmem:[#allocation4 + $0x1a8] sm:$0xf]
    %v2168 = vld [vmem:[#allocation4 + $0x1ac] sm:$0xf]
    %v2169 = vld [vmem:[#allocation4 + $0x1b0] sm:$0xf]
    %v2170 = vld [vmem:[#allocation4 + $0x1b4] sm:$0xf]
    %v2171 = vld [vmem:[#allocation4 + $0x1b8] sm:$0xf]
    %v2172 = vld [vmem:[#allocation4 + $0x1bc] sm:$0xf]
    %v2173 = vld [vmem:[#allocation4 + $0x1c0] sm:$0xf]
    %v2174 = vld [vmem:[#allocation4 + $0x1c4] sm:$0xf]
    %v2175 = vld [vmem:[#allocation4 + $0x1c8] sm:$0xf]
    %v2176 = vld [vmem:[#allocation4 + $0x1cc] sm:$0xf]
    %v2177 = vld [vmem:[#allocation4 + $0x1d0] sm:$0xf]
    %v2178 = vld [vmem:[#allocation4 + $0x1d4] sm:$0xf]
    %v2179 = vld [vmem:[#allocation4 + $0x1d8] sm:$0xf]
    %v2180 = vld [vmem:[#allocation4 + $0x1dc] sm:$0xf]
    %v2181 = vld [vmem:[#allocation4 + $0x1e0] sm:$0xf]
    %v2182 = vld [vmem:[#allocation4 + $0x1e4] sm:$0xf]
    %v2183 = vld [vmem:[#allocation4 + $0x1e8] sm:$0xf]
    %v2184 = vld [vmem:[#allocation4 + $0x1ec] sm:$0xf]
    %v2185 = vld [vmem:[#allocation4 + $0x1f0] sm:$0xf]
    %v2186 = vld [vmem:[#allocation4 + $0x1f4] sm:$0xf]
    %v2187 = vld [vmem:[#allocation4 + $0x1f8] sm:$0xf]
    %v2188 = vld [vmem:[#allocation4 + $0x1fc] sm:$0xf]
    %v2189 = vld [vmem:[#allocation4 + $0x200] sm:$0xf]
    %v2190 = vld [vmem:[#allocation4 + $0x204] sm:$0xf]
    %v2191 = vld [vmem:[#allocation4 + $0x208] sm:$0xf]
    %v2192 = vld [vmem:[#allocation4 + $0x20c] sm:$0xf]
    %v2193 = vld [vmem:[#allocation4 + $0x210] sm:$0xf]
    %v2194 = vld [vmem:[#allocation4 + $0x214] sm:$0xf]
    %v2195 = vld [vmem:[#allocation4 + $0x218] sm:$0xf]
    %v2196 = vld [vmem:[#allocation4 + $0x21c] sm:$0xf]
    %v2197 = vld [vmem:[#allocation4 + $0x220] sm:$0xf]
    %v2198 = vld [vmem:[#allocation4 + $0x224] sm:$0xf]
    %v2199 = vld [vmem:[#allocation4 + $0x228] sm:$0xf]
    %v2200 = vld [vmem:[#allocation4 + $0x22c] sm:$0xf]
    %v2201 = vld [vmem:[#allocation4 + $0x230] sm:$0xf]
    %v2202 = vld [vmem:[#allocation4 + $0x234] sm:$0xf]
    %v2203 = vld [vmem:[#allocation4 + $0x238] sm:$0xf]
    %v2204 = vld [vmem:[#allocation4 + $0x23c] sm:$0xf]
    %v2205 = vld [vmem:[%s2] sm:$0x1]
    %v2207 = vlaneseq
    %v2208 = vshrl.u32 %v2207, 7
    %v2209 = vsub.s32 0, %v2208
    %v2210 = vrot.slane %v2205, %v2209
    %v2356 = vunpack.c.l.b16 %v2061
    %v2357 = vunpack.c.l.b16 %v2062
    %v2358 = vunpack.c.l.b16 %v2063
    %v2359 = vunpack.c.l.b16 %v2064
    %v2360 = vunpack.c.l.b16 %v2065
    %v2361 = vunpack.c.l.b16 %v2066
    %v2362 = vunpack.c.l.b16 %v2067
    %v2363 = vunpack.c.l.b16 %v2068
    %v2364 = vunpack.c.l.b16 %v2069
    %v2365 = vunpack.c.l.b16 %v2070
    %v2366 = vunpack.c.l.b16 %v2071
    %v2367 = vunpack.c.l.b16 %v2072
    %v2368 = vunpack.c.l.b16 %v2073
    %v2369 = vunpack.c.l.b16 %v2074
    %v2370 = vunpack.c.l.b16 %v2075
    %v2371 = vunpack.c.l.b16 %v2076
    %v2372 = vunpack.c.l.b16 %v2077
    %v2373 = vunpack.c.l.b16 %v2078
    %v2374 = vunpack.c.l.b16 %v2079
    %v2375 = vunpack.c.l.b16 %v2080
    %v2376 = vunpack.c.l.b16 %v2081
    %v2377 = vunpack.c.l.b16 %v2082
    %v2378 = vunpack.c.l.b16 %v2083
    %v2379 = vunpack.c.l.b16 %v2084
    %v2380 = vunpack.c.l.b16 %v2085
    %v2381 = vunpack.c.l.b16 %v2086
    %v2382 = vunpack.c.l.b16 %v2087
    %v2383 = vunpack.c.l.b16 %v2088
    %v2384 = vunpack.c.l.b16 %v2089
    %v2385 = vunpack.c.l.b16 %v2090
    %v2386 = vunpack.c.l.b16 %v2091
    %v2387 = vunpack.c.l.b16 %v2092
    %v2388 = vunpack.c.l.b16 %v2093
    %v2389 = vunpack.c.l.b16 %v2094
    %v2390 = vunpack.c.l.b16 %v2095
    %v2391 = vunpack.c.l.b16 %v2096
    %v2392 = vunpack.c.l.b16 %v2097
    %v2393 = vunpack.c.l.b16 %v2098
    %v2394 = vunpack.c.l.b16 %v2099
    %v2395 = vunpack.c.l.b16 %v2100
    %v2396 = vunpack.c.l.b16 %v2101
    %v2397 = vunpack.c.l.b16 %v2102
    %v2398 = vunpack.c.l.b16 %v2103
    %v2399 = vunpack.c.l.b16 %v2104
    %v2400 = vunpack.c.l.b16 %v2105
    %v2401 = vunpack.c.l.b16 %v2106
    %v2402 = vunpack.c.l.b16 %v2107
    %v2403 = vunpack.c.l.b16 %v2108
    %v2404 = vunpack.c.l.b16 %v2109
    %v2405 = vunpack.c.l.b16 %v2110
    %v2406 = vunpack.c.l.b16 %v2111
    %v2407 = vunpack.c.l.b16 %v2112
    %v2408 = vunpack.c.l.b16 %v2113
    %v2409 = vunpack.c.l.b16 %v2114
    %v2410 = vunpack.c.l.b16 %v2115
    %v2411 = vunpack.c.l.b16 %v2116
    %v2412 = vunpack.c.l.b16 %v2117
    %v2413 = vunpack.c.l.b16 %v2118
    %v2414 = vunpack.c.l.b16 %v2119
    %v2415 = vunpack.c.l.b16 %v2120
    %v2416 = vunpack.c.l.b16 %v2121
    %v2417 = vunpack.c.l.b16 %v2122
    %v2418 = vunpack.c.l.b16 %v2123
    %v2419 = vunpack.c.l.b16 %v2124
    %v2420 = vunpack.c.l.b16 %v2125
    %v2421 = vunpack.c.l.b16 %v2126
    %v2422 = vunpack.c.l.b16 %v2127
    %v2423 = vunpack.c.l.b16 %v2128
    %v2424 = vunpack.c.l.b16 %v2129
    %v2425 = vunpack.c.l.b16 %v2130
    %v2426 = vunpack.c.l.b16 %v2131
    %v2427 = vunpack.c.l.b16 %v2132
    %v2428 = vunpack.c.l.b16 %v2133
    %v2429 = vunpack.c.l.b16 %v2134
    %v2430 = vunpack.c.l.b16 %v2135
    %v2431 = vunpack.c.l.b16 %v2136
    %v2432 = vunpack.c.l.b16 %v2137
    %v2433 = vunpack.c.l.b16 %v2138
    %v2434 = vunpack.c.l.b16 %v2139
    %v2435 = vunpack.c.l.b16 %v2140
    %v2436 = vunpack.c.l.b16 %v2141
    %v2437 = vunpack.c.l.b16 %v2142
    %v2438 = vunpack.c.l.b16 %v2143
    %v2439 = vunpack.c.l.b16 %v2144
    %v2440 = vunpack.c.l.b16 %v2145
    %v2441 = vunpack.c.l.b16 %v2146
    %v2442 = vunpack.c.l.b16 %v2147
    %v2443 = vunpack.c.l.b16 %v2148
    %v2444 = vunpack.c.l.b16 %v2149
    %v2445 = vunpack.c.l.b16 %v2150
    %v2446 = vunpack.c.l.b16 %v2151
    %v2447 = vunpack.c.l.b16 %v2152
    %v2448 = vunpack.c.l.b16 %v2153
    %v2449 = vunpack.c.l.b16 %v2154
    %v2450 = vunpack.c.l.b16 %v2155
    %v2451 = vunpack.c.l.b16 %v2156
    %v2452 = vunpack.c.l.b16 %v2157
    %v2453 = vunpack.c.l.b16 %v2158
    %v2454 = vunpack.c.l.b16 %v2159
    %v2455 = vunpack.c.l.b16 %v2160
    %v2456 = vunpack.c.l.b16 %v2161
    %v2457 = vunpack.c.l.b16 %v2162
    %v2458 = vunpack.c.l.b16 %v2163
    %v2459 = vunpack.c.l.b16 %v2164
    %v2460 = vunpack.c.l.b16 %v2165
    %v2461 = vunpack.c.l.b16 %v2166
    %v2462 = vunpack.c.l.b16 %v2167
    %v2463 = vunpack.c.l.b16 %v2168
    %v2464 = vunpack.c.l.b16 %v2169
    %v2465 = vunpack.c.l.b16 %v2170
    %v2466 = vunpack.c.l.b16 %v2171
    %v2467 = vunpack.c.l.b16 %v2172
    %v2468 = vunpack.c.l.b16 %v2173
    %v2469 = vunpack.c.l.b16 %v2174
    %v2470 = vunpack.c.l.b16 %v2175
    %v2471 = vunpack.c.l.b16 %v2176
    %v2472 = vunpack.c.l.b16 %v2177
    %v2473 = vunpack.c.l.b16 %v2178
    %v2474 = vunpack.c.l.b16 %v2179
    %v2475 = vunpack.c.l.b16 %v2180
    %v2476 = vunpack.c.l.b16 %v2181
    %v2477 = vunpack.c.l.b16 %v2182
    %v2478 = vunpack.c.l.b16 %v2183
    %v2479 = vunpack.c.l.b16 %v2184
    %v2480 = vunpack.c.l.b16 %v2185
    %v2481 = vunpack.c.l.b16 %v2186
    %v2482 = vunpack.c.l.b16 %v2187
    %v2483 = vunpack.c.l.b16 %v2188
    %v2484 = vunpack.c.l.b16 %v2189
    %v2485 = vunpack.c.l.b16 %v2190
    %v2486 = vunpack.c.l.b16 %v2191
    %v2487 = vunpack.c.l.b16 %v2192
    %v2488 = vunpack.c.l.b16 %v2193
    %v2489 = vunpack.c.l.b16 %v2194
    %v2490 = vunpack.c.l.b16 %v2195
    %v2491 = vunpack.c.l.b16 %v2196
    %v2492 = vunpack.c.l.b16 %v2197
    %v2493 = vunpack.c.l.b16 %v2198
    %v2494 = vunpack.c.l.b16 %v2199
    %v2495 = vunpack.c.l.b16 %v2200
    %v2496 = vunpack.c.l.b16 %v2201
    %v2497 = vunpack.c.l.b16 %v2202
    %v2498 = vunpack.c.l.b16 %v2203
    %v2499 = vunpack.c.l.b16 %v2204
    %v2500 = vpack.c.b16 %v2357, %v2356
    %v2501 = vpack.c.b16 %v2359, %v2358
    %v2502 = vpack.c.b16 %v2361, %v2360
    %v2503 = vpack.c.b16 %v2363, %v2362
    %v2504 = vpack.c.b16 %v2365, %v2364
    %v2505 = vpack.c.b16 %v2367, %v2366
    %v2506 = vpack.c.b16 %v2369, %v2368
    %v2507 = vpack.c.b16 %v2371, %v2370
    %v2508 = vpack.c.b16 %v2373, %v2372
    %v2509 = vpack.c.b16 %v2375, %v2374
    %v2510 = vpack.c.b16 %v2377, %v2376
    %v2511 = vpack.c.b16 %v2379, %v2378
    %v2512 = vpack.c.b16 %v2381, %v2380
    %v2513 = vpack.c.b16 %v2383, %v2382
    %v2514 = vpack.c.b16 %v2385, %v2384
    %v2515 = vpack.c.b16 %v2387, %v2386
    %v2516 = vpack.c.b16 %v2389, %v2388
    %v2517 = vpack.c.b16 %v2391, %v2390
    %v2518 = vpack.c.b16 %v2393, %v2392
    %v2519 = vpack.c.b16 %v2395, %v2394
    %v2520 = vpack.c.b16 %v2397, %v2396
    %v2521 = vpack.c.b16 %v2399, %v2398
    %v2522 = vpack.c.b16 %v2401, %v2400
    %v2523 = vpack.c.b16 %v2403, %v2402
    %v2524 = vpack.c.b16 %v2405, %v2404
    %v2525 = vpack.c.b16 %v2407, %v2406
    %v2526 = vpack.c.b16 %v2409, %v2408
    %v2527 = vpack.c.b16 %v2411, %v2410
    %v2528 = vpack.c.b16 %v2413, %v2412
    %v2529 = vpack.c.b16 %v2415, %v2414
    %v2530 = vpack.c.b16 %v2417, %v2416
    %v2531 = vpack.c.b16 %v2419, %v2418
    %v2532 = vpack.c.b16 %v2421, %v2420
    %v2533 = vpack.c.b16 %v2423, %v2422
    %v2534 = vpack.c.b16 %v2425, %v2424
    %v2535 = vpack.c.b16 %v2427, %v2426
    %v2536 = vpack.c.b16 %v2429, %v2428
    %v2537 = vpack.c.b16 %v2431, %v2430
    %v2538 = vpack.c.b16 %v2433, %v2432
    %v2539 = vpack.c.b16 %v2435, %v2434
    %v2540 = vpack.c.b16 %v2437, %v2436
    %v2541 = vpack.c.b16 %v2439, %v2438
    %v2542 = vpack.c.b16 %v2441, %v2440
    %v2543 = vpack.c.b16 %v2443, %v2442
    %v2544 = vpack.c.b16 %v2445, %v2444
    %v2545 = vpack.c.b16 %v2447, %v2446
    %v2546 = vpack.c.b16 %v2449, %v2448
    %v2547 = vpack.c.b16 %v2451, %v2450
    %v2548 = vpack.c.b16 %v2453, %v2452
    %v2549 = vpack.c.b16 %v2455, %v2454
    %v2550 = vpack.c.b16 %v2457, %v2456
    %v2551 = vpack.c.b16 %v2459, %v2458
    %v2552 = vpack.c.b16 %v2461, %v2460
    %v2553 = vpack.c.b16 %v2463, %v2462
    %v2554 = vpack.c.b16 %v2465, %v2464
    %v2555 = vpack.c.b16 %v2467, %v2466
    %v2556 = vpack.c.b16 %v2469, %v2468
    %v2557 = vpack.c.b16 %v2471, %v2470
    %v2558 = vpack.c.b16 %v2473, %v2472
    %v2559 = vpack.c.b16 %v2475, %v2474
    %v2560 = vpack.c.b16 %v2477, %v2476
    %v2561 = vpack.c.b16 %v2479, %v2478
    %v2562 = vpack.c.b16 %v2481, %v2480
    %v2563 = vpack.c.b16 %v2483, %v2482
    %v2564 = vpack.c.b16 %v2485, %v2484
    %v2565 = vpack.c.b16 %v2487, %v2486
    %v2566 = vpack.c.b16 %v2489, %v2488
    %v2567 = vpack.c.b16 %v2491, %v2490
    %v2568 = vpack.c.b16 %v2493, %v2492
    %v2569 = vpack.c.b16 %v2495, %v2494
    %v2570 = vpack.c.b16 %v2497, %v2496
    %v2571 = vpack.c.b16 %v2499, %v2498
    %2644 = vmatprep.subr.bf16.mxu0 0
    %2645 = vmatpush1.bf16.msra.mxu0 %v2500
    %2646 = vmatprep.subr.bf16.mxu0 0
    %2647 = vmatpush1.bf16.msra.mxu0 %v2501
    %2648 = vmatprep.subr.bf16.mxu0 0
    %2649 = vmatpush1.bf16.msra.mxu0 %v2502
    %2650 = vmatprep.subr.bf16.mxu0 0
    %2651 = vmatpush1.bf16.msra.mxu0 %v2503
    %2652 = vmatprep.subr.bf16.mxu0 0
    %2653 = vmatpush1.bf16.msra.mxu0 %v2504
    %2654 = vmatprep.subr.bf16.mxu0 0
    %2655 = vmatpush1.bf16.msra.mxu0 %v2505
    %2656 = vmatprep.subr.bf16.mxu0 0
    %2657 = vmatpush1.bf16.msra.mxu0 %v2506
    %2658 = vmatprep.subr.bf16.mxu0 0
    %2659 = vmatpush1.bf16.msra.mxu0 %v2507
    %2660 = vmatprep.subr.bf16.mxu0 0
    %2661 = vmatpush1.bf16.msra.mxu0 %v2508
    %2662 = vmatprep.subr.bf16.mxu0 0
    %2663 = vmatpush1.bf16.msra.mxu0 %v2509
    %2664 = vmatprep.subr.bf16.mxu0 0
    %2665 = vmatpush1.bf16.msra.mxu0 %v2510
    %2666 = vmatprep.subr.bf16.mxu0 0
    %2667 = vmatpush1.bf16.msra.mxu0 %v2511
    %2668 = vmatprep.subr.bf16.mxu0 0
    %2669 = vmatpush1.bf16.msra.mxu0 %v2512
    %2670 = vmatprep.subr.bf16.mxu0 0
    %2671 = vmatpush1.bf16.msra.mxu0 %v2513
    %2672 = vmatprep.subr.bf16.mxu0 0
    %2673 = vmatpush1.bf16.msra.mxu0 %v2514
    %2674 = vmatprep.subr.bf16.mxu0 0
    %2675 = vmatpush1.bf16.msra.mxu0 %v2515
    %2676 = vmatprep.mubr.bf16.mxu0 %v1990
    %2677 = vmatmul.mubr.bf16.gmra.mrb[0].mxu0 %v1989
    %v2678 = vpop.f32.mrb[0].mxu0
    %v2679 = vadd.f32 %v2210, %v2678
    %v2680 = vpop.f32.mrb[0].mxu0
    %v2681 = vpop.f32.mrb[0].mxu0
    %v2682 = vadd.f32 %v2210, %v2681
    %v2683 = vpop.f32.mrb[0].mxu0
    %2684 = vmatprep.mubr.bf16.mxu0 %v1999
    %2685 = vmatmul.mubr.bf16.gmra.mrb[0].mxu0 %v1998
    %v2686 = vpop.f32.mrb[0].mxu0
    %v2687 = vadd.f32 %v2210, %v2686
    %v2688 = vpop.f32.mrb[0].mxu0
    %v2689 = vpop.f32.mrb[0].mxu0
    %v2690 = vadd.f32 %v2210, %v2689
    %v2691 = vpop.f32.mrb[0].mxu0
    %2692 = vmatprep.mubr.bf16.mxu0 %v2008
    %2693 = vmatmul.mubr.bf16.gmra.mrb[0].mxu0 %v2007
    %v2694 = vpop.f32.mrb[0].mxu0
    %v2695 = vadd.f32 %v2210, %v2694
    %v2696 = vpop.f32.mrb[0].mxu0
    %v2697 = vpop.f32.mrb[0].mxu0
    %v2698 = vadd.f32 %v2210, %v2697
    %v2699 = vpop.f32.mrb[0].mxu0
    %2700 = vmatprep.mubr.bf16.mxu0 %v2017
    %2701 = vmatmul.mubr.bf16.gmra.mrb[0].mxu0 %v2016
    %v2702 = vpop.f32.mrb[0].mxu0
    %v2703 = vadd.f32 %v2210, %v2702
    %v2704 = vpop.f32.mrb[0].mxu0
    %v2705 = vpop.f32.mrb[0].mxu0
    %v2706 = vadd.f32 %v2210, %v2705
    %v2707 = vpop.f32.mrb[0].mxu0
    %2708 = vmatprep.mubr.bf16.mxu0 %v2026
    %2709 = vmatmul.mubr.bf16.gmra.mrb[0].mxu0 %v2025
    %v2710 = vpop.f32.mrb[0].mxu0
    %v2711 = vadd.f32 %v2210, %v2710
    %v2712 = vpop.f32.mrb[0].mxu0
    %v2713 = vpop.f32.mrb[0].mxu0
    %v2714 = vadd.f32 %v2210, %v2713
    %v2715 = vpop.f32.mrb[0].mxu0
    %2716 = vmatprep.mubr.bf16.mxu0 %v2035
    %2717 = vmatmul.mubr.bf16.gmra.mrb[0].mxu0 %v2034
    %v2718 = vpop.f32.mrb[0].mxu0
    %v2719 = vadd.f32 %v2210, %v2718
    %v2720 = vpop.f32.mrb[0].mxu0
    %v2721 = vpop.f32.mrb[0].mxu0
    %v2722 = vadd.f32 %v2210, %v2721
    %v2723 = vpop.f32.mrb[0].mxu0
    %2724 = vmatprep.mubr.bf16.mxu0 %v2044
    %2725 = vmatmul.mubr.bf16.gmra.mrb[0].mxu0 %v2043
    %v2726 = vpop.f32.mrb[0].mxu0
    %v2727 = vadd.f32 %v2210, %v2726
    %v2728 = vpop.f32.mrb[0].mxu0
    %v2729 = vpop.f32.mrb[0].mxu0
    %v2730 = vadd.f32 %v2210, %v2729
    %v2731 = vpop.f32.mrb[0].mxu0
    %2732 = vmatprep.mubr.bf16.mxu0 %v2053
    %2733 = vmatmul.mubr.bf16.gmra.mrb[0].mxu0 %v2052
    %v2734 = vpop.f32.mrb[0].mxu0
    %v2735 = vadd.f32 %v2210, %v2734
    %v2736 = vpop.f32.mrb[0].mxu0
    %v2737 = vpop.f32.mrb[0].mxu0
    %v2738 = vadd.f32 %v2210, %v2737
    %v2739 = vpop.f32.mrb[0].mxu0
    %2740 = vdwg.mxu0
    %2741 = vmatprep.subr.bf16.mxu0 0
    %2742 = vmatpush1.bf16.msra.mxu0 %v2516
    %2743 = vmatprep.subr.bf16.mxu0 0
    %2744 = vmatpush1.bf16.msra.mxu0 %v2517
    %2745 = vmatprep.subr.bf16.mxu0 0
    %2746 = vmatpush1.bf16.msra.mxu0 %v2518
    %2747 = vmatprep.subr.bf16.mxu0 0
    %2748 = vmatpush1.bf16.msra.mxu0 %v2519
    %2749 = vmatprep.subr.bf16.mxu0 0
    %2750 = vmatpush1.bf16.msra.mxu0 %v2520
    %2751 = vmatprep.subr.bf16.mxu0 0
    %2752 = vmatpush1.bf16.msra.mxu0 %v2521
    %2753 = vmatprep.subr.bf16.mxu0 0
    %2754 = vmatpush1.bf16.msra.mxu0 %v2522
    %2755 = vmatprep.subr.bf16.mxu0 0
    %2756 = vmatpush1.bf16.msra.mxu0 %v2523
    %2757 = vmatprep.subr.bf16.mxu0 0
    %2758 = vmatpush1.bf16.msra.mxu0 %v2524
    %2759 = vmatprep.subr.bf16.mxu0 0
    %2760 = vmatpush1.bf16.msra.mxu0 %v2525
    %2761 = vmatprep.subr.bf16.mxu0 0
    %2762 = vmatpush1.bf16.msra.mxu0 %v2526
    %2763 = vmatprep.subr.bf16.mxu0 0
    %2764 = vmatpush1.bf16.msra.mxu0 %v2527
    %2765 = vmatprep.subr.bf16.mxu0 0
    %2766 = vmatpush1.bf16.msra.mxu0 %v2528
    %2767 = vmatprep.subr.bf16.mxu0 0
    %2768 = vmatpush1.bf16.msra.mxu0 %v2529
    %2769 = vmatprep.subr.bf16.mxu0 0
    %2770 = vmatpush1.bf16.msra.mxu0 %v2530
    %2771 = vmatprep.subr.bf16.mxu0 0
    %2772 = vmatpush1.bf16.msra.mxu0 %v2531
    %2773 = vmatprep.mubr.bf16.mxu0 %v1992
    %2774 = vmatmul.mubr.bf16.gmra.mrb[0].mxu0 %v1991
    %v2775 = vpop.f32.mrb[0].mxu0
    %v2776 = vadd.f32 %v2679, %v2775
    %v2777 = vpop.f32.mrb[0].mxu0
    %v2778 = vpop.f32.mrb[0].mxu0
    %v2779 = vadd.f32 %v2682, %v2778
    %v2780 = vpop.f32.mrb[0].mxu0
    %2781 = vmatprep.mubr.bf16.mxu0 %v2001
    %2782 = vmatmul.mubr.bf16.gmra.mrb[0].mxu0 %v2000
    %v2783 = vpop.f32.mrb[0].mxu0
    %v2784 = vadd.f32 %v2687, %v2783
    %v2785 = vpop.f32.mrb[0].mxu0
    %v2786 = vpop.f32.mrb[0].mxu0
    %v2787 = vadd.f32 %v2690, %v2786
    %v2788 = vpop.f32.mrb[0].mxu0
    %2789 = vmatprep.mubr.bf16.mxu0 %v2010
    %2790 = vmatmul.mubr.bf16.gmra.mrb[0].mxu0 %v2009
    %v2791 = vpop.f32.mrb[0].mxu0
    %v2792 = vadd.f32 %v2695, %v2791
    %v2793 = vpop.f32.mrb[0].mxu0
    %v2794 = vpop.f32.mrb[0].mxu0
    %v2795 = vadd.f32 %v2698, %v2794
    %v2796 = vpop.f32.mrb[0].mxu0
    %2797 = vmatprep.mubr.bf16.mxu0 %v2019
    %2798 = vmatmul.mubr.bf16.gmra.mrb[0].mxu0 %v2018
    %v2799 = vpop.f32.mrb[0].mxu0
    %v2800 = vadd.f32 %v2703, %v2799
    %v2801 = vpop.f32.mrb[0].mxu0
    %v2802 = vpop.f32.mrb[0].mxu0
    %v2803 = vadd.f32 %v2706, %v2802
    %v2804 = vpop.f32.mrb[0].mxu0
    %2805 = vmatprep.mubr.bf16.mxu0 %v2028
    %2806 = vmatmul.mubr.bf16.gmra.mrb[0].mxu0 %v2027
    %v2807 = vpop.f32.mrb[0].mxu0
    %v2808 = vadd.f32 %v2711, %v2807
    %v2809 = vpop.f32.mrb[0].mxu0
    %v2810 = vpop.f32.mrb[0].mxu0
    %v2811 = vadd.f32 %v2714, %v2810
    %v2812 = vpop.f32.mrb[0].mxu0
    %2813 = vmatprep.mubr.bf16.mxu0 %v2037
    %2814 = vmatmul.mubr.bf16.gmra.mrb[0].mxu0 %v2036
    %v2815 = vpop.f32.mrb[0].mxu0
    %v2816 = vadd.f32 %v2719, %v2815
    %v2817 = vpop.f32.mrb[0].mxu0
    %v2818 = vpop.f32.mrb[0].mxu0
    %v2819 = vadd.f32 %v2722, %v2818
    %v2820 = vpop.f32.mrb[0].mxu0
    %2821 = vmatprep.mubr.bf16.mxu0 %v2046
    %2822 = vmatmul.mubr.bf16.gmra.mrb[0].mxu0 %v2045
    %v2823 = vpop.f32.mrb[0].mxu0
    %v2824 = vadd.f32 %v2727, %v2823
    %v2825 = vpop.f32.mrb[0].mxu0
    %v2826 = vpop.f32.mrb[0].mxu0
    %v2827 = vadd.f32 %v2730, %v2826
    %v2828 = vpop.f32.mrb[0].mxu0
    %2829 = vmatprep.mubr.bf16.mxu0 %v2055
    %2830 = vmatmul.mubr.bf16.gmra.mrb[0].mxu0 %v2054
    %v2831 = vpop.f32.mrb[0].mxu0
    %v2832 = vadd.f32 %v2735, %v2831
    %v2833 = vpop.f32.mrb[0].mxu0
    %v2834 = vpop.f32.mrb[0].mxu0
    %v2835 = vadd.f32 %v2738, %v2834
    %v2836 = vpop.f32.mrb[0].mxu0
    %2837 = vdwg.mxu0
    %2838 = vmatprep.subr.bf16.mxu0 0
    %2839 = vmatpush1.bf16.msra.mxu0 %v2532
    %2840 = vmatprep.subr.bf16.mxu0 0
    %2841 = vmatpush1.bf16.msra.mxu0 %v2533
    %2842 = vmatprep.subr.bf16.mxu0 0
    %2843 = vmatpush1.bf16.msra.mxu0 %v2534
    %2844 = vmatprep.subr.bf16.mxu0 0
    %2845 = vmatpush1.bf16.msra.mxu0 %v2535
    %2846 = vmatprep.subr.bf16.mxu0 0
    %2847 = vmatpush1.bf16.msra.mxu0 %v2536
    %2848 = vmatprep.subr.bf16.mxu0 0
    %2849 = vmatpush1.bf16.msra.mxu0 %v2537
    %2850 = vmatprep.subr.bf16.mxu0 0
    %2851 = vmatpush1.bf16.msra.mxu0 %v2538
    %2852 = vmatprep.subr.bf16.mxu0 0
    %2853 = vmatpush1.bf16.msra.mxu0 %v2539
    %2854 = vmatprep.subr.bf16.mxu0 0
    %2855 = vmatpush1.bf16.msra.mxu0 %v2540
    %2856 = vmatprep.subr.bf16.mxu0 0
    %2857 = vmatpush1.bf16.msra.mxu0 %v2541
    %2858 = vmatprep.subr.bf16.mxu0 0
    %2859 = vmatpush1.bf16.msra.mxu0 %v2542
    %2860 = vmatprep.subr.bf16.mxu0 0
    %2861 = vmatpush1.bf16.msra.mxu0 %v2543
    %2862 = vmatprep.subr.bf16.mxu0 0
    %2863 = vmatpush1.bf16.msra.mxu0 %v2544
    %2864 = vmatprep.subr.bf16.mxu0 0
    %2865 = vmatpush1.bf16.msra.mxu0 %v2545
    %2866 = vmatprep.subr.bf16.mxu0 0
    %2867 = vmatpush1.bf16.msra.mxu0 %v2546
    %2868 = vmatprep.subr.bf16.mxu0 0
    %2869 = vmatpush1.bf16.msra.mxu0 %v2547
    %2870 = vmatprep.mubr.bf16.mxu0 %v1994
    %2871 = vmatmul.mubr.bf16.gmra.mrb[0].mxu0 %v1993
    %v2872 = vpop.f32.mrb[0].mxu0
    %v2873 = vadd.f32 %v2776, %v2872
    %v2874 = vpop.f32.mrb[0].mxu0
    %v2875 = vpop.f32.mrb[0].mxu0
    %v2876 = vadd.f32 %v2779, %v2875
    %v2877 = vpop.f32.mrb[0].mxu0
    %2878 = vmatprep.mubr.bf16.mxu0 %v2003
    %2879 = vmatmul.mubr.bf16.gmra.mrb[0].mxu0 %v2002
    %v2880 = vpop.f32.mrb[0].mxu0
    %v2881 = vadd.f32 %v2784, %v2880
    %v2882 = vpop.f32.mrb[0].mxu0
    %v2883 = vpop.f32.mrb[0].mxu0
    %v2884 = vadd.f32 %v2787, %v2883
    %v2885 = vpop.f32.mrb[0].mxu0
    %2886 = vmatprep.mubr.bf16.mxu0 %v2012
    %2887 = vmatmul.mubr.bf16.gmra.mrb[0].mxu0 %v2011
    %v2888 = vpop.f32.mrb[0].mxu0
    %v2889 = vadd.f32 %v2792, %v2888
    %v2890 = vpop.f32.mrb[0].mxu0
    %v2891 = vpop.f32.mrb[0].mxu0
    %v2892 = vadd.f32 %v2795, %v2891
    %v2893 = vpop.f32.mrb[0].mxu0
    %2894 = vmatprep.mubr.bf16.mxu0 %v2021
    %2895 = vmatmul.mubr.bf16.gmra.mrb[0].mxu0 %v2020
    %v2896 = vpop.f32.mrb[0].mxu0
    %v2897 = vadd.f32 %v2800, %v2896
    %v2898 = vpop.f32.mrb[0].mxu0
    %v2899 = vpop.f32.mrb[0].mxu0
    %v2900 = vadd.f32 %v2803, %v2899
    %v2901 = vpop.f32.mrb[0].mxu0
    %2902 = vmatprep.mubr.bf16.mxu0 %v2030
    %2903 = vmatmul.mubr.bf16.gmra.mrb[0].mxu0 %v2029
    %v2904 = vpop.f32.mrb[0].mxu0
    %v2905 = vadd.f32 %v2808, %v2904
    %v2906 = vpop.f32.mrb[0].mxu0
    %v2907 = vpop.f32.mrb[0].mxu0
    %v2908 = vadd.f32 %v2811, %v2907
    %v2909 = vpop.f32.mrb[0].mxu0
    %2910 = vmatprep.mubr.bf16.mxu0 %v2039
    %2911 = vmatmul.mubr.bf16.gmra.mrb[0].mxu0 %v2038
    %v2912 = vpop.f32.mrb[0].mxu0
    %v2913 = vadd.f32 %v2816, %v2912
    %v2914 = vpop.f32.mrb[0].mxu0
    %v2915 = vpop.f32.mrb[0].mxu0
    %v2916 = vadd.f32 %v2819, %v2915
    %v2917 = vpop.f32.mrb[0].mxu0
    %2918 = vmatprep.mubr.bf16.mxu0 %v2048
    %2919 = vmatmul.mubr.bf16.gmra.mrb[0].mxu0 %v2047
    %v2920 = vpop.f32.mrb[0].mxu0
    %v2921 = vadd.f32 %v2824, %v2920
    %v2922 = vpop.f32.mrb[0].mxu0
    %v2923 = vpop.f32.mrb[0].mxu0
    %v2924 = vadd.f32 %v2827, %v2923
    %v2925 = vpop.f32.mrb[0].mxu0
    %2926 = vmatprep.mubr.bf16.mxu0 %v2057
    %2927 = vmatmul.mubr.bf16.gmra.mrb[0].mxu0 %v2056
    %v2928 = vpop.f32.mrb[0].mxu0
    %v2929 = vadd.f32 %v2832, %v2928
    %v2930 = vpop.f32.mrb[0].mxu0
    %v2931 = vpop.f32.mrb[0].mxu0
    %v2932 = vadd.f32 %v2835, %v2931
    %v2933 = vpop.f32.mrb[0].mxu0
    %2934 = vdwg.mxu0
    %2935 = vmatprep.subr.bf16.mxu0 0
    %2936 = vmatpush1.bf16.msra.mxu0 %v2548
    %2937 = vmatprep.subr.bf16.mxu0 0
    %2938 = vmatpush1.bf16.msra.mxu0 %v2549
    %2939 = vmatprep.subr.bf16.mxu0 0
    %2940 = vmatpush1.bf16.msra.mxu0 %v2550
    %2941 = vmatprep.subr.bf16.mxu0 0
    %2942 = vmatpush1.bf16.msra.mxu0 %v2551
    %2943 = vmatprep.subr.bf16.mxu0 0
    %2944 = vmatpush1.bf16.msra.mxu0 %v2552
    %2945 = vmatprep.subr.bf16.mxu0 0
    %2946 = vmatpush1.bf16.msra.mxu0 %v2553
    %2947 = vmatprep.subr.bf16.mxu0 0
    %2948 = vmatpush1.bf16.msra.mxu0 %v2554
    %2949 = vmatprep.subr.bf16.mxu0 0
    %2950 = vmatpush1.bf16.msra.mxu0 %v2555
    %2951 = vmatprep.subr.bf16.mxu0 0
    %2952 = vmatpush1.bf16.msra.mxu0 %v2556
    %2953 = vmatprep.subr.bf16.mxu0 0
    %2954 = vmatpush1.bf16.msra.mxu0 %v2557
    %2955 = vmatprep.subr.bf16.mxu0 0
    %2956 = vmatpush1.bf16.msra.mxu0 %v2558
    %2957 = vmatprep.subr.bf16.mxu0 0
    %2958 = vmatpush1.bf16.msra.mxu0 %v2559
    %2959 = vmatprep.subr.bf16.mxu0 0
    %2960 = vmatpush1.bf16.msra.mxu0 %v2560
    %2961 = vmatprep.subr.bf16.mxu0 0
    %2962 = vmatpush1.bf16.msra.mxu0 %v2561
    %2963 = vmatprep.subr.bf16.mxu0 0
    %2964 = vmatpush1.bf16.msra.mxu0 %v2562
    %2965 = vmatprep.subr.bf16.mxu0 0
    %2966 = vmatpush1.bf16.msra.mxu0 %v2563
    %2967 = vmatprep.mubr.bf16.mxu0 %v1996
    %2968 = vmatmul.mubr.bf16.gmra.mrb[0].mxu0 %v1995
    %v2969 = vpop.f32.mrb[0].mxu0
    %v2970 = vadd.f32 %v2873, %v2969
    %v2971 = vpop.f32.mrb[0].mxu0
    %v2972 = vpop.f32.mrb[0].mxu0
    %v2973 = vadd.f32 %v2876, %v2972
    %v2974 = vpop.f32.mrb[0].mxu0
    %2975 = vmatprep.mubr.bf16.mxu0 %v2005
    %2976 = vmatmul.mubr.bf16.gmra.mrb[0].mxu0 %v2004
    %v2977 = vpop.f32.mrb[0].mxu0
    %v2978 = vadd.f32 %v2881, %v2977
    %v2979 = vpop.f32.mrb[0].mxu0
    %v2980 = vpop.f32.mrb[0].mxu0
    %v2981 = vadd.f32 %v2884, %v2980
    %v2982 = vpop.f32.mrb[0].mxu0
    %2983 = vmatprep.mubr.bf16.mxu0 %v2014
    %2984 = vmatmul.mubr.bf16.gmra.mrb[0].mxu0 %v2013
    %v2985 = vpop.f32.mrb[0].mxu0
    %v2986 = vadd.f32 %v2889, %v2985
    %v2987 = vpop.f32.mrb[0].mxu0
    %v2988 = vpop.f32.mrb[0].mxu0
    %v2989 = vadd.f32 %v2892, %v2988
    %v2990 = vpop.f32.mrb[0].mxu0
    %2991 = vmatprep.mubr.bf16.mxu0 %v2023
    %2992 = vmatmul.mubr.bf16.gmra.mrb[0].mxu0 %v2022
    %v2993 = vpop.f32.mrb[0].mxu0
    %v2994 = vadd.f32 %v2897, %v2993
    %v2995 = vpop.f32.mrb[0].mxu0
    %v2996 = vpop.f32.mrb[0].mxu0
    %v2997 = vadd.f32 %v2900, %v2996
    %v2998 = vpop.f32.mrb[0].mxu0
    %2999 = vmatprep.mubr.bf16.mxu0 %v2032
    %3000 = vmatmul.mubr.bf16.gmra.mrb[0].mxu0 %v2031
    %v3001 = vpop.f32.mrb[0].mxu0
    %v3002 = vadd.f32 %v2905, %v3001
    %v3003 = vpop.f32.mrb[0].mxu0
    %v3004 = vpop.f32.mrb[0].mxu0
    %v3005 = vadd.f32 %v2908, %v3004
    %v3006 = vpop.f32.mrb[0].mxu0
    %3007 = vmatprep.mubr.bf16.mxu0 %v2041
    %3008 = vmatmul.mubr.bf16.gmra.mrb[0].mxu0 %v2040
    %v3009 = vpop.f32.mrb[0].mxu0
    %v3010 = vadd.f32 %v2913, %v3009
    %v3011 = vpop.f32.mrb[0].mxu0
    %v3012 = vpop.f32.mrb[0].mxu0
    %v3013 = vadd.f32 %v2916, %v3012
    %v3014 = vpop.f32.mrb[0].mxu0
    %3015 = vmatprep.mubr.bf16.mxu0 %v2050
    %3016 = vmatmul.mubr.bf16.gmra.mrb[0].mxu0 %v2049
    %v3017 = vpop.f32.mrb[0].mxu0
    %v3018 = vadd.f32 %v2921, %v3017
    %v3019 = vpop.f32.mrb[0].mxu0
    %v3020 = vpop.f32.mrb[0].mxu0
    %v3021 = vadd.f32 %v2924, %v3020
    %v3022 = vpop.f32.mrb[0].mxu0
    %3023 = vmatprep.mubr.bf16.mxu0 %v2059
    %3024 = vmatmul.mubr.bf16.gmra.mrb[0].mxu0 %v2058
    %v3025 = vpop.f32.mrb[0].mxu0
    %v3026 = vadd.f32 %v2929, %v3025
    %v3027 = vpop.f32.mrb[0].mxu0
    %v3028 = vpop.f32.mrb[0].mxu0
    %v3029 = vadd.f32 %v2932, %v3028
    %v3030 = vpop.f32.mrb[0].mxu0
    %3031 = vdwg.mxu0
    %3032 = vmatprep.subr.bf16.mxu0 0
    %3033 = vmatpush1.bf16.msra.mxu0 %v2564
    %3034 = vmatprep.subr.bf16.mxu0 0
    %3035 = vmatpush1.bf16.msra.mxu0 %v2565
    %3036 = vmatprep.subr.bf16.mxu0 0
    %3037 = vmatpush1.bf16.msra.mxu0 %v2566
    %3038 = vmatprep.subr.bf16.mxu0 0
    %3039 = vmatpush1.bf16.msra.mxu0 %v2567
    %3040 = vmatprep.subr.bf16.mxu0 0
    %3041 = vmatpush1.bf16.msra.mxu0 %v2568
    %3042 = vmatprep.subr.bf16.mxu0 0
    %3043 = vmatpush1.bf16.msra.mxu0 %v2569
    %3044 = vmatprep.subr.bf16.mxu0 0
    %3045 = vmatpush1.bf16.msra.mxu0 %v2570
    %3046 = vmatprep.subr.bf16.mxu0 0
    %3047 = vmatpush1.bf16.msra.mxu0 %v2571
    %3048 = vmatprep.subr.bf16.mxu0 0
    %3049 = vmatpush1.bf16.msra.mxu0 0
    %3050 = vmatprep.subr.bf16.mxu0 0
    %3051 = vmatpush1.bf16.msra.mxu0 0
    %3052 = vmatprep.subr.bf16.mxu0 0
    %3053 = vmatpush1.bf16.msra.mxu0 0
    %3054 = vmatprep.subr.bf16.mxu0 0
    %3055 = vmatpush1.bf16.msra.mxu0 0
    %3056 = vmatprep.subr.bf16.mxu0 0
    %3057 = vmatpush1.bf16.msra.mxu0 0
    %3058 = vmatprep.subr.bf16.mxu0 0
    %3059 = vmatpush1.bf16.msra.mxu0 0
    %3060 = vmatprep.subr.bf16.mxu0 0
    %3061 = vmatpush1.bf16.msra.mxu0 0
    %3062 = vmatprep.subr.bf16.mxu0 0
    %3063 = vmatpush1.bf16.msra.mxu0 0
    %3064 = vmatprep.mubr.bf16.mxu0 0
    %3065 = vmatmul.mubr.bf16.gmra.mrb[0].mxu0 %v1997
    %v3066 = vpop.f32.mrb[0].mxu0
    %v3067 = vadd.f32 %v2970, %v3066
    %v3068 = vpop.f32.mrb[0].mxu0
    %v3069 = vpop.f32.mrb[0].mxu0
    %v3070 = vadd.f32 %v2973, %v3069
    %v3071 = vpop.f32.mrb[0].mxu0
    %3072 = vmatprep.mubr.bf16.mxu0 0
    %3073 = vmatmul.mubr.bf16.gmra.mrb[0].mxu0 %v2006
    %v3074 = vpop.f32.mrb[0].mxu0
    %v3075 = vadd.f32 %v2978, %v3074
    %v3076 = vpop.f32.mrb[0].mxu0
    %v3077 = vpop.f32.mrb[0].mxu0
    %v3078 = vadd.f32 %v2981, %v3077
    %v3079 = vpop.f32.mrb[0].mxu0
    %3080 = vmatprep.mubr.bf16.mxu0 0
    %3081 = vmatmul.mubr.bf16.gmra.mrb[0].mxu0 %v2015
    %v3082 = vpop.f32.mrb[0].mxu0
    %v3083 = vadd.f32 %v2986, %v3082
    %v3084 = vpop.f32.mrb[0].mxu0
    %v3085 = vpop.f32.mrb[0].mxu0
    %v3086 = vadd.f32 %v2989, %v3085
    %v3087 = vpop.f32.mrb[0].mxu0
    %3088 = vmatprep.mubr.bf16.mxu0 0
    %3089 = vmatmul.mubr.bf16.gmra.mrb[0].mxu0 %v2024
    %v3090 = vpop.f32.mrb[0].mxu0
    %v3091 = vadd.f32 %v2994, %v3090
    %v3092 = vpop.f32.mrb[0].mxu0
    %v3093 = vpop.f32.mrb[0].mxu0
    %v3094 = vadd.f32 %v2997, %v3093
    %v3095 = vpop.f32.mrb[0].mxu0
    %3096 = vmatprep.mubr.bf16.mxu0 0
    %3097 = vmatmul.mubr.bf16.gmra.mrb[0].mxu0 %v2033
    %v3098 = vpop.f32.mrb[0].mxu0
    %v3099 = vadd.f32 %v3002, %v3098
    %v3100 = vpop.f32.mrb[0].mxu0
    %v3101 = vpop.f32.mrb[0].mxu0
    %v3102 = vadd.f32 %v3005, %v3101
    %v3103 = vpop.f32.mrb[0].mxu0
    %3104 = vmatprep.mubr.bf16.mxu0 0
    %3105 = vmatmul.mubr.bf16.gmra.mrb[0].mxu0 %v2042
    %v3106 = vpop.f32.mrb[0].mxu0
    %v3107 = vadd.f32 %v3010, %v3106
    %v3108 = vpop.f32.mrb[0].mxu0
    %v3109 = vpop.f32.mrb[0].mxu0
    %v3110 = vadd.f32 %v3013, %v3109
    %v3111 = vpop.f32.mrb[0].mxu0
    %3112 = vmatprep.mubr.bf16.mxu0 0
    %3113 = vmatmul.mubr.bf16.gmra.mrb[0].mxu0 %v2051
    %v3114 = vpop.f32.mrb[0].mxu0
    %v3115 = vadd.f32 %v3018, %v3114
    %v3116 = vpop.f32.mrb[0].mxu0
    %v3117 = vpop.f32.mrb[0].mxu0
    %v3118 = vadd.f32 %v3021, %v3117
    %v3119 = vpop.f32.mrb[0].mxu0
    %3120 = vmatprep.mubr.bf16.mxu0 0
    %3121 = vmatmul.mubr.bf16.gmra.mrb[0].mxu0 %v2060
    %v3122 = vpop.f32.mrb[0].mxu0
    %v3123 = vadd.f32 %v3026, %v3122
    %v3124 = vpop.f32.mrb[0].mxu0
    %v3125 = vpop.f32.mrb[0].mxu0
    %v3126 = vadd.f32 %v3029, %v3125
    %v3127 = vpop.f32.mrb[0].mxu0
    %3128 = vdwg.mxu0
    %v3129 = vmax.f32 %v3067, 0.0
    %v3130 = vmax.f32 %v3070, 0.0
    %v3131 = vmax.f32 %v3075, 0.0
    %v3132 = vmax.f32 %v3078, 0.0
    %v3133 = vmax.f32 %v3083, 0.0
    %v3134 = vmax.f32 %v3086, 0.0
    %v3135 = vmax.f32 %v3091, 0.0
    %v3136 = vmax.f32 %v3094, 0.0
    %v3137 = vmax.f32 %v3099, 0.0
    %v3138 = vmax.f32 %v3102, 0.0
    %v3139 = vmax.f32 %v3107, 0.0
    %v3140 = vmax.f32 %v3110, 0.0
    %v3141 = vmax.f32 %v3115, 0.0
    %v3142 = vmax.f32 %v3118, 0.0
    %v3143 = vmax.f32 %v3123, 0.0
    %v3144 = vmax.f32 %v3126, 0.0
    %v3145 = vadd.f32 %v3129, %v3130
    %v3146 = vadd.f32 %v3145, %v3131
    %v3147 = vadd.f32 %v3146, %v3132
    %v3148 = vadd.f32 %v3147, %v3133
    %v3149 = vadd.f32 %v3148, %v3134
    %v3150 = vadd.f32 %v3149, %v3135
    %v3151 = vadd.f32 %v3150, %v3136
    %v3152 = vadd.f32 %v3151, %v3137
    %v3153 = vadd.f32 %v3152, %v3138
    %v3154 = vadd.f32 %v3153, %v3139
    %v3155 = vadd.f32 %v3154, %v3140
    %v3156 = vadd.f32 %v3155, %v3141
    %v3157 = vadd.f32 %v3156, %v3142
    %v3158 = vadd.f32 %v3157, %v3143
    %v3159 = vadd.f32 %v3158, %v3144
    %v3160 = vrot.slane %v3159, 4
    %v3161 = vadd.f32 %v3159, %v3160
    %v3162 = vrot.slane %v3161, 2
    %v3163 = vadd.f32 %v3161, %v3162
    %v3164 = vrot.slane %v3163, 1
    %v3165 = vadd.f32 %v3163, %v3164
    %v3166 = vrcp.pop 128.0
    %v3167 = vmul.f32 %v3165, %v3166
    %v3168 = vsub.f32 %v3129, %v3167
    %v3169 = vsub.f32 %v3130, %v3167
    %v3170 = vsub.f32 %v3131, %v3167
    %v3171 = vsub.f32 %v3132, %v3167
    %v3172 = vsub.f32 %v3133, %v3167
    %v3173 = vsub.f32 %v3134, %v3167
    %v3174 = vsub.f32 %v3135, %v3167
    %v3175 = vsub.f32 %v3136, %v3167
    %v3176 = vsub.f32 %v3137, %v3167
    %v3177 = vsub.f32 %v3138, %v3167
    %v3178 = vsub.f32 %v3139, %v3167
    %v3179 = vsub.f32 %v3140, %v3167
    %v3180 = vsub.f32 %v3141, %v3167
    %v3181 = vsub.f32 %v3142, %v3167
    %v3182 = vsub.f32 %v3143, %v3167
    %v3183 = vsub.f32 %v3144, %v3167
    %v3184 = vmul.f32 %v3168, %v3168
    %v3185 = vmul.f32 %v3169, %v3169
    %v3186 = vmul.f32 %v3170, %v3170
    %v3187 = vmul.f32 %v3171, %v3171
    %v3188 = vmul.f32 %v3172, %v3172
    %v3189 = vmul.f32 %v3173, %v3173
    %v3190 = vmul.f32 %v3174, %v3174
    %v3191 = vmul.f32 %v3175, %v3175
    %v3192 = vmul.f32 %v3176, %v3176
    %v3193 = vmul.f32 %v3177, %v3177
    %v3194 = vmul.f32 %v3178, %v3178
    %v3195 = vmul.f32 %v3179, %v3179
    %v3196 = vmul.f32 %v3180, %v3180
    %v3197 = vmul.f32 %v3181, %v3181
    %v3198 = vmul.f32 %v3182, %v3182
    %v3199 = vmul.f32 %v3183, %v3183
    %v3200 = vadd.f32 %v3184, %v3185
    %v3201 = vadd.f32 %v3200, %v3186
    %v3202 = vadd.f32 %v3201, %v3187
    %v3203 = vadd.f32 %v3202, %v3188
    %v3204 = vadd.f32 %v3203, %v3189
    %v3205 = vadd.f32 %v3204, %v3190
    %v3206 = vadd.f32 %v3205, %v3191
    %v3207 = vadd.f32 %v3206, %v3192
    %v3208 = vadd.f32 %v3207, %v3193
    %v3209 = vadd.f32 %v3208, %v3194
    %v3210 = vadd.f32 %v3209, %v3195
    %v3211 = vadd.f32 %v3210, %v3196
    %v3212 = vadd.f32 %v3211, %v3197
    %v3213 = vadd.f32 %v3212, %v3198
    %v3214 = vadd.f32 %v3213, %v3199
    %v3215 = vrot.slane %v3214, 4
    %v3216 = vadd.f32 %v3214, %v3215
    %v3217 = vrot.slane %v3216, 2
    %v3218 = vadd.f32 %v3216, %v3217
    %v3219 = vrot.slane %v3218, 1
    %v3220 = vadd.f32 %v3218, %v3219
    %v3221 = vmul.f32 %v3220, %v3166
    %v3222 = vadd.f32 %v3221, 1e-05
    %v3223 = vrsqrt.pop %v3222
    %v3224 = vmul.f32 %v3168, %v3223
    %v3225 = vmul.f32 %v3169, %v3223
    %v3226 = vmul.f32 %v3170, %v3223
    %v3227 = vmul.f32 %v3171, %v3223
    %v3228 = vmul.f32 %v3172, %v3223
    %v3229 = vmul.f32 %v3173, %v3223
    %v3230 = vmul.f32 %v3174, %v3223
    %v3231 = vmul.f32 %v3175, %v3223
    %v3232 = vmul.f32 %v3176, %v3223
    %v3233 = vmul.f32 %v3177, %v3223
    %v3234 = vmul.f32 %v3178, %v3223
    %v3235 = vmul.f32 %v3179, %v3223
    %v3236 = vmul.f32 %v3180, %v3223
    %v3237 = vmul.f32 %v3181, %v3223
    %v3238 = vmul.f32 %v3182, %v3223
    %v3239 = vmul.f32 %v3183, %v3223
    %v3240 = vpack.c.bf16 %v3224, %v3224
    %v3241 = vpack.c.bf16 %v3225, %v3225
    %v3242 = vpack.c.bf16 %v3226, %v3226
    %v3243 = vpack.c.bf16 %v3227, %v3227
    %v3244 = vpack.c.bf16 %v3228, %v3228
    %v3245 = vpack.c.bf16 %v3229, %v3229
    %v3246 = vpack.c.bf16 %v3230, %v3230
    %v3247 = vpack.c.bf16 %v3231, %v3231
    %v3248 = vpack.c.bf16 %v3232, %v3232
    %v3249 = vpack.c.bf16 %v3233, %v3233
    %v3250 = vpack.c.bf16 %v3234, %v3234
    %v3251 = vpack.c.bf16 %v3235, %v3235
    %v3252 = vpack.c.bf16 %v3236, %v3236
    %v3253 = vpack.c.bf16 %v3237, %v3237
    %v3254 = vpack.c.bf16 %v3238, %v3238
    %v3255 = vpack.c.bf16 %v3239, %v3239
    %v3272 = vunpack.c.l.b16 %v3240
    %v3273 = vunpack.c.l.b16 %v3241
    %v3274 = vunpack.c.l.b16 %v3242
    %v3275 = vunpack.c.l.b16 %v3243
    %v3276 = vunpack.c.l.b16 %v3244
    %v3277 = vunpack.c.l.b16 %v3245
    %v3278 = vunpack.c.l.b16 %v3246
    %v3279 = vunpack.c.l.b16 %v3247
    %v3280 = vunpack.c.l.b16 %v3248
    %v3281 = vunpack.c.l.b16 %v3249
    %v3282 = vunpack.c.l.b16 %v3250
    %v3283 = vunpack.c.l.b16 %v3251
    %v3284 = vunpack.c.l.b16 %v3252
    %v3285 = vunpack.c.l.b16 %v3253
    %v3286 = vunpack.c.l.b16 %v3254
    %v3287 = vunpack.c.l.b16 %v3255
    %v3288 = vpack.c.b16 %v3272, %v3272
    %v3289 = vpack.c.b16 %v3273, %v3273
    %v3290 = vpack.c.b16 %v3274, %v3274
    %v3291 = vpack.c.b16 %v3275, %v3275
    %v3292 = vpack.c.b16 %v3276, %v3276
    %v3293 = vpack.c.b16 %v3277, %v3277
    %v3294 = vpack.c.b16 %v3278, %v3278
    %v3295 = vpack.c.b16 %v3279, %v3279
    %v3296 = vpack.c.b16 %v3280, %v3280
    %v3297 = vpack.c.b16 %v3281, %v3281
    %v3298 = vpack.c.b16 %v3282, %v3282
    %v3299 = vpack.c.b16 %v3283, %v3283
    %v3300 = vpack.c.b16 %v3284, %v3284
    %v3301 = vpack.c.b16 %v3285, %v3285
    %v3302 = vpack.c.b16 %v3286, %v3286
    %v3303 = vpack.c.b16 %v3287, %v3287
    %v3305 = vshrl.u32 %v3288, 16
    %v3307 = vrot.slane %v3305, 7
    %v3308 = vshll.u32 %v3288, 16
    %v3310 = vor.u32 %v3307, %v3308
    %v3311 = vrot.slane %v3307, 4
    %v3313 = vshrl.u32 %v3289, 16
    %v3315 = vrot.slane %v3313, 7
    %v3316 = vshll.u32 %v3289, 16
    %v3318 = vor.u32 %v3315, %v3316
    %v3319 = vrot.slane %v3315, 4
    %v3321 = vshrl.u32 %v3290, 16
    %v3323 = vrot.slane %v3321, 7
    %v3324 = vshll.u32 %v3290, 16
    %v3326 = vor.u32 %v3323, %v3324
    %v3327 = vrot.slane %v3323, 4
    %v3329 = vshrl.u32 %v3291, 16
    %v3331 = vrot.slane %v3329, 7
    %v3332 = vshll.u32 %v3291, 16
    %v3334 = vor.u32 %v3331, %v3332
    %v3335 = vrot.slane %v3331, 4
    %v3337 = vshrl.u32 %v3292, 16
    %v3339 = vrot.slane %v3337, 7
    %v3340 = vshll.u32 %v3292, 16
    %v3342 = vor.u32 %v3339, %v3340
    %v3343 = vrot.slane %v3339, 4
    %v3345 = vshrl.u32 %v3293, 16
    %v3347 = vrot.slane %v3345, 7
    %v3348 = vshll.u32 %v3293, 16
    %v3350 = vor.u32 %v3347, %v3348
    %v3351 = vrot.slane %v3347, 4
    %v3353 = vshrl.u32 %v3294, 16
    %v3355 = vrot.slane %v3353, 7
    %v3356 = vshll.u32 %v3294, 16
    %v3358 = vor.u32 %v3355, %v3356
    %v3359 = vrot.slane %v3355, 4
    %v3361 = vshrl.u32 %v3295, 16
    %v3363 = vrot.slane %v3361, 7
    %v3364 = vshll.u32 %v3295, 16
    %v3366 = vor.u32 %v3363, %v3364
    %v3367 = vrot.slane %v3363, 4
    %v3369 = vshrl.u32 %v3296, 16
    %v3371 = vrot.slane %v3369, 7
    %v3372 = vshll.u32 %v3296, 16
    %v3374 = vor.u32 %v3371, %v3372
    %v3375 = vrot.slane %v3371, 4
    %v3377 = vshrl.u32 %v3297, 16
    %v3379 = vrot.slane %v3377, 7
    %v3380 = vshll.u32 %v3297, 16
    %v3382 = vor.u32 %v3379, %v3380
    %v3383 = vrot.slane %v3379, 4
    %v3385 = vshrl.u32 %v3298, 16
    %v3387 = vrot.slane %v3385, 7
    %v3388 = vshll.u32 %v3298, 16
    %v3390 = vor.u32 %v3387, %v3388
    %v3391 = vrot.slane %v3387, 4
    %v3393 = vshrl.u32 %v3299, 16
    %v3395 = vrot.slane %v3393, 7
    %v3396 = vshll.u32 %v3299, 16
    %v3398 = vor.u32 %v3395, %v3396
    %v3399 = vrot.slane %v3395, 4
    %v3401 = vshrl.u32 %v3300, 16
    %v3403 = vrot.slane %v3401, 7
    %v3404 = vshll.u32 %v3300, 16
    %v3406 = vor.u32 %v3403, %v3404
    %v3407 = vrot.slane %v3403, 4
    %v3409 = vshrl.u32 %v3301, 16
    %v3411 = vrot.slane %v3409, 7
    %v3412 = vshll.u32 %v3301, 16
    %v3414 = vor.u32 %v3411, %v3412
    %v3415 = vrot.slane %v3411, 4
    %v3417 = vshrl.u32 %v3302, 16
    %v3419 = vrot.slane %v3417, 7
    %v3420 = vshll.u32 %v3302, 16
    %v3422 = vor.u32 %v3419, %v3420
    %v3423 = vrot.slane %v3419, 4
    %v3425 = vshrl.u32 %v3303, 16
    %v3427 = vrot.slane %v3425, 7
    %v3428 = vshll.u32 %v3303, 16
    %v3430 = vor.u32 %v3427, %v3428
    %v3431 = vrot.slane %v3427, 4
    %v3464 = vld [vmem:[%s271] sm:$0xf]
    %v3465 = vsel %vm274, %v3310, %v3464
    %3466 = vst [vmem:[%s271] sm:$0xf] %v3465
    %v3467 = vld [vmem:[%s271 + $0x4] sm:$0x1]
    %v3468 = vsel %vm280, %v3311, %v3467
    %3469 = vst [vmem:[%s271 + $0x4] sm:$0x1] %v3468
    %v3470 = vld [vmem:[%s271 + $0x8] sm:$0xf]
    %v3471 = vsel %vm274, %v3318, %v3470
    %3472 = vst [vmem:[%s271 + $0x8] sm:$0xf] %v3471
    %v3473 = vld [vmem:[%s271 + $0xc] sm:$0x1]
    %v3474 = vsel %vm280, %v3319, %v3473
    %3475 = vst [vmem:[%s271 + $0xc] sm:$0x1] %v3474
    %v3476 = vld [vmem:[%s271 + $0x10] sm:$0xf]
    %v3477 = vsel %vm274, %v3326, %v3476
    %3478 = vst [vmem:[%s271 + $0x10] sm:$0xf] %v3477
    %v3479 = vld [vmem:[%s271 + $0x14] sm:$0x1]
    %v3480 = vsel %vm280, %v3327, %v3479
    %3481 = vst [vmem:[%s271 + $0x14] sm:$0x1] %v3480
    %v3482 = vld [vmem:[%s271 + $0x18] sm:$0xf]
    %v3483 = vsel %vm274, %v3334, %v3482
    %3484 = vst [vmem:[%s271 + $0x18] sm:$0xf] %v3483
    %v3485 = vld [vmem:[%s271 + $0x1c] sm:$0x1]
    %v3486 = vsel %vm280, %v3335, %v3485
    %3487 = vst [vmem:[%s271 + $0x1c] sm:$0x1] %v3486
    %v3488 = vld [vmem:[%s271 + $0x20] sm:$0xf]
    %v3489 = vsel %vm274, %v3342, %v3488
    %3490 = vst [vmem:[%s271 + $0x20] sm:$0xf] %v3489
    %v3491 = vld [vmem:[%s271 + $0x24] sm:$0x1]
    %v3492 = vsel %vm280, %v3343, %v3491
    %3493 = vst [vmem:[%s271 + $0x24] sm:$0x1] %v3492
    %v3494 = vld [vmem:[%s271 + $0x28] sm:$0xf]
    %v3495 = vsel %vm274, %v3350, %v3494
    %3496 = vst [vmem:[%s271 + $0x28] sm:$0xf] %v3495
    %v3497 = vld [vmem:[%s271 + $0x2c] sm:$0x1]
    %v3498 = vsel %vm280, %v3351, %v3497
    %3499 = vst [vmem:[%s271 + $0x2c] sm:$0x1] %v3498
    %v3500 = vld [vmem:[%s271 + $0x30] sm:$0xf]
    %v3501 = vsel %vm274, %v3358, %v3500
    %3502 = vst [vmem:[%s271 + $0x30] sm:$0xf] %v3501
    %v3503 = vld [vmem:[%s271 + $0x34] sm:$0x1]
    %v3504 = vsel %vm280, %v3359, %v3503
    %3505 = vst [vmem:[%s271 + $0x34] sm:$0x1] %v3504
    %v3506 = vld [vmem:[%s271 + $0x38] sm:$0xf]
    %v3507 = vsel %vm274, %v3366, %v3506
    %3508 = vst [vmem:[%s271 + $0x38] sm:$0xf] %v3507
    %v3509 = vld [vmem:[%s271 + $0x3c] sm:$0x1]
    %v3510 = vsel %vm280, %v3367, %v3509
    %3511 = vst [vmem:[%s271 + $0x3c] sm:$0x1] %v3510
    %v3512 = vld [vmem:[%s271 + $0x50] sm:$0xf]
    %v3513 = vsel %vm274, %v3374, %v3512
    %3514 = vst [vmem:[%s271 + $0x50] sm:$0xf] %v3513
    %v3515 = vld [vmem:[%s271 + $0x54] sm:$0x1]
    %v3516 = vsel %vm280, %v3375, %v3515
    %3517 = vst [vmem:[%s271 + $0x54] sm:$0x1] %v3516
    %v3518 = vld [vmem:[%s271 + $0x58] sm:$0xf]
    %v3519 = vsel %vm274, %v3382, %v3518
    %3520 = vst [vmem:[%s271 + $0x58] sm:$0xf] %v3519
    %v3521 = vld [vmem:[%s271 + $0x5c] sm:$0x1]
    %v3522 = vsel %vm280, %v3383, %v3521
    %3523 = vst [vmem:[%s271 + $0x5c] sm:$0x1] %v3522
    %v3524 = vld [vmem:[%s271 + $0x60] sm:$0xf]
    %v3525 = vsel %vm274, %v3390, %v3524
    %3526 = vst [vmem:[%s271 + $0x60] sm:$0xf] %v3525
    %v3527 = vld [vmem:[%s271 + $0x64] sm:$0x1]
    %v3528 = vsel %vm280, %v3391, %v3527
    %3529 = vst [vmem:[%s271 + $0x64] sm:$0x1] %v3528
    %v3530 = vld [vmem:[%s271 + $0x68] sm:$0xf]
    %v3531 = vsel %vm274, %v3398, %v3530
    %3532 = vst [vmem:[%s271 + $0x68] sm:$0xf] %v3531
    %v3533 = vld [vmem:[%s271 + $0x6c] sm:$0x1]
    %v3534 = vsel %vm280, %v3399, %v3533
    %3535 = vst [vmem:[%s271 + $0x6c] sm:$0x1] %v3534
    %v3536 = vld [vmem:[%s271 + $0x70] sm:$0xf]
    %v3537 = vsel %vm274, %v3406, %v3536
    %3538 = vst [vmem:[%s271 + $0x70] sm:$0xf] %v3537
    %v3539 = vld [vmem:[%s271 + $0x74] sm:$0x1]
    %v3540 = vsel %vm280, %v3407, %v3539
    %3541 = vst [vmem:[%s271 + $0x74] sm:$0x1] %v3540
    %v3542 = vld [vmem:[%s271 + $0x78] sm:$0xf]
    %v3543 = vsel %vm274, %v3414, %v3542
    %3544 = vst [vmem:[%s271 + $0x78] sm:$0xf] %v3543
    %v3545 = vld [vmem:[%s271 + $0x7c] sm:$0x1]
    %v3546 = vsel %vm280, %v3415, %v3545
    %3547 = vst [vmem:[%s271 + $0x7c] sm:$0x1] %v3546
    %v3548 = vld [vmem:[%s271 + $0x80] sm:$0xf]
    %v3549 = vsel %vm274, %v3422, %v3548
    %3550 = vst [vmem:[%s271 + $0x80] sm:$0xf] %v3549
    %v3551 = vld [vmem:[%s271 + $0x84] sm:$0x1]
    %v3552 = vsel %vm280, %v3423, %v3551
    %3553 = vst [vmem:[%s271 + $0x84] sm:$0x1] %v3552
    %v3554 = vld [vmem:[%s271 + $0x88] sm:$0xf]
    %v3555 = vsel %vm274, %v3430, %v3554
    %3556 = vst [vmem:[%s271 + $0x88] sm:$0xf] %v3555
    %v3557 = vld [vmem:[%s271 + $0x8c] sm:$0x1]
    %v3558 = vsel %vm280, %v3431, %v3557
    %3559 = vst [vmem:[%s271 + $0x8c] sm:$0x1] %v3558
    %v3560 = vld [vmem:[#allocation3] sm:$0xf]
    %v3561 = vld [vmem:[#allocation3 + $0x8] sm:$0xf]
    %v3562 = vld [vmem:[#allocation3 + $0x10] sm:$0xf]
    %v3563 = vld [vmem:[#allocation3 + $0x18] sm:$0xf]
    %v3564 = vld [vmem:[#allocation3 + $0x20] sm:$0xf]
    %v3565 = vld [vmem:[#allocation3 + $0x28] sm:$0xf]
    %v3566 = vld [vmem:[#allocation3 + $0x30] sm:$0xf]
    %v3567 = vld [vmem:[#allocation3 + $0x38] sm:$0xf]
    %v3568 = vld [vmem:[#allocation3 + $0x50] sm:$0xf]
    %v3569 = vld [vmem:[#allocation3 + $0x58] sm:$0xf]
    %v3570 = vld [vmem:[#allocation3 + $0x60] sm:$0xf]
    %v3571 = vld [vmem:[#allocation3 + $0x68] sm:$0xf]
    %v3572 = vld [vmem:[#allocation3 + $0x70] sm:$0xf]
    %v3573 = vld [vmem:[#allocation3 + $0x78] sm:$0xf]
    %v3574 = vld [vmem:[#allocation3 + $0x80] sm:$0xf]
    %v3575 = vld [vmem:[#allocation3 + $0x88] sm:$0xf]
    %v3592 = vunpack.c.l.b16 %v3560
    %v3593 = vunpack.c.l.b16 %v3561
    %v3594 = vunpack.c.l.b16 %v3562
    %v3595 = vunpack.c.l.b16 %v3563
    %v3596 = vunpack.c.l.b16 %v3564
    %v3597 = vunpack.c.l.b16 %v3565
    %v3598 = vunpack.c.l.b16 %v3566
    %v3599 = vunpack.c.l.b16 %v3567
    %v3600 = vunpack.c.l.b16 %v3568
    %v3601 = vunpack.c.l.b16 %v3569
    %v3602 = vunpack.c.l.b16 %v3570
    %v3603 = vunpack.c.l.b16 %v3571
    %v3604 = vunpack.c.l.b16 %v3572
    %v3605 = vunpack.c.l.b16 %v3573
    %v3606 = vunpack.c.l.b16 %v3574
    %v3607 = vunpack.c.l.b16 %v3575
    %v3608 = vpack.c.b16 %v3593, %v3592
    %v3609 = vpack.c.b16 %v3595, %v3594
    %v3610 = vpack.c.b16 %v3597, %v3596
    %v3611 = vpack.c.b16 %v3599, %v3598
    %v3612 = vpack.c.b16 %v3601, %v3600
    %v3613 = vpack.c.b16 %v3603, %v3602
    %v3614 = vpack.c.b16 %v3605, %v3604
    %v3615 = vpack.c.b16 %v3607, %v3606
    %3624 = vst [vmem:[#allocation2] sm:$0xff] %v3608
    %3625 = vst [vmem:[#allocation2 + $0x48] sm:$0xff] %v3609
    %3626 = vst [vmem:[#allocation2 + $0x90] sm:$0xff] %v3610
    %3627 = vst [vmem:[#allocation2 + $0xd8] sm:$0xff] %v3611
    %3628 = vst [vmem:[#allocation2 + $0x120] sm:$0xff] %v3612
    %3629 = vst [vmem:[#allocation2 + $0x168] sm:$0xff] %v3613
    %3630 = vst [vmem:[#allocation2 + $0x1b0] sm:$0xff] %v3614
    %3631 = vst [vmem:[#allocation2 + $0x1f8] sm:$0xff] %v3615
    %v3632 = vld [vmem:[#allocation3] sm:$0xf]
    %v3633 = vld [vmem:[#allocation3 + $0x4] sm:$0x1]
    %v3634 = vld [vmem:[#allocation3 + $0x8] sm:$0xf]
    %v3635 = vld [vmem:[#allocation3 + $0xc] sm:$0x1]
    %v3636 = vld [vmem:[#allocation3 + $0x10] sm:$0xf]
    %v3637 = vld [vmem:[#allocation3 + $0x14] sm:$0x1]
    %v3638 = vld [vmem:[#allocation3 + $0x18] sm:$0xf]
    %v3639 = vld [vmem:[#allocation3 + $0x1c] sm:$0x1]
    %v3640 = vld [vmem:[#allocation3 + $0x20] sm:$0xf]
    %v3641 = vld [vmem:[#allocation3 + $0x24] sm:$0x1]
    %v3642 = vld [vmem:[#allocation3 + $0x28] sm:$0xf]
    %v3643 = vld [vmem:[#allocation3 + $0x2c] sm:$0x1]
    %v3644 = vld [vmem:[#allocation3 + $0x30] sm:$0xf]
    %v3645 = vld [vmem:[#allocation3 + $0x34] sm:$0x1]
    %v3646 = vld [vmem:[#allocation3 + $0x38] sm:$0xf]
    %v3647 = vld [vmem:[#allocation3 + $0x3c] sm:$0x1]
    %v3648 = vld [vmem:[#allocation3 + $0x50] sm:$0xf]
    %v3649 = vld [vmem:[#allocation3 + $0x54] sm:$0x1]
    %v3650 = vld [vmem:[#allocation3 + $0x58] sm:$0xf]
    %v3651 = vld [vmem:[#allocation3 + $0x5c] sm:$0x1]
    %v3652 = vld [vmem:[#allocation3 + $0x60] sm:$0xf]
    %v3653 = vld [vmem:[#allocation3 + $0x64] sm:$0x1]
    %v3654 = vld [vmem:[#allocation3 + $0x68] sm:$0xf]
    %v3655 = vld [vmem:[#allocation3 + $0x6c] sm:$0x1]
    %v3656 = vld [vmem:[#allocation3 + $0x70] sm:$0xf]
    %v3657 = vld [vmem:[#allocation3 + $0x74] sm:$0x1]
    %v3658 = vld [vmem:[#allocation3 + $0x78] sm:$0xf]
    %v3659 = vld [vmem:[#allocation3 + $0x7c] sm:$0x1]
    %v3660 = vld [vmem:[#allocation3 + $0x80] sm:$0xf]
    %v3661 = vld [vmem:[#allocation3 + $0x84] sm:$0x1]
    %v3662 = vld [vmem:[#allocation3 + $0x88] sm:$0xf]
    %v3663 = vld [vmem:[#allocation3 + $0x8c] sm:$0x1]
    %v3665 = vshrl.u32 %v3632, 16
    %v3667 = vrot.slane %v3665, 4
    %v3668 = vshll.u32 %v3632, 16
    %v3670 = vrot.slane %v3668, 5
    %v3671 = vor.u32 %v3667, %v3670
    %v3672 = vrot.slane %v3671, 4
    %v3674 = vshll.u32 %v3633, 16
    %v3676 = vrot.slane %v3674, 5
    %v3677 = vsel %vm480, %v3672, %v3676
    %v3679 = vshrl.u32 %v3634, 16
    %v3681 = vrot.slane %v3679, 4
    %v3682 = vshll.u32 %v3634, 16
    %v3684 = vrot.slane %v3682, 5
    %v3685 = vor.u32 %v3681, %v3684
    %v3686 = vrot.slane %v3685, 4
    %v3688 = vshll.u32 %v3635, 16
    %v3690 = vrot.slane %v3688, 5
    %v3691 = vsel %vm480, %v3686, %v3690
    %v3693 = vshrl.u32 %v3636, 16
    %v3695 = vrot.slane %v3693, 4
    %v3696 = vshll.u32 %v3636, 16
    %v3698 = vrot.slane %v3696, 5
    %v3699 = vor.u32 %v3695, %v3698
    %v3700 = vrot.slane %v3699, 4
    %v3702 = vshll.u32 %v3637, 16
    %v3704 = vrot.slane %v3702, 5
    %v3705 = vsel %vm480, %v3700, %v3704
    %v3707 = vshrl.u32 %v3638, 16
    %v3709 = vrot.slane %v3707, 4
    %v3710 = vshll.u32 %v3638, 16
    %v3712 = vrot.slane %v3710, 5
    %v3713 = vor.u32 %v3709, %v3712
    %v3714 = vrot.slane %v3713, 4
    %v3716 = vshll.u32 %v3639, 16
    %v3718 = vrot.slane %v3716, 5
    %v3719 = vsel %vm480, %v3714, %v3718
    %v3721 = vshrl.u32 %v3640, 16
    %v3723 = vrot.slane %v3721, 4
    %v3724 = vshll.u32 %v3640, 16
    %v3726 = vrot.slane %v3724, 5
    %v3727 = vor.u32 %v3723, %v3726
    %v3728 = vrot.slane %v3727, 4
    %v3730 = vshll.u32 %v3641, 16
    %v3732 = vrot.slane %v3730, 5
    %v3733 = vsel %vm480, %v3728, %v3732
    %v3735 = vshrl.u32 %v3642, 16
    %v3737 = vrot.slane %v3735, 4
    %v3738 = vshll.u32 %v3642, 16
    %v3740 = vrot.slane %v3738, 5
    %v3741 = vor.u32 %v3737, %v3740
    %v3742 = vrot.slane %v3741, 4
    %v3744 = vshll.u32 %v3643, 16
    %v3746 = vrot.slane %v3744, 5
    %v3747 = vsel %vm480, %v3742, %v3746
    %v3749 = vshrl.u32 %v3644, 16
    %v3751 = vrot.slane %v3749, 4
    %v3752 = vshll.u32 %v3644, 16
    %v3754 = vrot.slane %v3752, 5
    %v3755 = vor.u32 %v3751, %v3754
    %v3756 = vrot.slane %v3755, 4
    %v3758 = vshll.u32 %v3645, 16
    %v3760 = vrot.slane %v3758, 5
    %v3761 = vsel %vm480, %v3756, %v3760
    %v3763 = vshrl.u32 %v3646, 16
    %v3765 = vrot.slane %v3763, 4
    %v3766 = vshll.u32 %v3646, 16
    %v3768 = vrot.slane %v3766, 5
    %v3769 = vor.u32 %v3765, %v3768
    %v3770 = vrot.slane %v3769, 4
    %v3772 = vshll.u32 %v3647, 16
    %v3774 = vrot.slane %v3772, 5
    %v3775 = vsel %vm480, %v3770, %v3774
    %v3777 = vshrl.u32 %v3648, 16
    %v3779 = vrot.slane %v3777, 4
    %v3780 = vshll.u32 %v3648, 16
    %v3782 = vrot.slane %v3780, 5
    %v3783 = vor.u32 %v3779, %v3782
    %v3784 = vrot.slane %v3783, 4
    %v3786 = vshll.u32 %v3649, 16
    %v3788 = vrot.slane %v3786, 5
    %v3789 = vsel %vm480, %v3784, %v3788
    %v3791 = vshrl.u32 %v3650, 16
    %v3793 = vrot.slane %v3791, 4
    %v3794 = vshll.u32 %v3650, 16
    %v3796 = vrot.slane %v3794, 5
    %v3797 = vor.u32 %v3793, %v3796
    %v3798 = vrot.slane %v3797, 4
    %v3800 = vshll.u32 %v3651, 16
    %v3802 = vrot.slane %v3800, 5
    %v3803 = vsel %vm480, %v3798, %v3802
    %v3805 = vshrl.u32 %v3652, 16
    %v3807 = vrot.slane %v3805, 4
    %v3808 = vshll.u32 %v3652, 16
    %v3810 = vrot.slane %v3808, 5
    %v3811 = vor.u32 %v3807, %v3810
    %v3812 = vrot.slane %v3811, 4
    %v3814 = vshll.u32 %v3653, 16
    %v3816 = vrot.slane %v3814, 5
    %v3817 = vsel %vm480, %v3812, %v3816
    %v3819 = vshrl.u32 %v3654, 16
    %v3821 = vrot.slane %v3819, 4
    %v3822 = vshll.u32 %v3654, 16
    %v3824 = vrot.slane %v3822, 5
    %v3825 = vor.u32 %v3821, %v3824
    %v3826 = vrot.slane %v3825, 4
    %v3828 = vshll.u32 %v3655, 16
    %v3830 = vrot.slane %v3828, 5
    %v3831 = vsel %vm480, %v3826, %v3830
    %v3833 = vshrl.u32 %v3656, 16
    %v3835 = vrot.slane %v3833, 4
    %v3836 = vshll.u32 %v3656, 16
    %v3838 = vrot.slane %v3836, 5
    %v3839 = vor.u32 %v3835, %v3838
    %v3840 = vrot.slane %v3839, 4
    %v3842 = vshll.u32 %v3657, 16
    %v3844 = vrot.slane %v3842, 5
    %v3845 = vsel %vm480, %v3840, %v3844
    %v3847 = vshrl.u32 %v3658, 16
    %v3849 = vrot.slane %v3847, 4
    %v3850 = vshll.u32 %v3658, 16
    %v3852 = vrot.slane %v3850, 5
    %v3853 = vor.u32 %v3849, %v3852
    %v3854 = vrot.slane %v3853, 4
    %v3856 = vshll.u32 %v3659, 16
    %v3858 = vrot.slane %v3856, 5
    %v3859 = vsel %vm480, %v3854, %v3858
    %v3861 = vshrl.u32 %v3660, 16
    %v3863 = vrot.slane %v3861, 4
    %v3864 = vshll.u32 %v3660, 16
    %v3866 = vrot.slane %v3864, 5
    %v3867 = vor.u32 %v3863, %v3866
    %v3868 = vrot.slane %v3867, 4
    %v3870 = vshll.u32 %v3661, 16
    %v3872 = vrot.slane %v3870, 5
    %v3873 = vsel %vm480, %v3868, %v3872
    %v3875 = vshrl.u32 %v3662, 16
    %v3877 = vrot.slane %v3875, 4
    %v3878 = vshll.u32 %v3662, 16
    %v3880 = vrot.slane %v3878, 5
    %v3881 = vor.u32 %v3877, %v3880
    %v3882 = vrot.slane %v3881, 4
    %v3884 = vshll.u32 %v3663, 16
    %v3886 = vrot.slane %v3884, 5
    %v3887 = vsel %vm480, %v3882, %v3886
    %v3888 = vunpack.c.l.b16 %v3677
    %v3889 = vunpack.c.l.b16 %v3691
    %v3890 = vunpack.c.l.b16 %v3705
    %v3891 = vunpack.c.l.b16 %v3719
    %v3892 = vunpack.c.l.b16 %v3733
    %v3893 = vunpack.c.l.b16 %v3747
    %v3894 = vunpack.c.l.b16 %v3761
    %v3895 = vunpack.c.l.b16 %v3775
    %v3896 = vunpack.c.l.b16 %v3789
    %v3897 = vunpack.c.l.b16 %v3803
    %v3898 = vunpack.c.l.b16 %v3817
    %v3899 = vunpack.c.l.b16 %v3831
    %v3900 = vunpack.c.l.b16 %v3845
    %v3901 = vunpack.c.l.b16 %v3859
    %v3902 = vunpack.c.l.b16 %v3873
    %v3903 = vunpack.c.l.b16 %v3887
    %v3904 = vpack.c.b16 %v3889, %v3888
    %v3905 = vpack.c.b16 %v3891, %v3890
    %v3906 = vpack.c.b16 %v3893, %v3892
    %v3907 = vpack.c.b16 %v3895, %v3894
    %v3908 = vpack.c.b16 %v3897, %v3896
    %v3909 = vpack.c.b16 %v3899, %v3898
    %v3910 = vpack.c.b16 %v3901, %v3900
    %v3911 = vpack.c.b16 %v3903, %v3902
    %3920 = vst [vmem:[#allocation2 + $0x8] sm:$0xff] %v3904
    %3921 = vst [vmem:[#allocation2 + $0x50] sm:$0xff] %v3905
    %3922 = vst [vmem:[#allocation2 + $0x98] sm:$0xff] %v3906
    %3923 = vst [vmem:[#allocation2 + $0xe0] sm:$0xff] %v3907
    %3924 = vst [vmem:[#allocation2 + $0x128] sm:$0xff] %v3908
    %3925 = vst [vmem:[#allocation2 + $0x170] sm:$0xff] %v3909
    %3926 = vst [vmem:[#allocation2 + $0x1b8] sm:$0xff] %v3910
    %3927 = vst [vmem:[#allocation2 + $0x200] sm:$0xff] %v3911
    %v3928 = vld [vmem:[#allocation3] sm:$0xe]
    %v3929 = vld [vmem:[#allocation3 + $0x4] sm:$0x1]
    %v3930 = vld [vmem:[#allocation3 + $0x8] sm:$0xe]
    %v3931 = vld [vmem:[#allocation3 + $0xc] sm:$0x1]
    %v3932 = vld [vmem:[#allocation3 + $0x10] sm:$0xe]
    %v3933 = vld [vmem:[#allocation3 + $0x14] sm:$0x1]
    %v3934 = vld [vmem:[#allocation3 + $0x18] sm:$0xe]
    %v3935 = vld [vmem:[#allocation3 + $0x1c] sm:$0x1]
    %v3936 = vld [vmem:[#allocation3 + $0x20] sm:$0xe]
    %v3937 = vld [vmem:[#allocation3 + $0x24] sm:$0x1]
    %v3938 = vld [vmem:[#allocation3 + $0x28] sm:$0xe]
    %v3939 = vld [vmem:[#allocation3 + $0x2c] sm:$0x1]
    %v3940 = vld [vmem:[#allocation3 + $0x30] sm:$0xe]
    %v3941 = vld [vmem:[#allocation3 + $0x34] sm:$0x1]
    %v3942 = vld [vmem:[#allocation3 + $0x38] sm:$0xe]
    %v3943 = vld [vmem:[#allocation3 + $0x3c] sm:$0x1]
    %v3944 = vld [vmem:[#allocation3 + $0x50] sm:$0xe]
    %v3945 = vld [vmem:[#allocation3 + $0x54] sm:$0x1]
    %v3946 = vld [vmem:[#allocation3 + $0x58] sm:$0xe]
    %v3947 = vld [vmem:[#allocation3 + $0x5c] sm:$0x1]
    %v3948 = vld [vmem:[#allocation3 + $0x60] sm:$0xe]
    %v3949 = vld [vmem:[#allocation3 + $0x64] sm:$0x1]
    %v3950 = vld [vmem:[#allocation3 + $0x68] sm:$0xe]
    %v3951 = vld [vmem:[#allocation3 + $0x6c] sm:$0x1]
    %v3952 = vld [vmem:[#allocation3 + $0x70] sm:$0xe]
    %v3953 = vld [vmem:[#allocation3 + $0x74] sm:$0x1]
    %v3954 = vld [vmem:[#allocation3 + $0x78] sm:$0xe]
    %v3955 = vld [vmem:[#allocation3 + $0x7c] sm:$0x1]
    %v3956 = vld [vmem:[#allocation3 + $0x80] sm:$0xe]
    %v3957 = vld [vmem:[#allocation3 + $0x84] sm:$0x1]
    %v3958 = vld [vmem:[#allocation3 + $0x88] sm:$0xe]
    %v3959 = vld [vmem:[#allocation3 + $0x8c] sm:$0x1]
    %v3992 = vrot.slane %v3928, 5
    %v3993 = vrot.slane %v3992, 4
    %v3994 = vrot.slane %v3929, 5
    %v3995 = vsel %vm811, %v3993, %v3994
    %v3996 = vrot.slane %v3930, 5
    %v3997 = vrot.slane %v3996, 4
    %v3998 = vrot.slane %v3931, 5
    %v3999 = vsel %vm811, %v3997, %v3998
    %v4000 = vrot.slane %v3932, 5
    %v4001 = vrot.slane %v4000, 4
    %v4002 = vrot.slane %v3933, 5
    %v4003 = vsel %vm811, %v4001, %v4002
    %v4004 = vrot.slane %v3934, 5
    %v4005 = vrot.slane %v4004, 4
    %v4006 = vrot.slane %v3935, 5
    %v4007 = vsel %vm811, %v4005, %v4006
    %v4008 = vrot.slane %v3936, 5
    %v4009 = vrot.slane %v4008, 4
    %v4010 = vrot.slane %v3937, 5
    %v4011 = vsel %vm811, %v4009, %v4010
    %v4012 = vrot.slane %v3938, 5
    %v4013 = vrot.slane %v4012, 4
    %v4014 = vrot.slane %v3939, 5
    %v4015 = vsel %vm811, %v4013, %v4014
    %v4016 = vrot.slane %v3940, 5
    %v4017 = vrot.slane %v4016, 4
    %v4018 = vrot.slane %v3941, 5
    %v4019 = vsel %vm811, %v4017, %v4018
    %v4020 = vrot.slane %v3942, 5
    %v4021 = vrot.slane %v4020, 4
    %v4022 = vrot.slane %v3943, 5
    %v4023 = vsel %vm811, %v4021, %v4022
    %v4024 = vrot.slane %v3944, 5
    %v4025 = vrot.slane %v4024, 4
    %v4026 = vrot.slane %v3945, 5
    %v4027 = vsel %vm811, %v4025, %v4026
    %v4028 = vrot.slane %v3946, 5
    %v4029 = vrot.slane %v4028, 4
    %v4030 = vrot.slane %v3947, 5
    %v4031 = vsel %vm811, %v4029, %v4030
    %v4032 = vrot.slane %v3948, 5
    %v4033 = vrot.slane %v4032, 4
    %v4034 = vrot.slane %v3949, 5
    %v4035 = vsel %vm811, %v4033, %v4034
    %v4036 = vrot.slane %v3950, 5
    %v4037 = vrot.slane %v4036, 4
    %v4038 = vrot.slane %v3951, 5
    %v4039 = vsel %vm811, %v4037, %v4038
    %v4040 = vrot.slane %v3952, 5
    %v4041 = vrot.slane %v4040, 4
    %v4042 = vrot.slane %v3953, 5
    %v4043 = vsel %vm811, %v4041, %v4042
    %v4044 = vrot.slane %v3954, 5
    %v4045 = vrot.slane %v4044, 4
    %v4046 = vrot.slane %v3955, 5
    %v4047 = vsel %vm811, %v4045, %v4046
    %v4048 = vrot.slane %v3956, 5
    %v4049 = vrot.slane %v4048, 4
    %v4050 = vrot.slane %v3957, 5
    %v4051 = vsel %vm811, %v4049, %v4050
    %v4052 = vrot.slane %v3958, 5
    %v4053 = vrot.slane %v4052, 4
    %v4054 = vrot.slane %v3959, 5
    %v4055 = vsel %vm811, %v4053, %v4054
    %v4056 = vunpack.c.l.b16 %v3995
    %v4057 = vunpack.c.l.b16 %v3999
    %v4058 = vunpack.c.l.b16 %v4003
    %v4059 = vunpack.c.l.b16 %v4007
    %v4060 = vunpack.c.l.b16 %v4011
    %v4061 = vunpack.c.l.b16 %v4015
    %v4062 = vunpack.c.l.b16 %v4019
    %v4063 = vunpack.c.l.b16 %v4023
    %v4064 = vunpack.c.l.b16 %v4027
    %v4065 = vunpack.c.l.b16 %v4031
    %v4066 = vunpack.c.l.b16 %v4035
    %v4067 = vunpack.c.l.b16 %v4039
    %v4068 = vunpack.c.l.b16 %v4043
    %v4069 = vunpack.c.l.b16 %v4047
    %v4070 = vunpack.c.l.b16 %v4051
    %v4071 = vunpack.c.l.b16 %v4055
    %v4072 = vpack.c.b16 %v4057, %v4056
    %v4073 = vpack.c.b16 %v4059, %v4058
    %v4074 = vpack.c.b16 %v4061, %v4060
    %v4075 = vpack.c.b16 %v4063, %v4062
    %v4076 = vpack.c.b16 %v4065, %v4064
    %v4077 = vpack.c.b16 %v4067, %v4066
    %v4078 = vpack.c.b16 %v4069, %v4068
    %v4079 = vpack.c.b16 %v4071, %v4070
    %4088 = vst [vmem:[#allocation2 + $0x10] sm:$0xff] %v4072
    %4089 = vst [vmem:[#allocation2 + $0x58] sm:$0xff] %v4073
    %4090 = vst [vmem:[#allocation2 + $0xa0] sm:$0xff] %v4074
    %4091 = vst [vmem:[#allocation2 + $0xe8] sm:$0xff] %v4075
    %4092 = vst [vmem:[#allocation2 + $0x130] sm:$0xff] %v4076
    %4093 = vst [vmem:[#allocation2 + $0x178] sm:$0xff] %v4077
    %4094 = vst [vmem:[#allocation2 + $0x1c0] sm:$0xff] %v4078
    %4095 = vst [vmem:[#allocation2 + $0x208] sm:$0xff] %v4079
    %v4096 = vld [vmem:[%s271] sm:$0xf]
    %v4097 = vld [vmem:[%s271 + $0x8] sm:$0xf]
    %v4098 = vld [vmem:[%s271 + $0x10] sm:$0xf]
    %v4099 = vld [vmem:[%s271 + $0x18] sm:$0xf]
    %v4100 = vld [vmem:[%s271 + $0x20] sm:$0xf]
    %v4101 = vld [vmem:[%s271 + $0x28] sm:$0xf]
    %v4102 = vld [vmem:[%s271 + $0x30] sm:$0xf]
    %v4103 = vld [vmem:[%s271 + $0x38] sm:$0xf]
    %v4104 = vld [vmem:[%s271 + $0x50] sm:$0xf]
    %v4105 = vld [vmem:[%s271 + $0x58] sm:$0xf]
    %v4106 = vld [vmem:[%s271 + $0x60] sm:$0xf]
    %v4107 = vld [vmem:[%s271 + $0x68] sm:$0xf]
    %v4108 = vld [vmem:[%s271 + $0x70] sm:$0xf]
    %v4109 = vld [vmem:[%s271 + $0x78] sm:$0xf]
    %v4110 = vld [vmem:[%s271 + $0x80] sm:$0xf]
    %v4111 = vld [vmem:[%s271 + $0x88] sm:$0xf]
    %v4128 = vunpack.c.l.b16 %v4096
    %v4129 = vunpack.c.l.b16 %v4097
    %v4130 = vunpack.c.l.b16 %v4098
    %v4131 = vunpack.c.l.b16 %v4099
    %v4132 = vunpack.c.l.b16 %v4100
    %v4133 = vunpack.c.l.b16 %v4101
    %v4134 = vunpack.c.l.b16 %v4102
    %v4135 = vunpack.c.l.b16 %v4103
    %v4136 = vunpack.c.l.b16 %v4104
    %v4137 = vunpack.c.l.b16 %v4105
    %v4138 = vunpack.c.l.b16 %v4106
    %v4139 = vunpack.c.l.b16 %v4107
    %v4140 = vunpack.c.l.b16 %v4108
    %v4141 = vunpack.c.l.b16 %v4109
    %v4142 = vunpack.c.l.b16 %v4110
    %v4143 = vunpack.c.l.b16 %v4111
    %v4144 = vpack.c.b16 %v4129, %v4128
    %v4145 = vpack.c.b16 %v4131, %v4130
    %v4146 = vpack.c.b16 %v4133, %v4132
    %v4147 = vpack.c.b16 %v4135, %v4134
    %v4148 = vpack.c.b16 %v4137, %v4136
    %v4149 = vpack.c.b16 %v4139, %v4138
    %v4150 = vpack.c.b16 %v4141, %v4140
    %v4151 = vpack.c.b16 %v4143, %v4142
    %4160 = vst [vmem:[#allocation2 + $0x18] sm:$0xff] %v4144
    %4161 = vst [vmem:[#allocation2 + $0x60] sm:$0xff] %v4145
    %4162 = vst [vmem:[#allocation2 + $0xa8] sm:$0xff] %v4146
    %4163 = vst [vmem:[#allocation2 + $0xf0] sm:$0xff] %v4147
    %4164 = vst [vmem:[#allocation2 + $0x138] sm:$0xff] %v4148
    %4165 = vst [vmem:[#allocation2 + $0x180] sm:$0xff] %v4149
    %4166 = vst [vmem:[#allocation2 + $0x1c8] sm:$0xff] %v4150
    %4167 = vst [vmem:[#allocation2 + $0x210] sm:$0xff] %v4151
    %v4168 = vld [vmem:[%s271] sm:$0xf]
    %v4169 = vld [vmem:[%s271 + $0x4] sm:$0x1]
    %v4170 = vld [vmem:[%s271 + $0x8] sm:$0xf]
    %v4171 = vld [vmem:[%s271 + $0xc] sm:$0x1]
    %v4172 = vld [vmem:[%s271 + $0x10] sm:$0xf]
    %v4173 = vld [vmem:[%s271 + $0x14] sm:$0x1]
    %v4174 = vld [vmem:[%s271 + $0x18] sm:$0xf]
    %v4175 = vld [vmem:[%s271 + $0x1c] sm:$0x1]
    %v4176 = vld [vmem:[%s271 + $0x20] sm:$0xf]
    %v4177 = vld [vmem:[%s271 + $0x24] sm:$0x1]
    %v4178 = vld [vmem:[%s271 + $0x28] sm:$0xf]
    %v4179 = vld [vmem:[%s271 + $0x2c] sm:$0x1]
    %v4180 = vld [vmem:[%s271 + $0x30] sm:$0xf]
    %v4181 = vld [vmem:[%s271 + $0x34] sm:$0x1]
    %v4182 = vld [vmem:[%s271 + $0x38] sm:$0xf]
    %v4183 = vld [vmem:[%s271 + $0x3c] sm:$0x1]
    %v4184 = vld [vmem:[%s271 + $0x50] sm:$0xf]
    %v4185 = vld [vmem:[%s271 + $0x54] sm:$0x1]
    %v4186 = vld [vmem:[%s271 + $0x58] sm:$0xf]
    %v4187 = vld [vmem:[%s271 + $0x5c] sm:$0x1]
    %v4188 = vld [vmem:[%s271 + $0x60] sm:$0xf]
    %v4189 = vld [vmem:[%s271 + $0x64] sm:$0x1]
    %v4190 = vld [vmem:[%s271 + $0x68] sm:$0xf]
    %v4191 = vld [vmem:[%s271 + $0x6c] sm:$0x1]
    %v4192 = vld [vmem:[%s271 + $0x70] sm:$0xf]
    %v4193 = vld [vmem:[%s271 + $0x74] sm:$0x1]
    %v4194 = vld [vmem:[%s271 + $0x78] sm:$0xf]
    %v4195 = vld [vmem:[%s271 + $0x7c] sm:$0x1]
    %v4196 = vld [vmem:[%s271 + $0x80] sm:$0xf]
    %v4197 = vld [vmem:[%s271 + $0x84] sm:$0x1]
    %v4198 = vld [vmem:[%s271 + $0x88] sm:$0xf]
    %v4199 = vld [vmem:[%s271 + $0x8c] sm:$0x1]
    %v4201 = vshrl.u32 %v4168, 16
    %v4203 = vrot.slane %v4201, 4
    %v4204 = vshll.u32 %v4168, 16
    %v4206 = vrot.slane %v4204, 5
    %v4207 = vor.u32 %v4203, %v4206
    %v4208 = vrot.slane %v4207, 4
    %v4210 = vshll.u32 %v4169, 16
    %v4212 = vrot.slane %v4210, 5
    %v4213 = vsel %vm480, %v4208, %v4212
    %v4215 = vshrl.u32 %v4170, 16
    %v4217 = vrot.slane %v4215, 4
    %v4218 = vshll.u32 %v4170, 16
    %v4220 = vrot.slane %v4218, 5
    %v4221 = vor.u32 %v4217, %v4220
    %v4222 = vrot.slane %v4221, 4
    %v4224 = vshll.u32 %v4171, 16
    %v4226 = vrot.slane %v4224, 5
    %v4227 = vsel %vm480, %v4222, %v4226
    %v4229 = vshrl.u32 %v4172, 16
    %v4231 = vrot.slane %v4229, 4
    %v4232 = vshll.u32 %v4172, 16
    %v4234 = vrot.slane %v4232, 5
    %v4235 = vor.u32 %v4231, %v4234
    %v4236 = vrot.slane %v4235, 4
    %v4238 = vshll.u32 %v4173, 16
    %v4240 = vrot.slane %v4238, 5
    %v4241 = vsel %vm480, %v4236, %v4240
    %v4243 = vshrl.u32 %v4174, 16
    %v4245 = vrot.slane %v4243, 4
    %v4246 = vshll.u32 %v4174, 16
    %v4248 = vrot.slane %v4246, 5
    %v4249 = vor.u32 %v4245, %v4248
    %v4250 = vrot.slane %v4249, 4
    %v4252 = vshll.u32 %v4175, 16
    %v4254 = vrot.slane %v4252, 5
    %v4255 = vsel %vm480, %v4250, %v4254
    %v4257 = vshrl.u32 %v4176, 16
    %v4259 = vrot.slane %v4257, 4
    %v4260 = vshll.u32 %v4176, 16
    %v4262 = vrot.slane %v4260, 5
    %v4263 = vor.u32 %v4259, %v4262
    %v4264 = vrot.slane %v4263, 4
    %v4266 = vshll.u32 %v4177, 16
    %v4268 = vrot.slane %v4266, 5
    %v4269 = vsel %vm480, %v4264, %v4268
    %v4271 = vshrl.u32 %v4178, 16
    %v4273 = vrot.slane %v4271, 4
    %v4274 = vshll.u32 %v4178, 16
    %v4276 = vrot.slane %v4274, 5
    %v4277 = vor.u32 %v4273, %v4276
    %v4278 = vrot.slane %v4277, 4
    %v4280 = vshll.u32 %v4179, 16
    %v4282 = vrot.slane %v4280, 5
    %v4283 = vsel %vm480, %v4278, %v4282
    %v4285 = vshrl.u32 %v4180, 16
    %v4287 = vrot.slane %v4285, 4
    %v4288 = vshll.u32 %v4180, 16
    %v4290 = vrot.slane %v4288, 5
    %v4291 = vor.u32 %v4287, %v4290
    %v4292 = vrot.slane %v4291, 4
    %v4294 = vshll.u32 %v4181, 16
    %v4296 = vrot.slane %v4294, 5
    %v4297 = vsel %vm480, %v4292, %v4296
    %v4299 = vshrl.u32 %v4182, 16
    %v4301 = vrot.slane %v4299, 4
    %v4302 = vshll.u32 %v4182, 16
    %v4304 = vrot.slane %v4302, 5
    %v4305 = vor.u32 %v4301, %v4304
    %v4306 = vrot.slane %v4305, 4
    %v4308 = vshll.u32 %v4183, 16
    %v4310 = vrot.slane %v4308, 5
    %v4311 = vsel %vm480, %v4306, %v4310
    %v4313 = vshrl.u32 %v4184, 16
    %v4315 = vrot.slane %v4313, 4
    %v4316 = vshll.u32 %v4184, 16
    %v4318 = vrot.slane %v4316, 5
    %v4319 = vor.u32 %v4315, %v4318
    %v4320 = vrot.slane %v4319, 4
    %v4322 = vshll.u32 %v4185, 16
    %v4324 = vrot.slane %v4322, 5
    %v4325 = vsel %vm480, %v4320, %v4324
    %v4327 = vshrl.u32 %v4186, 16
    %v4329 = vrot.slane %v4327, 4
    %v4330 = vshll.u32 %v4186, 16
    %v4332 = vrot.slane %v4330, 5
    %v4333 = vor.u32 %v4329, %v4332
    %v4334 = vrot.slane %v4333, 4
    %v4336 = vshll.u32 %v4187, 16
    %v4338 = vrot.slane %v4336, 5
    %v4339 = vsel %vm480, %v4334, %v4338
    %v4341 = vshrl.u32 %v4188, 16
    %v4343 = vrot.slane %v4341, 4
    %v4344 = vshll.u32 %v4188, 16
    %v4346 = vrot.slane %v4344, 5
    %v4347 = vor.u32 %v4343, %v4346
    %v4348 = vrot.slane %v4347, 4
    %v4350 = vshll.u32 %v4189, 16
    %v4352 = vrot.slane %v4350, 5
    %v4353 = vsel %vm480, %v4348, %v4352
    %v4355 = vshrl.u32 %v4190, 16
    %v4357 = vrot.slane %v4355, 4
    %v4358 = vshll.u32 %v4190, 16
    %v4360 = vrot.slane %v4358, 5
    %v4361 = vor.u32 %v4357, %v4360
    %v4362 = vrot.slane %v4361, 4
    %v4364 = vshll.u32 %v4191, 16
    %v4366 = vrot.slane %v4364, 5
    %v4367 = vsel %vm480, %v4362, %v4366
    %v4369 = vshrl.u32 %v4192, 16
    %v4371 = vrot.slane %v4369, 4
    %v4372 = vshll.u32 %v4192, 16
    %v4374 = vrot.slane %v4372, 5
    %v4375 = vor.u32 %v4371, %v4374
    %v4376 = vrot.slane %v4375, 4
    %v4378 = vshll.u32 %v4193, 16
    %v4380 = vrot.slane %v4378, 5
    %v4381 = vsel %vm480, %v4376, %v4380
    %v4383 = vshrl.u32 %v4194, 16
    %v4385 = vrot.slane %v4383, 4
    %v4386 = vshll.u32 %v4194, 16
    %v4388 = vrot.slane %v4386, 5
    %v4389 = vor.u32 %v4385, %v4388
    %v4390 = vrot.slane %v4389, 4
    %v4392 = vshll.u32 %v4195, 16
    %v4394 = vrot.slane %v4392, 5
    %v4395 = vsel %vm480, %v4390, %v4394
    %v4397 = vshrl.u32 %v4196, 16
    %v4399 = vrot.slane %v4397, 4
    %v4400 = vshll.u32 %v4196, 16
    %v4402 = vrot.slane %v4400, 5
    %v4403 = vor.u32 %v4399, %v4402
    %v4404 = vrot.slane %v4403, 4
    %v4406 = vshll.u32 %v4197, 16
    %v4408 = vrot.slane %v4406, 5
    %v4409 = vsel %vm480, %v4404, %v4408
    %v4411 = vshrl.u32 %v4198, 16
    %v4413 = vrot.slane %v4411, 4
    %v4414 = vshll.u32 %v4198, 16
    %v4416 = vrot.slane %v4414, 5
    %v4417 = vor.u32 %v4413, %v4416
    %v4418 = vrot.slane %v4417, 4
    %v4420 = vshll.u32 %v4199, 16
    %v4422 = vrot.slane %v4420, 5
    %v4423 = vsel %vm480, %v4418, %v4422
    %v4424 = vunpack.c.l.b16 %v4213
    %v4425 = vunpack.c.l.b16 %v4227
    %v4426 = vunpack.c.l.b16 %v4241
    %v4427 = vunpack.c.l.b16 %v4255
    %v4428 = vunpack.c.l.b16 %v4269
    %v4429 = vunpack.c.l.b16 %v4283
    %v4430 = vunpack.c.l.b16 %v4297
    %v4431 = vunpack.c.l.b16 %v4311
    %v4432 = vunpack.c.l.b16 %v4325
    %v4433 = vunpack.c.l.b16 %v4339
    %v4434 = vunpack.c.l.b16 %v4353
    %v4435 = vunpack.c.l.b16 %v4367
    %v4436 = vunpack.c.l.b16 %v4381
    %v4437 = vunpack.c.l.b16 %v4395
    %v4438 = vunpack.c.l.b16 %v4409
    %v4439 = vunpack.c.l.b16 %v4423
    %v4440 = vpack.c.b16 %v4425, %v4424
    %v4441 = vpack.c.b16 %v4427, %v4426
    %v4442 = vpack.c.b16 %v4429, %v4428
    %v4443 = vpack.c.b16 %v4431, %v4430
    %v4444 = vpack.c.b16 %v4433, %v4432
    %v4445 = vpack.c.b16 %v4435, %v4434
    %v4446 = vpack.c.b16 %v4437, %v4436
    %v4447 = vpack.c.b16 %v4439, %v4438
    %4456 = vst [vmem:[#allocation2 + $0x20] sm:$0xff] %v4440
    %4457 = vst [vmem:[#allocation2 + $0x68] sm:$0xff] %v4441
    %4458 = vst [vmem:[#allocation2 + $0xb0] sm:$0xff] %v4442
    %4459 = vst [vmem:[#allocation2 + $0xf8] sm:$0xff] %v4443
    %4460 = vst [vmem:[#allocation2 + $0x140] sm:$0xff] %v4444
    %4461 = vst [vmem:[#allocation2 + $0x188] sm:$0xff] %v4445
    %4462 = vst [vmem:[#allocation2 + $0x1d0] sm:$0xff] %v4446
    %4463 = vst [vmem:[#allocation2 + $0x218] sm:$0xff] %v4447
    %v4464 = vld [vmem:[%s271] sm:$0xe]
    %v4465 = vld [vmem:[%s271 + $0x4] sm:$0x1]
    %v4466 = vld [vmem:[%s271 + $0x8] sm:$0xe]
    %v4467 = vld [vmem:[%s271 + $0xc] sm:$0x1]
    %v4468 = vld [vmem:[%s271 + $0x10] sm:$0xe]
    %v4469 = vld [vmem:[%s271 + $0x14] sm:$0x1]
    %v4470 = vld [vmem:[%s271 + $0x18] sm:$0xe]
    %v4471 = vld [vmem:[%s271 + $0x1c] sm:$0x1]
    %v4472 = vld [vmem:[%s271 + $0x20] sm:$0xe]
    %v4473 = vld [vmem:[%s271 + $0x24] sm:$0x1]
    %v4474 = vld [vmem:[%s271 + $0x28] sm:$0xe]
    %v4475 = vld [vmem:[%s271 + $0x2c] sm:$0x1]
    %v4476 = vld [vmem:[%s271 + $0x30] sm:$0xe]
    %v4477 = vld [vmem:[%s271 + $0x34] sm:$0x1]
    %v4478 = vld [vmem:[%s271 + $0x38] sm:$0xe]
    %v4479 = vld [vmem:[%s271 + $0x3c] sm:$0x1]
    %v4480 = vld [vmem:[%s271 + $0x50] sm:$0xe]
    %v4481 = vld [vmem:[%s271 + $0x54] sm:$0x1]
    %v4482 = vld [vmem:[%s271 + $0x58] sm:$0xe]
    %v4483 = vld [vmem:[%s271 + $0x5c] sm:$0x1]
    %v4484 = vld [vmem:[%s271 + $0x60] sm:$0xe]
    %v4485 = vld [vmem:[%s271 + $0x64] sm:$0x1]
    %v4486 = vld [vmem:[%s271 + $0x68] sm:$0xe]
    %v4487 = vld [vmem:[%s271 + $0x6c] sm:$0x1]
    %v4488 = vld [vmem:[%s271 + $0x70] sm:$0xe]
    %v4489 = vld [vmem:[%s271 + $0x74] sm:$0x1]
    %v4490 = vld [vmem:[%s271 + $0x78] sm:$0xe]
    %v4491 = vld [vmem:[%s271 + $0x7c] sm:$0x1]
    %v4492 = vld [vmem:[%s271 + $0x80] sm:$0xe]
    %v4493 = vld [vmem:[%s271 + $0x84] sm:$0x1]
    %v4494 = vld [vmem:[%s271 + $0x88] sm:$0xe]
    %v4495 = vld [vmem:[%s271 + $0x8c] sm:$0x1]
    %v4528 = vrot.slane %v4464, 5
    %v4529 = vrot.slane %v4528, 4
    %v4530 = vrot.slane %v4465, 5
    %v4531 = vsel %vm811, %v4529, %v4530
    %v4532 = vrot.slane %v4466, 5
    %v4533 = vrot.slane %v4532, 4
    %v4534 = vrot.slane %v4467, 5
    %v4535 = vsel %vm811, %v4533, %v4534
    %v4536 = vrot.slane %v4468, 5
    %v4537 = vrot.slane %v4536, 4
    %v4538 = vrot.slane %v4469, 5
    %v4539 = vsel %vm811, %v4537, %v4538
    %v4540 = vrot.slane %v4470, 5
    %v4541 = vrot.slane %v4540, 4
    %v4542 = vrot.slane %v4471, 5
    %v4543 = vsel %vm811, %v4541, %v4542
    %v4544 = vrot.slane %v4472, 5
    %v4545 = vrot.slane %v4544, 4
    %v4546 = vrot.slane %v4473, 5
    %v4547 = vsel %vm811, %v4545, %v4546
    %v4548 = vrot.slane %v4474, 5
    %v4549 = vrot.slane %v4548, 4
    %v4550 = vrot.slane %v4475, 5
    %v4551 = vsel %vm811, %v4549, %v4550
    %v4552 = vrot.slane %v4476, 5
    %v4553 = vrot.slane %v4552, 4
    %v4554 = vrot.slane %v4477, 5
    %v4555 = vsel %vm811, %v4553, %v4554
    %v4556 = vrot.slane %v4478, 5
    %v4557 = vrot.slane %v4556, 4
    %v4558 = vrot.slane %v4479, 5
    %v4559 = vsel %vm811, %v4557, %v4558
    %v4560 = vrot.slane %v4480, 5
    %v4561 = vrot.slane %v4560, 4
    %v4562 = vrot.slane %v4481, 5
    %v4563 = vsel %vm811, %v4561, %v4562
    %v4564 = vrot.slane %v4482, 5
    %v4565 = vrot.slane %v4564, 4
    %v4566 = vrot.slane %v4483, 5
    %v4567 = vsel %vm811, %v4565, %v4566
    %v4568 = vrot.slane %v4484, 5
    %v4569 = vrot.slane %v4568, 4
    %v4570 = vrot.slane %v4485, 5
    %v4571 = vsel %vm811, %v4569, %v4570
    %v4572 = vrot.slane %v4486, 5
    %v4573 = vrot.slane %v4572, 4
    %v4574 = vrot.slane %v4487, 5
    %v4575 = vsel %vm811, %v4573, %v4574
    %v4576 = vrot.slane %v4488, 5
    %v4577 = vrot.slane %v4576, 4
    %v4578 = vrot.slane %v4489, 5
    %v4579 = vsel %vm811, %v4577, %v4578
    %v4580 = vrot.slane %v4490, 5
    %v4581 = vrot.slane %v4580, 4
    %v4582 = vrot.slane %v4491, 5
    %v4583 = vsel %vm811, %v4581, %v4582
    %v4584 = vrot.slane %v4492, 5
    %v4585 = vrot.slane %v4584, 4
    %v4586 = vrot.slane %v4493, 5
    %v4587 = vsel %vm811, %v4585, %v4586
    %v4588 = vrot.slane %v4494, 5
    %v4589 = vrot.slane %v4588, 4
    %v4590 = vrot.slane %v4495, 5
    %v4591 = vsel %vm811, %v4589, %v4590
    %v4592 = vunpack.c.l.b16 %v4531
    %v4593 = vunpack.c.l.b16 %v4535
    %v4594 = vunpack.c.l.b16 %v4539
    %v4595 = vunpack.c.l.b16 %v4543
    %v4596 = vunpack.c.l.b16 %v4547
    %v4597 = vunpack.c.l.b16 %v4551
    %v4598 = vunpack.c.l.b16 %v4555
    %v4599 = vunpack.c.l.b16 %v4559
    %v4600 = vunpack.c.l.b16 %v4563
    %v4601 = vunpack.c.l.b16 %v4567
    %v4602 = vunpack.c.l.b16 %v4571
    %v4603 = vunpack.c.l.b16 %v4575
    %v4604 = vunpack.c.l.b16 %v4579
    %v4605 = vunpack.c.l.b16 %v4583
    %v4606 = vunpack.c.l.b16 %v4587
    %v4607 = vunpack.c.l.b16 %v4591
    %v4608 = vpack.c.b16 %v4593, %v4592
    %v4609 = vpack.c.b16 %v4595, %v4594
    %v4610 = vpack.c.b16 %v4597, %v4596
    %v4611 = vpack.c.b16 %v4599, %v4598
    %v4612 = vpack.c.b16 %v4601, %v4600
    %v4613 = vpack.c.b16 %v4603, %v4602
    %v4614 = vpack.c.b16 %v4605, %v4604
    %v4615 = vpack.c.b16 %v4607, %v4606
    %4624 = vst [vmem:[#allocation2 + $0x28] sm:$0xff] %v4608
    %4625 = vst [vmem:[#allocation2 + $0x70] sm:$0xff] %v4609
    %4626 = vst [vmem:[#allocation2 + $0xb8] sm:$0xff] %v4610
    %4627 = vst [vmem:[#allocation2 + $0x100] sm:$0xff] %v4611
    %4628 = vst [vmem:[#allocation2 + $0x148] sm:$0xff] %v4612
    %4629 = vst [vmem:[#allocation2 + $0x190] sm:$0xff] %v4613
    %4630 = vst [vmem:[#allocation2 + $0x1d8] sm:$0xff] %v4614
    %4631 = vst [vmem:[#allocation2 + $0x220] sm:$0xff] %v4615
    %v4632 = vld [vmem:[%s1452] sm:$0xf]
    %v4633 = vld [vmem:[%s1452 + $0x8] sm:$0xf]
    %v4634 = vld [vmem:[%s1452 + $0x10] sm:$0xf]
    %v4635 = vld [vmem:[%s1452 + $0x18] sm:$0xf]
    %v4636 = vld [vmem:[%s1452 + $0x20] sm:$0xf]
    %v4637 = vld [vmem:[%s1452 + $0x28] sm:$0xf]
    %v4638 = vld [vmem:[%s1452 + $0x30] sm:$0xf]
    %v4639 = vld [vmem:[%s1452 + $0x38] sm:$0xf]
    %v4640 = vld [vmem:[%s1452 + $0x50] sm:$0xf]
    %v4641 = vld [vmem:[%s1452 + $0x58] sm:$0xf]
    %v4642 = vld [vmem:[%s1452 + $0x60] sm:$0xf]
    %v4643 = vld [vmem:[%s1452 + $0x68] sm:$0xf]
    %v4644 = vld [vmem:[%s1452 + $0x70] sm:$0xf]
    %v4645 = vld [vmem:[%s1452 + $0x78] sm:$0xf]
    %v4646 = vld [vmem:[%s1452 + $0x80] sm:$0xf]
    %v4647 = vld [vmem:[%s1452 + $0x88] sm:$0xf]
    %v4664 = vunpack.c.l.b16 %v4632
    %v4665 = vunpack.c.l.b16 %v4633
    %v4666 = vunpack.c.l.b16 %v4634
    %v4667 = vunpack.c.l.b16 %v4635
    %v4668 = vunpack.c.l.b16 %v4636
    %v4669 = vunpack.c.l.b16 %v4637
    %v4670 = vunpack.c.l.b16 %v4638
    %v4671 = vunpack.c.l.b16 %v4639
    %v4672 = vunpack.c.l.b16 %v4640
    %v4673 = vunpack.c.l.b16 %v4641
    %v4674 = vunpack.c.l.b16 %v4642
    %v4675 = vunpack.c.l.b16 %v4643
    %v4676 = vunpack.c.l.b16 %v4644
    %v4677 = vunpack.c.l.b16 %v4645
    %v4678 = vunpack.c.l.b16 %v4646
    %v4679 = vunpack.c.l.b16 %v4647
    %v4680 = vpack.c.b16 %v4665, %v4664
    %v4681 = vpack.c.b16 %v4667, %v4666
    %v4682 = vpack.c.b16 %v4669, %v4668
    %v4683 = vpack.c.b16 %v4671, %v4670
    %v4684 = vpack.c.b16 %v4673, %v4672
    %v4685 = vpack.c.b16 %v4675, %v4674
    %v4686 = vpack.c.b16 %v4677, %v4676
    %v4687 = vpack.c.b16 %v4679, %v4678
    %4696 = vst [vmem:[#allocation2 + $0x30] sm:$0xff] %v4680
    %4697 = vst [vmem:[#allocation2 + $0x78] sm:$0xff] %v4681
    %4698 = vst [vmem:[#allocation2 + $0xc0] sm:$0xff] %v4682
    %4699 = vst [vmem:[#allocation2 + $0x108] sm:$0xff] %v4683
    %4700 = vst [vmem:[#allocation2 + $0x150] sm:$0xff] %v4684
    %4701 = vst [vmem:[#allocation2 + $0x198] sm:$0xff] %v4685
    %4702 = vst [vmem:[#allocation2 + $0x1e0] sm:$0xff] %v4686
    %4703 = vst [vmem:[#allocation2 + $0x228] sm:$0xff] %v4687
    %v4704 = vld [vmem:[%s1452] sm:$0xf]
    %v4705 = vld [vmem:[%s1452 + $0x4] sm:$0x1]
    %v4706 = vld [vmem:[%s1452 + $0x8] sm:$0xf]
    %v4707 = vld [vmem:[%s1452 + $0xc] sm:$0x1]
    %v4708 = vld [vmem:[%s1452 + $0x10] sm:$0xf]
    %v4709 = vld [vmem:[%s1452 + $0x14] sm:$0x1]
    %v4710 = vld [vmem:[%s1452 + $0x18] sm:$0xf]
    %v4711 = vld [vmem:[%s1452 + $0x1c] sm:$0x1]
    %v4712 = vld [vmem:[%s1452 + $0x20] sm:$0xf]
    %v4713 = vld [vmem:[%s1452 + $0x24] sm:$0x1]
    %v4714 = vld [vmem:[%s1452 + $0x28] sm:$0xf]
    %v4715 = vld [vmem:[%s1452 + $0x2c] sm:$0x1]
    %v4716 = vld [vmem:[%s1452 + $0x30] sm:$0xf]
    %v4717 = vld [vmem:[%s1452 + $0x34] sm:$0x1]
    %v4718 = vld [vmem:[%s1452 + $0x38] sm:$0xf]
    %v4719 = vld [vmem:[%s1452 + $0x3c] sm:$0x1]
    %v4720 = vld [vmem:[%s1452 + $0x50] sm:$0xf]
    %v4721 = vld [vmem:[%s1452 + $0x54] sm:$0x1]
    %v4722 = vld [vmem:[%s1452 + $0x58] sm:$0xf]
    %v4723 = vld [vmem:[%s1452 + $0x5c] sm:$0x1]
    %v4724 = vld [vmem:[%s1452 + $0x60] sm:$0xf]
    %v4725 = vld [vmem:[%s1452 + $0x64] sm:$0x1]
    %v4726 = vld [vmem:[%s1452 + $0x68] sm:$0xf]
    %v4727 = vld [vmem:[%s1452 + $0x6c] sm:$0x1]
    %v4728 = vld [vmem:[%s1452 + $0x70] sm:$0xf]
    %v4729 = vld [vmem:[%s1452 + $0x74] sm:$0x1]
    %v4730 = vld [vmem:[%s1452 + $0x78] sm:$0xf]
    %v4731 = vld [vmem:[%s1452 + $0x7c] sm:$0x1]
    %v4732 = vld [vmem:[%s1452 + $0x80] sm:$0xf]
    %v4733 = vld [vmem:[%s1452 + $0x84] sm:$0x1]
    %v4734 = vld [vmem:[%s1452 + $0x88] sm:$0xf]
    %v4735 = vld [vmem:[%s1452 + $0x8c] sm:$0x1]
    %v4737 = vshrl.u32 %v4704, 16
    %v4739 = vrot.slane %v4737, 4
    %v4740 = vshll.u32 %v4704, 16
    %v4742 = vrot.slane %v4740, 5
    %v4743 = vor.u32 %v4739, %v4742
    %v4744 = vrot.slane %v4743, 4
    %v4746 = vshll.u32 %v4705, 16
    %v4748 = vrot.slane %v4746, 5
    %v4749 = vsel %vm480, %v4744, %v4748
    %v4751 = vshrl.u32 %v4706, 16
    %v4753 = vrot.slane %v4751, 4
    %v4754 = vshll.u32 %v4706, 16
    %v4756 = vrot.slane %v4754, 5
    %v4757 = vor.u32 %v4753, %v4756
    %v4758 = vrot.slane %v4757, 4
    %v4760 = vshll.u32 %v4707, 16
    %v4762 = vrot.slane %v4760, 5
    %v4763 = vsel %vm480, %v4758, %v4762
    %v4765 = vshrl.u32 %v4708, 16
    %v4767 = vrot.slane %v4765, 4
    %v4768 = vshll.u32 %v4708, 16
    %v4770 = vrot.slane %v4768, 5
    %v4771 = vor.u32 %v4767, %v4770
    %v4772 = vrot.slane %v4771, 4
    %v4774 = vshll.u32 %v4709, 16
    %v4776 = vrot.slane %v4774, 5
    %v4777 = vsel %vm480, %v4772, %v4776
    %v4779 = vshrl.u32 %v4710, 16
    %v4781 = vrot.slane %v4779, 4
    %v4782 = vshll.u32 %v4710, 16
    %v4784 = vrot.slane %v4782, 5
    %v4785 = vor.u32 %v4781, %v4784
    %v4786 = vrot.slane %v4785, 4
    %v4788 = vshll.u32 %v4711, 16
    %v4790 = vrot.slane %v4788, 5
    %v4791 = vsel %vm480, %v4786, %v4790
    %v4793 = vshrl.u32 %v4712, 16
    %v4795 = vrot.slane %v4793, 4
    %v4796 = vshll.u32 %v4712, 16
    %v4798 = vrot.slane %v4796, 5
    %v4799 = vor.u32 %v4795, %v4798
    %v4800 = vrot.slane %v4799, 4
    %v4802 = vshll.u32 %v4713, 16
    %v4804 = vrot.slane %v4802, 5
    %v4805 = vsel %vm480, %v4800, %v4804
    %v4807 = vshrl.u32 %v4714, 16
    %v4809 = vrot.slane %v4807, 4
    %v4810 = vshll.u32 %v4714, 16
    %v4812 = vrot.slane %v4810, 5
    %v4813 = vor.u32 %v4809, %v4812
    %v4814 = vrot.slane %v4813, 4
    %v4816 = vshll.u32 %v4715, 16
    %v4818 = vrot.slane %v4816, 5
    %v4819 = vsel %vm480, %v4814, %v4818
    %v4821 = vshrl.u32 %v4716, 16
    %v4823 = vrot.slane %v4821, 4
    %v4824 = vshll.u32 %v4716, 16
    %v4826 = vrot.slane %v4824, 5
    %v4827 = vor.u32 %v4823, %v4826
    %v4828 = vrot.slane %v4827, 4
    %v4830 = vshll.u32 %v4717, 16
    %v4832 = vrot.slane %v4830, 5
    %v4833 = vsel %vm480, %v4828, %v4832
    %v4835 = vshrl.u32 %v4718, 16
    %v4837 = vrot.slane %v4835, 4
    %v4838 = vshll.u32 %v4718, 16
    %v4840 = vrot.slane %v4838, 5
    %v4841 = vor.u32 %v4837, %v4840
    %v4842 = vrot.slane %v4841, 4
    %v4844 = vshll.u32 %v4719, 16
    %v4846 = vrot.slane %v4844, 5
    %v4847 = vsel %vm480, %v4842, %v4846
    %v4849 = vshrl.u32 %v4720, 16
    %v4851 = vrot.slane %v4849, 4
    %v4852 = vshll.u32 %v4720, 16
    %v4854 = vrot.slane %v4852, 5
    %v4855 = vor.u32 %v4851, %v4854
    %v4856 = vrot.slane %v4855, 4
    %v4858 = vshll.u32 %v4721, 16
    %v4860 = vrot.slane %v4858, 5
    %v4861 = vsel %vm480, %v4856, %v4860
    %v4863 = vshrl.u32 %v4722, 16
    %v4865 = vrot.slane %v4863, 4
    %v4866 = vshll.u32 %v4722, 16
    %v4868 = vrot.slane %v4866, 5
    %v4869 = vor.u32 %v4865, %v4868
    %v4870 = vrot.slane %v4869, 4
    %v4872 = vshll.u32 %v4723, 16
    %v4874 = vrot.slane %v4872, 5
    %v4875 = vsel %vm480, %v4870, %v4874
    %v4877 = vshrl.u32 %v4724, 16
    %v4879 = vrot.slane %v4877, 4
    %v4880 = vshll.u32 %v4724, 16
    %v4882 = vrot.slane %v4880, 5
    %v4883 = vor.u32 %v4879, %v4882
    %v4884 = vrot.slane %v4883, 4
    %v4886 = vshll.u32 %v4725, 16
    %v4888 = vrot.slane %v4886, 5
    %v4889 = vsel %vm480, %v4884, %v4888
    %v4891 = vshrl.u32 %v4726, 16
    %v4893 = vrot.slane %v4891, 4
    %v4894 = vshll.u32 %v4726, 16
    %v4896 = vrot.slane %v4894, 5
    %v4897 = vor.u32 %v4893, %v4896
    %v4898 = vrot.slane %v4897, 4
    %v4900 = vshll.u32 %v4727, 16
    %v4902 = vrot.slane %v4900, 5
    %v4903 = vsel %vm480, %v4898, %v4902
    %v4905 = vshrl.u32 %v4728, 16
    %v4907 = vrot.slane %v4905, 4
    %v4908 = vshll.u32 %v4728, 16
    %v4910 = vrot.slane %v4908, 5
    %v4911 = vor.u32 %v4907, %v4910
    %v4912 = vrot.slane %v4911, 4
    %v4914 = vshll.u32 %v4729, 16
    %v4916 = vrot.slane %v4914, 5
    %v4917 = vsel %vm480, %v4912, %v4916
    %v4919 = vshrl.u32 %v4730, 16
    %v4921 = vrot.slane %v4919, 4
    %v4922 = vshll.u32 %v4730, 16
    %v4924 = vrot.slane %v4922, 5
    %v4925 = vor.u32 %v4921, %v4924
    %v4926 = vrot.slane %v4925, 4
    %v4928 = vshll.u32 %v4731, 16
    %v4930 = vrot.slane %v4928, 5
    %v4931 = vsel %vm480, %v4926, %v4930
    %v4933 = vshrl.u32 %v4732, 16
    %v4935 = vrot.slane %v4933, 4
    %v4936 = vshll.u32 %v4732, 16
    %v4938 = vrot.slane %v4936, 5
    %v4939 = vor.u32 %v4935, %v4938
    %v4940 = vrot.slane %v4939, 4
    %v4942 = vshll.u32 %v4733, 16
    %v4944 = vrot.slane %v4942, 5
    %v4945 = vsel %vm480, %v4940, %v4944
    %v4947 = vshrl.u32 %v4734, 16
    %v4949 = vrot.slane %v4947, 4
    %v4950 = vshll.u32 %v4734, 16
    %v4952 = vrot.slane %v4950, 5
    %v4953 = vor.u32 %v4949, %v4952
    %v4954 = vrot.slane %v4953, 4
    %v4956 = vshll.u32 %v4735, 16
    %v4958 = vrot.slane %v4956, 5
    %v4959 = vsel %vm480, %v4954, %v4958
    %v4960 = vunpack.c.l.b16 %v4749
    %v4961 = vunpack.c.l.b16 %v4763
    %v4962 = vunpack.c.l.b16 %v4777
    %v4963 = vunpack.c.l.b16 %v4791
    %v4964 = vunpack.c.l.b16 %v4805
    %v4965 = vunpack.c.l.b16 %v4819
    %v4966 = vunpack.c.l.b16 %v4833
    %v4967 = vunpack.c.l.b16 %v4847
    %v4968 = vunpack.c.l.b16 %v4861
    %v4969 = vunpack.c.l.b16 %v4875
    %v4970 = vunpack.c.l.b16 %v4889
    %v4971 = vunpack.c.l.b16 %v4903
    %v4972 = vunpack.c.l.b16 %v4917
    %v4973 = vunpack.c.l.b16 %v4931
    %v4974 = vunpack.c.l.b16 %v4945
    %v4975 = vunpack.c.l.b16 %v4959
    %v4976 = vpack.c.b16 %v4961, %v4960
    %v4977 = vpack.c.b16 %v4963, %v4962
    %v4978 = vpack.c.b16 %v4965, %v4964
    %v4979 = vpack.c.b16 %v4967, %v4966
    %v4980 = vpack.c.b16 %v4969, %v4968
    %v4981 = vpack.c.b16 %v4971, %v4970
    %v4982 = vpack.c.b16 %v4973, %v4972
    %v4983 = vpack.c.b16 %v4975, %v4974
    %4992 = vst [vmem:[#allocation2 + $0x38] sm:$0xff] %v4976
    %4993 = vst [vmem:[#allocation2 + $0x80] sm:$0xff] %v4977
    %4994 = vst [vmem:[#allocation2 + $0xc8] sm:$0xff] %v4978
    %4995 = vst [vmem:[#allocation2 + $0x110] sm:$0xff] %v4979
    %4996 = vst [vmem:[#allocation2 + $0x158] sm:$0xff] %v4980
    %4997 = vst [vmem:[#allocation2 + $0x1a0] sm:$0xff] %v4981
    %4998 = vst [vmem:[#allocation2 + $0x1e8] sm:$0xff] %v4982
    %4999 = vst [vmem:[#allocation2 + $0x230] sm:$0xff] %v4983
    %v5000 = vld [vmem:[%s1452] sm:$0xe]
    %v5001 = vld [vmem:[%s1452 + $0x4] sm:$0x1]
    %v5002 = vld [vmem:[%s1452 + $0x8] sm:$0xe]
    %v5003 = vld [vmem:[%s1452 + $0xc] sm:$0x1]
    %v5004 = vld [vmem:[%s1452 + $0x10] sm:$0xe]
    %v5005 = vld [vmem:[%s1452 + $0x14] sm:$0x1]
    %v5006 = vld [vmem:[%s1452 + $0x18] sm:$0xe]
    %v5007 = vld [vmem:[%s1452 + $0x1c] sm:$0x1]
    %v5008 = vld [vmem:[%s1452 + $0x20] sm:$0xe]
    %v5009 = vld [vmem:[%s1452 + $0x24] sm:$0x1]
    %v5010 = vld [vmem:[%s1452 + $0x28] sm:$0xe]
    %v5011 = vld [vmem:[%s1452 + $0x2c] sm:$0x1]
    %v5012 = vld [vmem:[%s1452 + $0x30] sm:$0xe]
    %v5013 = vld [vmem:[%s1452 + $0x34] sm:$0x1]
    %v5014 = vld [vmem:[%s1452 + $0x38] sm:$0xe]
    %v5015 = vld [vmem:[%s1452 + $0x3c] sm:$0x1]
    %v5016 = vld [vmem:[%s1452 + $0x50] sm:$0xe]
    %v5017 = vld [vmem:[%s1452 + $0x54] sm:$0x1]
    %v5018 = vld [vmem:[%s1452 + $0x58] sm:$0xe]
    %v5019 = vld [vmem:[%s1452 + $0x5c] sm:$0x1]
    %v5020 = vld [vmem:[%s1452 + $0x60] sm:$0xe]
    %v5021 = vld [vmem:[%s1452 + $0x64] sm:$0x1]
    %v5022 = vld [vmem:[%s1452 + $0x68] sm:$0xe]
    %v5023 = vld [vmem:[%s1452 + $0x6c] sm:$0x1]
    %v5024 = vld [vmem:[%s1452 + $0x70] sm:$0xe]
    %v5025 = vld [vmem:[%s1452 + $0x74] sm:$0x1]
    %v5026 = vld [vmem:[%s1452 + $0x78] sm:$0xe]
    %v5027 = vld [vmem:[%s1452 + $0x7c] sm:$0x1]
    %v5028 = vld [vmem:[%s1452 + $0x80] sm:$0xe]
    %v5029 = vld [vmem:[%s1452 + $0x84] sm:$0x1]
    %v5030 = vld [vmem:[%s1452 + $0x88] sm:$0xe]
    %v5031 = vld [vmem:[%s1452 + $0x8c] sm:$0x1]
    %v5064 = vrot.slane %v5000, 5
    %v5065 = vrot.slane %v5064, 4
    %v5066 = vrot.slane %v5001, 5
    %v5067 = vsel %vm811, %v5065, %v5066
    %v5068 = vrot.slane %v5002, 5
    %v5069 = vrot.slane %v5068, 4
    %v5070 = vrot.slane %v5003, 5
    %v5071 = vsel %vm811, %v5069, %v5070
    %v5072 = vrot.slane %v5004, 5
    %v5073 = vrot.slane %v5072, 4
    %v5074 = vrot.slane %v5005, 5
    %v5075 = vsel %vm811, %v5073, %v5074
    %v5076 = vrot.slane %v5006, 5
    %v5077 = vrot.slane %v5076, 4
    %v5078 = vrot.slane %v5007, 5
    %v5079 = vsel %vm811, %v5077, %v5078
    %v5080 = vrot.slane %v5008, 5
    %v5081 = vrot.slane %v5080, 4
    %v5082 = vrot.slane %v5009, 5
    %v5083 = vsel %vm811, %v5081, %v5082
    %v5084 = vrot.slane %v5010, 5
    %v5085 = vrot.slane %v5084, 4
    %v5086 = vrot.slane %v5011, 5
    %v5087 = vsel %vm811, %v5085, %v5086
    %v5088 = vrot.slane %v5012, 5
    %v5089 = vrot.slane %v5088, 4
    %v5090 = vrot.slane %v5013, 5
    %v5091 = vsel %vm811, %v5089, %v5090
    %v5092 = vrot.slane %v5014, 5
    %v5093 = vrot.slane %v5092, 4
    %v5094 = vrot.slane %v5015, 5
    %v5095 = vsel %vm811, %v5093, %v5094
    %v5096 = vrot.slane %v5016, 5
    %v5097 = vrot.slane %v5096, 4
    %v5098 = vrot.slane %v5017, 5
    %v5099 = vsel %vm811, %v5097, %v5098
    %v5100 = vrot.slane %v5018, 5
    %v5101 = vrot.slane %v5100, 4
    %v5102 = vrot.slane %v5019, 5
    %v5103 = vsel %vm811, %v5101, %v5102
    %v5104 = vrot.slane %v5020, 5
    %v5105 = vrot.slane %v5104, 4
    %v5106 = vrot.slane %v5021, 5
    %v5107 = vsel %vm811, %v5105, %v5106
    %v5108 = vrot.slane %v5022, 5
    %v5109 = vrot.slane %v5108, 4
    %v5110 = vrot.slane %v5023, 5
    %v5111 = vsel %vm811, %v5109, %v5110
    %v5112 = vrot.slane %v5024, 5
    %v5113 = vrot.slane %v5112, 4
    %v5114 = vrot.slane %v5025, 5
    %v5115 = vsel %vm811, %v5113, %v5114
    %v5116 = vrot.slane %v5026, 5
    %v5117 = vrot.slane %v5116, 4
    %v5118 = vrot.slane %v5027, 5
    %v5119 = vsel %vm811, %v5117, %v5118
    %v5120 = vrot.slane %v5028, 5
    %v5121 = vrot.slane %v5120, 4
    %v5122 = vrot.slane %v5029, 5
    %v5123 = vsel %vm811, %v5121, %v5122
    %v5124 = vrot.slane %v5030, 5
    %v5125 = vrot.slane %v5124, 4
    %v5126 = vrot.slane %v5031, 5
    %v5127 = vsel %vm811, %v5125, %v5126
    %v5128 = vunpack.c.l.b16 %v5067
    %v5129 = vunpack.c.l.b16 %v5071
    %v5130 = vunpack.c.l.b16 %v5075
    %v5131 = vunpack.c.l.b16 %v5079
    %v5132 = vunpack.c.l.b16 %v5083
    %v5133 = vunpack.c.l.b16 %v5087
    %v5134 = vunpack.c.l.b16 %v5091
    %v5135 = vunpack.c.l.b16 %v5095
    %v5136 = vunpack.c.l.b16 %v5099
    %v5137 = vunpack.c.l.b16 %v5103
    %v5138 = vunpack.c.l.b16 %v5107
    %v5139 = vunpack.c.l.b16 %v5111
    %v5140 = vunpack.c.l.b16 %v5115
    %v5141 = vunpack.c.l.b16 %v5119
    %v5142 = vunpack.c.l.b16 %v5123
    %v5143 = vunpack.c.l.b16 %v5127
    %v5144 = vpack.c.b16 %v5129, %v5128
    %v5145 = vpack.c.b16 %v5131, %v5130
    %v5146 = vpack.c.b16 %v5133, %v5132
    %v5147 = vpack.c.b16 %v5135, %v5134
    %v5148 = vpack.c.b16 %v5137, %v5136
    %v5149 = vpack.c.b16 %v5139, %v5138
    %v5150 = vpack.c.b16 %v5141, %v5140
    %v5151 = vpack.c.b16 %v5143, %v5142
    %5160 = vst [vmem:[#allocation2 + $0x40] sm:$0xff] %v5144
    %5161 = vst [vmem:[#allocation2 + $0x88] sm:$0xff] %v5145
    %5162 = vst [vmem:[#allocation2 + $0xd0] sm:$0xff] %v5146
    %5163 = vst [vmem:[#allocation2 + $0x118] sm:$0xff] %v5147
    %5164 = vst [vmem:[#allocation2 + $0x160] sm:$0xff] %v5148
    %5165 = vst [vmem:[#allocation2 + $0x1a8] sm:$0xff] %v5149
    %5166 = vst [vmem:[#allocation2 + $0x1f0] sm:$0xff] %v5150
    %5167 = vst [vmem:[#allocation2 + $0x238] sm:$0xff] %v5151
    %v5168 = vld [vmem:[#allocation2] sm:$0xff]
    %v5169 = vld [vmem:[#allocation2 + $0x8] sm:$0xff]
    %v5170 = vld [vmem:[#allocation2 + $0x10] sm:$0xff]
    %v5171 = vld [vmem:[#allocation2 + $0x18] sm:$0xff]
    %v5172 = vld [vmem:[#allocation2 + $0x20] sm:$0xff]
    %v5173 = vld [vmem:[#allocation2 + $0x28] sm:$0xff]
    %v5174 = vld [vmem:[#allocation2 + $0x30] sm:$0xff]
    %v5175 = vld [vmem:[#allocation2 + $0x38] sm:$0xff]
    %v5176 = vld [vmem:[#allocation2 + $0x40] sm:$0xff]
    %v5177 = vld [vmem:[#allocation2 + $0x48] sm:$0xff]
    %v5178 = vld [vmem:[#allocation2 + $0x50] sm:$0xff]
    %v5179 = vld [vmem:[#allocation2 + $0x58] sm:$0xff]
    %v5180 = vld [vmem:[#allocation2 + $0x60] sm:$0xff]
    %v5181 = vld [vmem:[#allocation2 + $0x68] sm:$0xff]
    %v5182 = vld [vmem:[#allocation2 + $0x70] sm:$0xff]
    %v5183 = vld [vmem:[#allocation2 + $0x78] sm:$0xff]
    %v5184 = vld [vmem:[#allocation2 + $0x80] sm:$0xff]
    %v5185 = vld [vmem:[#allocation2 + $0x88] sm:$0xff]
    %v5186 = vld [vmem:[#allocation2 + $0x90] sm:$0xff]
    %v5187 = vld [vmem:[#allocation2 + $0x98] sm:$0xff]
    %v5188 = vld [vmem:[#allocation2 + $0xa0] sm:$0xff]
    %v5189 = vld [vmem:[#allocation2 + $0xa8] sm:$0xff]
    %v5190 = vld [vmem:[#allocation2 + $0xb0] sm:$0xff]
    %v5191 = vld [vmem:[#allocation2 + $0xb8] sm:$0xff]
    %v5192 = vld [vmem:[#allocation2 + $0xc0] sm:$0xff]
    %v5193 = vld [vmem:[#allocation2 + $0xc8] sm:$0xff]
    %v5194 = vld [vmem:[#allocation2 + $0xd0] sm:$0xff]
    %v5195 = vld [vmem:[#allocation2 + $0xd8] sm:$0xff]
    %v5196 = vld [vmem:[#allocation2 + $0xe0] sm:$0xff]
    %v5197 = vld [vmem:[#allocation2 + $0xe8] sm:$0xff]
    %v5198 = vld [vmem:[#allocation2 + $0xf0] sm:$0xff]
    %v5199 = vld [vmem:[#allocation2 + $0xf8] sm:$0xff]
    %v5200 = vld [vmem:[#allocation2 + $0x100] sm:$0xff]
    %v5201 = vld [vmem:[#allocation2 + $0x108] sm:$0xff]
    %v5202 = vld [vmem:[#allocation2 + $0x110] sm:$0xff]
    %v5203 = vld [vmem:[#allocation2 + $0x118] sm:$0xff]
    %v5204 = vld [vmem:[#allocation2 + $0x120] sm:$0xff]
    %v5205 = vld [vmem:[#allocation2 + $0x128] sm:$0xff]
    %v5206 = vld [vmem:[#allocation2 + $0x130] sm:$0xff]
    %v5207 = vld [vmem:[#allocation2 + $0x138] sm:$0xff]
    %v5208 = vld [vmem:[#allocation2 + $0x140] sm:$0xff]
    %v5209 = vld [vmem:[#allocation2 + $0x148] sm:$0xff]
    %v5210 = vld [vmem:[#allocation2 + $0x150] sm:$0xff]
    %v5211 = vld [vmem:[#allocation2 + $0x158] sm:$0xff]
    %v5212 = vld [vmem:[#allocation2 + $0x160] sm:$0xff]
    %v5213 = vld [vmem:[#allocation2 + $0x168] sm:$0xff]
    %v5214 = vld [vmem:[#allocation2 + $0x170] sm:$0xff]
    %v5215 = vld [vmem:[#allocation2 + $0x178] sm:$0xff]
    %v5216 = vld [vmem:[#allocation2 + $0x180] sm:$0xff]
    %v5217 = vld [vmem:[#allocation2 + $0x188] sm:$0xff]
    %v5218 = vld [vmem:[#allocation2 + $0x190] sm:$0xff]
    %v5219 = vld [vmem:[#allocation2 + $0x198] sm:$0xff]
    %v5220 = vld [vmem:[#allocation2 + $0x1a0] sm:$0xff]
    %v5221 = vld [vmem:[#allocation2 + $0x1a8] sm:$0xff]
    %v5222 = vld [vmem:[#allocation2 + $0x1b0] sm:$0xff]
    %v5223 = vld [vmem:[#allocation2 + $0x1b8] sm:$0xff]
    %v5224 = vld [vmem:[#allocation2 + $0x1c0] sm:$0xff]
    %v5225 = vld [vmem:[#allocation2 + $0x1c8] sm:$0xff]
    %v5226 = vld [vmem:[#allocation2 + $0x1d0] sm:$0xff]
    %v5227 = vld [vmem:[#allocation2 + $0x1d8] sm:$0xff]
    %v5228 = vld [vmem:[#allocation2 + $0x1e0] sm:$0xff]
    %v5229 = vld [vmem:[#allocation2 + $0x1e8] sm:$0xff]
    %v5230 = vld [vmem:[#allocation2 + $0x1f0] sm:$0xff]
    %v5231 = vld [vmem:[#allocation2 + $0x1f8] sm:$0xff]
    %v5232 = vld [vmem:[#allocation2 + $0x200] sm:$0xff]
    %v5233 = vld [vmem:[#allocation2 + $0x208] sm:$0xff]
    %v5234 = vld [vmem:[#allocation2 + $0x210] sm:$0xff]
    %v5235 = vld [vmem:[#allocation2 + $0x218] sm:$0xff]
    %v5236 = vld [vmem:[#allocation2 + $0x220] sm:$0xff]
    %v5237 = vld [vmem:[#allocation2 + $0x228] sm:$0xff]
    %v5238 = vld [vmem:[#allocation2 + $0x230] sm:$0xff]
    %v5239 = vld [vmem:[#allocation2 + $0x238] sm:$0xff]
    %v5240 = vld [vmem:[#allocation6] sm:$0xf]
    %v5241 = vld [vmem:[#allocation6 + $0x4] sm:$0xf]
    %v5242 = vld [vmem:[#allocation6 + $0x8] sm:$0xf]
    %v5243 = vld [vmem:[#allocation6 + $0xc] sm:$0xf]
    %v5244 = vld [vmem:[#allocation6 + $0x10] sm:$0xf]
    %v5245 = vld [vmem:[#allocation6 + $0x14] sm:$0xf]
    %v5246 = vld [vmem:[#allocation6 + $0x18] sm:$0xf]
    %v5247 = vld [vmem:[#allocation6 + $0x1c] sm:$0xf]
    %v5248 = vld [vmem:[#allocation6 + $0x20] sm:$0xf]
    %v5249 = vld [vmem:[#allocation6 + $0x24] sm:$0xf]
    %v5250 = vld [vmem:[#allocation6 + $0x28] sm:$0xf]
    %v5251 = vld [vmem:[#allocation6 + $0x2c] sm:$0xf]
    %v5252 = vld [vmem:[#allocation6 + $0x30] sm:$0xf]
    %v5253 = vld [vmem:[#allocation6 + $0x34] sm:$0xf]
    %v5254 = vld [vmem:[#allocation6 + $0x38] sm:$0xf]
    %v5255 = vld [vmem:[#allocation6 + $0x3c] sm:$0xf]
    %v5256 = vld [vmem:[#allocation6 + $0x40] sm:$0xf]
    %v5257 = vld [vmem:[#allocation6 + $0x44] sm:$0xf]
    %v5258 = vld [vmem:[#allocation6 + $0x48] sm:$0xf]
    %v5259 = vld [vmem:[#allocation6 + $0x4c] sm:$0xf]
    %v5260 = vld [vmem:[#allocation6 + $0x50] sm:$0xf]
    %v5261 = vld [vmem:[#allocation6 + $0x54] sm:$0xf]
    %v5262 = vld [vmem:[#allocation6 + $0x58] sm:$0xf]
    %v5263 = vld [vmem:[#allocation6 + $0x5c] sm:$0xf]
    %v5264 = vld [vmem:[#allocation6 + $0x60] sm:$0xf]
    %v5265 = vld [vmem:[#allocation6 + $0x64] sm:$0xf]
    %v5266 = vld [vmem:[#allocation6 + $0x68] sm:$0xf]
    %v5267 = vld [vmem:[#allocation6 + $0x6c] sm:$0xf]
    %v5268 = vld [vmem:[#allocation6 + $0x70] sm:$0xf]
    %v5269 = vld [vmem:[#allocation6 + $0x74] sm:$0xf]
    %v5270 = vld [vmem:[#allocation6 + $0x78] sm:$0xf]
    %v5271 = vld [vmem:[#allocation6 + $0x7c] sm:$0xf]
    %v5272 = vld [vmem:[#allocation6 + $0x80] sm:$0xf]
    %v5273 = vld [vmem:[#allocation6 + $0x84] sm:$0xf]
    %v5274 = vld [vmem:[#allocation6 + $0x88] sm:$0xf]
    %v5275 = vld [vmem:[#allocation6 + $0x8c] sm:$0xf]
    %v5276 = vld [vmem:[#allocation6 + $0x90] sm:$0xf]
    %v5277 = vld [vmem:[#allocation6 + $0x94] sm:$0xf]
    %v5278 = vld [vmem:[#allocation6 + $0x98] sm:$0xf]
    %v5279 = vld [vmem:[#allocation6 + $0x9c] sm:$0xf]
    %v5280 = vld [vmem:[#allocation6 + $0xa0] sm:$0xf]
    %v5281 = vld [vmem:[#allocation6 + $0xa4] sm:$0xf]
    %v5282 = vld [vmem:[#allocation6 + $0xa8] sm:$0xf]
    %v5283 = vld [vmem:[#allocation6 + $0xac] sm:$0xf]
    %v5284 = vld [vmem:[#allocation6 + $0xb0] sm:$0xf]
    %v5285 = vld [vmem:[#allocation6 + $0xb4] sm:$0xf]
    %v5286 = vld [vmem:[#allocation6 + $0xb8] sm:$0xf]
    %v5287 = vld [vmem:[#allocation6 + $0xbc] sm:$0xf]
    %v5288 = vld [vmem:[#allocation6 + $0xc0] sm:$0xf]
    %v5289 = vld [vmem:[#allocation6 + $0xc4] sm:$0xf]
    %v5290 = vld [vmem:[#allocation6 + $0xc8] sm:$0xf]
    %v5291 = vld [vmem:[#allocation6 + $0xcc] sm:$0xf]
    %v5292 = vld [vmem:[#allocation6 + $0xd0] sm:$0xf]
    %v5293 = vld [vmem:[#allocation6 + $0xd4] sm:$0xf]
    %v5294 = vld [vmem:[#allocation6 + $0xd8] sm:$0xf]
    %v5295 = vld [vmem:[#allocation6 + $0xdc] sm:$0xf]
    %v5296 = vld [vmem:[#allocation6 + $0xe0] sm:$0xf]
    %v5297 = vld [vmem:[#allocation6 + $0xe4] sm:$0xf]
    %v5298 = vld [vmem:[#allocation6 + $0xe8] sm:$0xf]
    %v5299 = vld [vmem:[#allocation6 + $0xec] sm:$0xf]
    %v5300 = vld [vmem:[#allocation6 + $0xf0] sm:$0xf]
    %v5301 = vld [vmem:[#allocation6 + $0xf4] sm:$0xf]
    %v5302 = vld [vmem:[#allocation6 + $0xf8] sm:$0xf]
    %v5303 = vld [vmem:[#allocation6 + $0xfc] sm:$0xf]
    %v5304 = vld [vmem:[#allocation6 + $0x100] sm:$0xf]
    %v5305 = vld [vmem:[#allocation6 + $0x104] sm:$0xf]
    %v5306 = vld [vmem:[#allocation6 + $0x108] sm:$0xf]
    %v5307 = vld [vmem:[#allocation6 + $0x10c] sm:$0xf]
    %v5308 = vld [vmem:[#allocation6 + $0x110] sm:$0xf]
    %v5309 = vld [vmem:[#allocation6 + $0x114] sm:$0xf]
    %v5310 = vld [vmem:[#allocation6 + $0x118] sm:$0xf]
    %v5311 = vld [vmem:[#allocation6 + $0x11c] sm:$0xf]
    %v5312 = vld [vmem:[#allocation6 + $0x120] sm:$0xf]
    %v5313 = vld [vmem:[#allocation6 + $0x124] sm:$0xf]
    %v5314 = vld [vmem:[#allocation6 + $0x128] sm:$0xf]
    %v5315 = vld [vmem:[#allocation6 + $0x12c] sm:$0xf]
    %v5316 = vld [vmem:[#allocation6 + $0x130] sm:$0xf]
    %v5317 = vld [vmem:[#allocation6 + $0x134] sm:$0xf]
    %v5318 = vld [vmem:[#allocation6 + $0x138] sm:$0xf]
    %v5319 = vld [vmem:[#allocation6 + $0x13c] sm:$0xf]
    %v5320 = vld [vmem:[#allocation6 + $0x140] sm:$0xf]
    %v5321 = vld [vmem:[#allocation6 + $0x144] sm:$0xf]
    %v5322 = vld [vmem:[#allocation6 + $0x148] sm:$0xf]
    %v5323 = vld [vmem:[#allocation6 + $0x14c] sm:$0xf]
    %v5324 = vld [vmem:[#allocation6 + $0x150] sm:$0xf]
    %v5325 = vld [vmem:[#allocation6 + $0x154] sm:$0xf]
    %v5326 = vld [vmem:[#allocation6 + $0x158] sm:$0xf]
    %v5327 = vld [vmem:[#allocation6 + $0x15c] sm:$0xf]
    %v5328 = vld [vmem:[#allocation6 + $0x160] sm:$0xf]
    %v5329 = vld [vmem:[#allocation6 + $0x164] sm:$0xf]
    %v5330 = vld [vmem:[#allocation6 + $0x168] sm:$0xf]
    %v5331 = vld [vmem:[#allocation6 + $0x16c] sm:$0xf]
    %v5332 = vld [vmem:[#allocation6 + $0x170] sm:$0xf]
    %v5333 = vld [vmem:[#allocation6 + $0x174] sm:$0xf]
    %v5334 = vld [vmem:[#allocation6 + $0x178] sm:$0xf]
    %v5335 = vld [vmem:[#allocation6 + $0x17c] sm:$0xf]
    %v5336 = vld [vmem:[#allocation6 + $0x180] sm:$0xf]
    %v5337 = vld [vmem:[#allocation6 + $0x184] sm:$0xf]
    %v5338 = vld [vmem:[#allocation6 + $0x188] sm:$0xf]
    %v5339 = vld [vmem:[#allocation6 + $0x18c] sm:$0xf]
    %v5340 = vld [vmem:[#allocation6 + $0x190] sm:$0xf]
    %v5341 = vld [vmem:[#allocation6 + $0x194] sm:$0xf]
    %v5342 = vld [vmem:[#allocation6 + $0x198] sm:$0xf]
    %v5343 = vld [vmem:[#allocation6 + $0x19c] sm:$0xf]
    %v5344 = vld [vmem:[#allocation6 + $0x1a0] sm:$0xf]
    %v5345 = vld [vmem:[#allocation6 + $0x1a4] sm:$0xf]
    %v5346 = vld [vmem:[#allocation6 + $0x1a8] sm:$0xf]
    %v5347 = vld [vmem:[#allocation6 + $0x1ac] sm:$0xf]
    %v5348 = vld [vmem:[#allocation6 + $0x1b0] sm:$0xf]
    %v5349 = vld [vmem:[#allocation6 + $0x1b4] sm:$0xf]
    %v5350 = vld [vmem:[#allocation6 + $0x1b8] sm:$0xf]
    %v5351 = vld [vmem:[#allocation6 + $0x1bc] sm:$0xf]
    %v5352 = vld [vmem:[#allocation6 + $0x1c0] sm:$0xf]
    %v5353 = vld [vmem:[#allocation6 + $0x1c4] sm:$0xf]
    %v5354 = vld [vmem:[#allocation6 + $0x1c8] sm:$0xf]
    %v5355 = vld [vmem:[#allocation6 + $0x1cc] sm:$0xf]
    %v5356 = vld [vmem:[#allocation6 + $0x1d0] sm:$0xf]
    %v5357 = vld [vmem:[#allocation6 + $0x1d4] sm:$0xf]
    %v5358 = vld [vmem:[#allocation6 + $0x1d8] sm:$0xf]
    %v5359 = vld [vmem:[#allocation6 + $0x1dc] sm:$0xf]
    %v5360 = vld [vmem:[#allocation6 + $0x1e0] sm:$0xf]
    %v5361 = vld [vmem:[#allocation6 + $0x1e4] sm:$0xf]
    %v5362 = vld [vmem:[#allocation6 + $0x1e8] sm:$0xf]
    %v5363 = vld [vmem:[#allocation6 + $0x1ec] sm:$0xf]
    %v5364 = vld [vmem:[#allocation6 + $0x1f0] sm:$0xf]
    %v5365 = vld [vmem:[#allocation6 + $0x1f4] sm:$0xf]
    %v5366 = vld [vmem:[#allocation6 + $0x1f8] sm:$0xf]
    %v5367 = vld [vmem:[#allocation6 + $0x1fc] sm:$0xf]
    %v5368 = vld [vmem:[#allocation6 + $0x200] sm:$0xf]
    %v5369 = vld [vmem:[#allocation6 + $0x204] sm:$0xf]
    %v5370 = vld [vmem:[#allocation6 + $0x208] sm:$0xf]
    %v5371 = vld [vmem:[#allocation6 + $0x20c] sm:$0xf]
    %v5372 = vld [vmem:[#allocation6 + $0x210] sm:$0xf]
    %v5373 = vld [vmem:[#allocation6 + $0x214] sm:$0xf]
    %v5374 = vld [vmem:[#allocation6 + $0x218] sm:$0xf]
    %v5375 = vld [vmem:[#allocation6 + $0x21c] sm:$0xf]
    %v5376 = vld [vmem:[#allocation6 + $0x220] sm:$0xf]
    %v5377 = vld [vmem:[#allocation6 + $0x224] sm:$0xf]
    %v5378 = vld [vmem:[#allocation6 + $0x228] sm:$0xf]
    %v5379 = vld [vmem:[#allocation6 + $0x22c] sm:$0xf]
    %v5380 = vld [vmem:[#allocation6 + $0x230] sm:$0xf]
    %v5381 = vld [vmem:[#allocation6 + $0x234] sm:$0xf]
    %v5382 = vld [vmem:[#allocation6 + $0x238] sm:$0xf]
    %v5383 = vld [vmem:[#allocation6 + $0x23c] sm:$0xf]
    %v5384 = vld [vmem:[%s4] sm:$0x1]
    %v5386 = vlaneseq
    %v5387 = vshrl.u32 %v5386, 7
    %v5388 = vsub.s32 0, %v5387
    %v5389 = vrot.slane %v5384, %v5388
    %v5535 = vunpack.c.l.b16 %v5240
    %v5536 = vunpack.c.l.b16 %v5241
    %v5537 = vunpack.c.l.b16 %v5242
    %v5538 = vunpack.c.l.b16 %v5243
    %v5539 = vunpack.c.l.b16 %v5244
    %v5540 = vunpack.c.l.b16 %v5245
    %v5541 = vunpack.c.l.b16 %v5246
    %v5542 = vunpack.c.l.b16 %v5247
    %v5543 = vunpack.c.l.b16 %v5248
    %v5544 = vunpack.c.l.b16 %v5249
    %v5545 = vunpack.c.l.b16 %v5250
    %v5546 = vunpack.c.l.b16 %v5251
    %v5547 = vunpack.c.l.b16 %v5252
    %v5548 = vunpack.c.l.b16 %v5253
    %v5549 = vunpack.c.l.b16 %v5254
    %v5550 = vunpack.c.l.b16 %v5255
    %v5551 = vunpack.c.l.b16 %v5256
    %v5552 = vunpack.c.l.b16 %v5257
    %v5553 = vunpack.c.l.b16 %v5258
    %v5554 = vunpack.c.l.b16 %v5259
    %v5555 = vunpack.c.l.b16 %v5260
    %v5556 = vunpack.c.l.b16 %v5261
    %v5557 = vunpack.c.l.b16 %v5262
    %v5558 = vunpack.c.l.b16 %v5263
    %v5559 = vunpack.c.l.b16 %v5264
    %v5560 = vunpack.c.l.b16 %v5265
    %v5561 = vunpack.c.l.b16 %v5266
    %v5562 = vunpack.c.l.b16 %v5267
    %v5563 = vunpack.c.l.b16 %v5268
    %v5564 = vunpack.c.l.b16 %v5269
    %v5565 = vunpack.c.l.b16 %v5270
    %v5566 = vunpack.c.l.b16 %v5271
    %v5567 = vunpack.c.l.b16 %v5272
    %v5568 = vunpack.c.l.b16 %v5273
    %v5569 = vunpack.c.l.b16 %v5274
    %v5570 = vunpack.c.l.b16 %v5275
    %v5571 = vunpack.c.l.b16 %v5276
    %v5572 = vunpack.c.l.b16 %v5277
    %v5573 = vunpack.c.l.b16 %v5278
    %v5574 = vunpack.c.l.b16 %v5279
    %v5575 = vunpack.c.l.b16 %v5280
    %v5576 = vunpack.c.l.b16 %v5281
    %v5577 = vunpack.c.l.b16 %v5282
    %v5578 = vunpack.c.l.b16 %v5283
    %v5579 = vunpack.c.l.b16 %v5284
    %v5580 = vunpack.c.l.b16 %v5285
    %v5581 = vunpack.c.l.b16 %v5286
    %v5582 = vunpack.c.l.b16 %v5287
    %v5583 = vunpack.c.l.b16 %v5288
    %v5584 = vunpack.c.l.b16 %v5289
    %v5585 = vunpack.c.l.b16 %v5290
    %v5586 = vunpack.c.l.b16 %v5291
    %v5587 = vunpack.c.l.b16 %v5292
    %v5588 = vunpack.c.l.b16 %v5293
    %v5589 = vunpack.c.l.b16 %v5294
    %v5590 = vunpack.c.l.b16 %v5295
    %v5591 = vunpack.c.l.b16 %v5296
    %v5592 = vunpack.c.l.b16 %v5297
    %v5593 = vunpack.c.l.b16 %v5298
    %v5594 = vunpack.c.l.b16 %v5299
    %v5595 = vunpack.c.l.b16 %v5300
    %v5596 = vunpack.c.l.b16 %v5301
    %v5597 = vunpack.c.l.b16 %v5302
    %v5598 = vunpack.c.l.b16 %v5303
    %v5599 = vunpack.c.l.b16 %v5304
    %v5600 = vunpack.c.l.b16 %v5305
    %v5601 = vunpack.c.l.b16 %v5306
    %v5602 = vunpack.c.l.b16 %v5307
    %v5603 = vunpack.c.l.b16 %v5308
    %v5604 = vunpack.c.l.b16 %v5309
    %v5605 = vunpack.c.l.b16 %v5310
    %v5606 = vunpack.c.l.b16 %v5311
    %v5607 = vunpack.c.l.b16 %v5312
    %v5608 = vunpack.c.l.b16 %v5313
    %v5609 = vunpack.c.l.b16 %v5314
    %v5610 = vunpack.c.l.b16 %v5315
    %v5611 = vunpack.c.l.b16 %v5316
    %v5612 = vunpack.c.l.b16 %v5317
    %v5613 = vunpack.c.l.b16 %v5318
    %v5614 = vunpack.c.l.b16 %v5319
    %v5615 = vunpack.c.l.b16 %v5320
    %v5616 = vunpack.c.l.b16 %v5321
    %v5617 = vunpack.c.l.b16 %v5322
    %v5618 = vunpack.c.l.b16 %v5323
    %v5619 = vunpack.c.l.b16 %v5324
    %v5620 = vunpack.c.l.b16 %v5325
    %v5621 = vunpack.c.l.b16 %v5326
    %v5622 = vunpack.c.l.b16 %v5327
    %v5623 = vunpack.c.l.b16 %v5328
    %v5624 = vunpack.c.l.b16 %v5329
    %v5625 = vunpack.c.l.b16 %v5330
    %v5626 = vunpack.c.l.b16 %v5331
    %v5627 = vunpack.c.l.b16 %v5332
    %v5628 = vunpack.c.l.b16 %v5333
    %v5629 = vunpack.c.l.b16 %v5334
    %v5630 = vunpack.c.l.b16 %v5335
    %v5631 = vunpack.c.l.b16 %v5336
    %v5632 = vunpack.c.l.b16 %v5337
    %v5633 = vunpack.c.l.b16 %v5338
    %v5634 = vunpack.c.l.b16 %v5339
    %v5635 = vunpack.c.l.b16 %v5340
    %v5636 = vunpack.c.l.b16 %v5341
    %v5637 = vunpack.c.l.b16 %v5342
    %v5638 = vunpack.c.l.b16 %v5343
    %v5639 = vunpack.c.l.b16 %v5344
    %v5640 = vunpack.c.l.b16 %v5345
    %v5641 = vunpack.c.l.b16 %v5346
    %v5642 = vunpack.c.l.b16 %v5347
    %v5643 = vunpack.c.l.b16 %v5348
    %v5644 = vunpack.c.l.b16 %v5349
    %v5645 = vunpack.c.l.b16 %v5350
    %v5646 = vunpack.c.l.b16 %v5351
    %v5647 = vunpack.c.l.b16 %v5352
    %v5648 = vunpack.c.l.b16 %v5353
    %v5649 = vunpack.c.l.b16 %v5354
    %v5650 = vunpack.c.l.b16 %v5355
    %v5651 = vunpack.c.l.b16 %v5356
    %v5652 = vunpack.c.l.b16 %v5357
    %v5653 = vunpack.c.l.b16 %v5358
    %v5654 = vunpack.c.l.b16 %v5359
    %v5655 = vunpack.c.l.b16 %v5360
    %v5656 = vunpack.c.l.b16 %v5361
    %v5657 = vunpack.c.l.b16 %v5362
    %v5658 = vunpack.c.l.b16 %v5363
    %v5659 = vunpack.c.l.b16 %v5364
    %v5660 = vunpack.c.l.b16 %v5365
    %v5661 = vunpack.c.l.b16 %v5366
    %v5662 = vunpack.c.l.b16 %v5367
    %v5663 = vunpack.c.l.b16 %v5368
    %v5664 = vunpack.c.l.b16 %v5369
    %v5665 = vunpack.c.l.b16 %v5370
    %v5666 = vunpack.c.l.b16 %v5371
    %v5667 = vunpack.c.l.b16 %v5372
    %v5668 = vunpack.c.l.b16 %v5373
    %v5669 = vunpack.c.l.b16 %v5374
    %v5670 = vunpack.c.l.b16 %v5375
    %v5671 = vunpack.c.l.b16 %v5376
    %v5672 = vunpack.c.l.b16 %v5377
    %v5673 = vunpack.c.l.b16 %v5378
    %v5674 = vunpack.c.l.b16 %v5379
    %v5675 = vunpack.c.l.b16 %v5380
    %v5676 = vunpack.c.l.b16 %v5381
    %v5677 = vunpack.c.l.b16 %v5382
    %v5678 = vunpack.c.l.b16 %v5383
    %v5679 = vpack.c.b16 %v5536, %v5535
    %v5680 = vpack.c.b16 %v5538, %v5537
    %v5681 = vpack.c.b16 %v5540, %v5539
    %v5682 = vpack.c.b16 %v5542, %v5541
    %v5683 = vpack.c.b16 %v5544, %v5543
    %v5684 = vpack.c.b16 %v5546, %v5545
    %v5685 = vpack.c.b16 %v5548, %v5547
    %v5686 = vpack.c.b16 %v5550, %v5549
    %v5687 = vpack.c.b16 %v5552, %v5551
    %v5688 = vpack.c.b16 %v5554, %v5553
    %v5689 = vpack.c.b16 %v5556, %v5555
    %v5690 = vpack.c.b16 %v5558, %v5557
    %v5691 = vpack.c.b16 %v5560, %v5559
    %v5692 = vpack.c.b16 %v5562, %v5561
    %v5693 = vpack.c.b16 %v5564, %v5563
    %v5694 = vpack.c.b16 %v5566, %v5565
    %v5695 = vpack.c.b16 %v5568, %v5567
    %v5696 = vpack.c.b16 %v5570, %v5569
    %v5697 = vpack.c.b16 %v5572, %v5571
    %v5698 = vpack.c.b16 %v5574, %v5573
    %v5699 = vpack.c.b16 %v5576, %v5575
    %v5700 = vpack.c.b16 %v5578, %v5577
    %v5701 = vpack.c.b16 %v5580, %v5579
    %v5702 = vpack.c.b16 %v5582, %v5581
    %v5703 = vpack.c.b16 %v5584, %v5583
    %v5704 = vpack.c.b16 %v5586, %v5585
    %v5705 = vpack.c.b16 %v5588, %v5587
    %v5706 = vpack.c.b16 %v5590, %v5589
    %v5707 = vpack.c.b16 %v5592, %v5591
    %v5708 = vpack.c.b16 %v5594, %v5593
    %v5709 = vpack.c.b16 %v5596, %v5595
    %v5710 = vpack.c.b16 %v5598, %v5597
    %v5711 = vpack.c.b16 %v5600, %v5599
    %v5712 = vpack.c.b16 %v5602, %v5601
    %v5713 = vpack.c.b16 %v5604, %v5603
    %v5714 = vpack.c.b16 %v5606, %v5605
    %v5715 = vpack.c.b16 %v5608, %v5607
    %v5716 = vpack.c.b16 %v5610, %v5609
    %v5717 = vpack.c.b16 %v5612, %v5611
    %v5718 = vpack.c.b16 %v5614, %v5613
    %v5719 = vpack.c.b16 %v5616, %v5615
    %v5720 = vpack.c.b16 %v5618, %v5617
    %v5721 = vpack.c.b16 %v5620, %v5619
    %v5722 = vpack.c.b16 %v5622, %v5621
    %v5723 = vpack.c.b16 %v5624, %v5623
    %v5724 = vpack.c.b16 %v5626, %v5625
    %v5725 = vpack.c.b16 %v5628, %v5627
    %v5726 = vpack.c.b16 %v5630, %v5629
    %v5727 = vpack.c.b16 %v5632, %v5631
    %v5728 = vpack.c.b16 %v5634, %v5633
    %v5729 = vpack.c.b16 %v5636, %v5635
    %v5730 = vpack.c.b16 %v5638, %v5637
    %v5731 = vpack.c.b16 %v5640, %v5639
    %v5732 = vpack.c.b16 %v5642, %v5641
    %v5733 = vpack.c.b16 %v5644, %v5643
    %v5734 = vpack.c.b16 %v5646, %v5645
    %v5735 = vpack.c.b16 %v5648, %v5647
    %v5736 = vpack.c.b16 %v5650, %v5649
    %v5737 = vpack.c.b16 %v5652, %v5651
    %v5738 = vpack.c.b16 %v5654, %v5653
    %v5739 = vpack.c.b16 %v5656, %v5655
    %v5740 = vpack.c.b16 %v5658, %v5657
    %v5741 = vpack.c.b16 %v5660, %v5659
    %v5742 = vpack.c.b16 %v5662, %v5661
    %v5743 = vpack.c.b16 %v5664, %v5663
    %v5744 = vpack.c.b16 %v5666, %v5665
    %v5745 = vpack.c.b16 %v5668, %v5667
    %v5746 = vpack.c.b16 %v5670, %v5669
    %v5747 = vpack.c.b16 %v5672, %v5671
    %v5748 = vpack.c.b16 %v5674, %v5673
    %v5749 = vpack.c.b16 %v5676, %v5675
    %v5750 = vpack.c.b16 %v5678, %v5677
    %5823 = vmatprep.subr.bf16.mxu0 0
    %5824 = vmatpush1.bf16.msra.mxu0 %v5679
    %5825 = vmatprep.subr.bf16.mxu0 0
    %5826 = vmatpush1.bf16.msra.mxu0 %v5680
    %5827 = vmatprep.subr.bf16.mxu0 0
    %5828 = vmatpush1.bf16.msra.mxu0 %v5681
    %5829 = vmatprep.subr.bf16.mxu0 0
    %5830 = vmatpush1.bf16.msra.mxu0 %v5682
    %5831 = vmatprep.subr.bf16.mxu0 0
    %5832 = vmatpush1.bf16.msra.mxu0 %v5683
    %5833 = vmatprep.subr.bf16.mxu0 0
    %5834 = vmatpush1.bf16.msra.mxu0 %v5684
    %5835 = vmatprep.subr.bf16.mxu0 0
    %5836 = vmatpush1.bf16.msra.mxu0 %v5685
    %5837 = vmatprep.subr.bf16.mxu0 0
    %5838 = vmatpush1.bf16.msra.mxu0 %v5686
    %5839 = vmatprep.subr.bf16.mxu0 0
    %5840 = vmatpush1.bf16.msra.mxu0 %v5687
    %5841 = vmatprep.subr.bf16.mxu0 0
    %5842 = vmatpush1.bf16.msra.mxu0 %v5688
    %5843 = vmatprep.subr.bf16.mxu0 0
    %5844 = vmatpush1.bf16.msra.mxu0 %v5689
    %5845 = vmatprep.subr.bf16.mxu0 0
    %5846 = vmatpush1.bf16.msra.mxu0 %v5690
    %5847 = vmatprep.subr.bf16.mxu0 0
    %5848 = vmatpush1.bf16.msra.mxu0 %v5691
    %5849 = vmatprep.subr.bf16.mxu0 0
    %5850 = vmatpush1.bf16.msra.mxu0 %v5692
    %5851 = vmatprep.subr.bf16.mxu0 0
    %5852 = vmatpush1.bf16.msra.mxu0 %v5693
    %5853 = vmatprep.subr.bf16.mxu0 0
    %5854 = vmatpush1.bf16.msra.mxu0 %v5694
    %5855 = vmatprep.mubr.bf16.mxu0 %v5169
    %5856 = vmatmul.mubr.bf16.gmra.mrb[0].mxu0 %v5168
    %v5857 = vpop.f32.mrb[0].mxu0
    %v5858 = vadd.f32 %v5389, %v5857
    %v5859 = vpop.f32.mrb[0].mxu0
    %v5860 = vpop.f32.mrb[0].mxu0
    %v5861 = vadd.f32 %v5389, %v5860
    %v5862 = vpop.f32.mrb[0].mxu0
    %5863 = vmatprep.mubr.bf16.mxu0 %v5178
    %5864 = vmatmul.mubr.bf16.gmra.mrb[0].mxu0 %v5177
    %v5865 = vpop.f32.mrb[0].mxu0
    %v5866 = vadd.f32 %v5389, %v5865
    %v5867 = vpop.f32.mrb[0].mxu0
    %v5868 = vpop.f32.mrb[0].mxu0
    %v5869 = vadd.f32 %v5389, %v5868
    %v5870 = vpop.f32.mrb[0].mxu0
    %5871 = vmatprep.mubr.bf16.mxu0 %v5187
    %5872 = vmatmul.mubr.bf16.gmra.mrb[0].mxu0 %v5186
    %v5873 = vpop.f32.mrb[0].mxu0
    %v5874 = vadd.f32 %v5389, %v5873
    %v5875 = vpop.f32.mrb[0].mxu0
    %v5876 = vpop.f32.mrb[0].mxu0
    %v5877 = vadd.f32 %v5389, %v5876
    %v5878 = vpop.f32.mrb[0].mxu0
    %5879 = vmatprep.mubr.bf16.mxu0 %v5196
    %5880 = vmatmul.mubr.bf16.gmra.mrb[0].mxu0 %v5195
    %v5881 = vpop.f32.mrb[0].mxu0
    %v5882 = vadd.f32 %v5389, %v5881
    %v5883 = vpop.f32.mrb[0].mxu0
    %v5884 = vpop.f32.mrb[0].mxu0
    %v5885 = vadd.f32 %v5389, %v5884
    %v5886 = vpop.f32.mrb[0].mxu0
    %5887 = vmatprep.mubr.bf16.mxu0 %v5205
    %5888 = vmatmul.mubr.bf16.gmra.mrb[0].mxu0 %v5204
    %v5889 = vpop.f32.mrb[0].mxu0
    %v5890 = vadd.f32 %v5389, %v5889
    %v5891 = vpop.f32.mrb[0].mxu0
    %v5892 = vpop.f32.mrb[0].mxu0
    %v5893 = vadd.f32 %v5389, %v5892
    %v5894 = vpop.f32.mrb[0].mxu0
    %5895 = vmatprep.mubr.bf16.mxu0 %v5214
    %5896 = vmatmul.mubr.bf16.gmra.mrb[0].mxu0 %v5213
    %v5897 = vpop.f32.mrb[0].mxu0
    %v5898 = vadd.f32 %v5389, %v5897
    %v5899 = vpop.f32.mrb[0].mxu0
    %v5900 = vpop.f32.mrb[0].mxu0
    %v5901 = vadd.f32 %v5389, %v5900
    %v5902 = vpop.f32.mrb[0].mxu0
    %5903 = vmatprep.mubr.bf16.mxu0 %v5223
    %5904 = vmatmul.mubr.bf16.gmra.mrb[0].mxu0 %v5222
    %v5905 = vpop.f32.mrb[0].mxu0
    %v5906 = vadd.f32 %v5389, %v5905
    %v5907 = vpop.f32.mrb[0].mxu0
    %v5908 = vpop.f32.mrb[0].mxu0
    %v5909 = vadd.f32 %v5389, %v5908
    %v5910 = vpop.f32.mrb[0].mxu0
    %5911 = vmatprep.mubr.bf16.mxu0 %v5232
    %5912 = vmatmul.mubr.bf16.gmra.mrb[0].mxu0 %v5231
    %v5913 = vpop.f32.mrb[0].mxu0
    %v5914 = vadd.f32 %v5389, %v5913
    %v5915 = vpop.f32.mrb[0].mxu0
    %v5916 = vpop.f32.mrb[0].mxu0
    %v5917 = vadd.f32 %v5389, %v5916
    %v5918 = vpop.f32.mrb[0].mxu0
    %5919 = vdwg.mxu0
    %5920 = vmatprep.subr.bf16.mxu0 0
    %5921 = vmatpush1.bf16.msra.mxu0 %v5695
    %5922 = vmatprep.subr.bf16.mxu0 0
    %5923 = vmatpush1.bf16.msra.mxu0 %v5696
    %5924 = vmatprep.subr.bf16.mxu0 0
    %5925 = vmatpush1.bf16.msra.mxu0 %v5697
    %5926 = vmatprep.subr.bf16.mxu0 0
    %5927 = vmatpush1.bf16.msra.mxu0 %v5698
    %5928 = vmatprep.subr.bf16.mxu0 0
    %5929 = vmatpush1.bf16.msra.mxu0 %v5699
    %5930 = vmatprep.subr.bf16.mxu0 0
    %5931 = vmatpush1.bf16.msra.mxu0 %v5700
    %5932 = vmatprep.subr.bf16.mxu0 0
    %5933 = vmatpush1.bf16.msra.mxu0 %v5701
    %5934 = vmatprep.subr.bf16.mxu0 0
    %5935 = vmatpush1.bf16.msra.mxu0 %v5702
    %5936 = vmatprep.subr.bf16.mxu0 0
    %5937 = vmatpush1.bf16.msra.mxu0 %v5703
    %5938 = vmatprep.subr.bf16.mxu0 0
    %5939 = vmatpush1.bf16.msra.mxu0 %v5704
    %5940 = vmatprep.subr.bf16.mxu0 0
    %5941 = vmatpush1.bf16.msra.mxu0 %v5705
    %5942 = vmatprep.subr.bf16.mxu0 0
    %5943 = vmatpush1.bf16.msra.mxu0 %v5706
    %5944 = vmatprep.subr.bf16.mxu0 0
    %5945 = vmatpush1.bf16.msra.mxu0 %v5707
    %5946 = vmatprep.subr.bf16.mxu0 0
    %5947 = vmatpush1.bf16.msra.mxu0 %v5708
    %5948 = vmatprep.subr.bf16.mxu0 0
    %5949 = vmatpush1.bf16.msra.mxu0 %v5709
    %5950 = vmatprep.subr.bf16.mxu0 0
    %5951 = vmatpush1.bf16.msra.mxu0 %v5710
    %5952 = vmatprep.mubr.bf16.mxu0 %v5171
    %5953 = vmatmul.mubr.bf16.gmra.mrb[0].mxu0 %v5170
    %v5954 = vpop.f32.mrb[0].mxu0
    %v5955 = vadd.f32 %v5858, %v5954
    %v5956 = vpop.f32.mrb[0].mxu0
    %v5957 = vpop.f32.mrb[0].mxu0
    %v5958 = vadd.f32 %v5861, %v5957
    %v5959 = vpop.f32.mrb[0].mxu0
    %5960 = vmatprep.mubr.bf16.mxu0 %v5180
    %5961 = vmatmul.mubr.bf16.gmra.mrb[0].mxu0 %v5179
    %v5962 = vpop.f32.mrb[0].mxu0
    %v5963 = vadd.f32 %v5866, %v5962
    %v5964 = vpop.f32.mrb[0].mxu0
    %v5965 = vpop.f32.mrb[0].mxu0
    %v5966 = vadd.f32 %v5869, %v5965
    %v5967 = vpop.f32.mrb[0].mxu0
    %5968 = vmatprep.mubr.bf16.mxu0 %v5189
    %5969 = vmatmul.mubr.bf16.gmra.mrb[0].mxu0 %v5188
    %v5970 = vpop.f32.mrb[0].mxu0
    %v5971 = vadd.f32 %v5874, %v5970
    %v5972 = vpop.f32.mrb[0].mxu0
    %v5973 = vpop.f32.mrb[0].mxu0
    %v5974 = vadd.f32 %v5877, %v5973
    %v5975 = vpop.f32.mrb[0].mxu0
    %5976 = vmatprep.mubr.bf16.mxu0 %v5198
    %5977 = vmatmul.mubr.bf16.gmra.mrb[0].mxu0 %v5197
    %v5978 = vpop.f32.mrb[0].mxu0
    %v5979 = vadd.f32 %v5882, %v5978
    %v5980 = vpop.f32.mrb[0].mxu0
    %v5981 = vpop.f32.mrb[0].mxu0
    %v5982 = vadd.f32 %v5885, %v5981
    %v5983 = vpop.f32.mrb[0].mxu0
    %5984 = vmatprep.mubr.bf16.mxu0 %v5207
    %5985 = vmatmul.mubr.bf16.gmra.mrb[0].mxu0 %v5206
    %v5986 = vpop.f32.mrb[0].mxu0
    %v5987 = vadd.f32 %v5890, %v5986
    %v5988 = vpop.f32.mrb[0].mxu0
    %v5989 = vpop.f32.mrb[0].mxu0
    %v5990 = vadd.f32 %v5893, %v5989
    %v5991 = vpop.f32.mrb[0].mxu0
    %5992 = vmatprep.mubr.bf16.mxu0 %v5216
    %5993 = vmatmul.mubr.bf16.gmra.mrb[0].mxu0 %v5215
    %v5994 = vpop.f32.mrb[0].mxu0
    %v5995 = vadd.f32 %v5898, %v5994
    %v5996 = vpop.f32.mrb[0].mxu0
    %v5997 = vpop.f32.mrb[0].mxu0
    %v5998 = vadd.f32 %v5901, %v5997
    %v5999 = vpop.f32.mrb[0].mxu0
    %6000 = vmatprep.mubr.bf16.mxu0 %v5225
    %6001 = vmatmul.mubr.bf16.gmra.mrb[0].mxu0 %v5224
    %v6002 = vpop.f32.mrb[0].mxu0
    %v6003 = vadd.f32 %v5906, %v6002
    %v6004 = vpop.f32.mrb[0].mxu0
    %v6005 = vpop.f32.mrb[0].mxu0
    %v6006 = vadd.f32 %v5909, %v6005
    %v6007 = vpop.f32.mrb[0].mxu0
    %6008 = vmatprep.mubr.bf16.mxu0 %v5234
    %6009 = vmatmul.mubr.bf16.gmra.mrb[0].mxu0 %v5233
    %v6010 = vpop.f32.mrb[0].mxu0
    %v6011 = vadd.f32 %v5914, %v6010
    %v6012 = vpop.f32.mrb[0].mxu0
    %v6013 = vpop.f32.mrb[0].mxu0
    %v6014 = vadd.f32 %v5917, %v6013
    %v6015 = vpop.f32.mrb[0].mxu0
    %6016 = vdwg.mxu0
    %6017 = vmatprep.subr.bf16.mxu0 0
    %6018 = vmatpush1.bf16.msra.mxu0 %v5711
    %6019 = vmatprep.subr.bf16.mxu0 0
    %6020 = vmatpush1.bf16.msra.mxu0 %v5712
    %6021 = vmatprep.subr.bf16.mxu0 0
    %6022 = vmatpush1.bf16.msra.mxu0 %v5713
    %6023 = vmatprep.subr.bf16.mxu0 0
    %6024 = vmatpush1.bf16.msra.mxu0 %v5714
    %6025 = vmatprep.subr.bf16.mxu0 0
    %6026 = vmatpush1.bf16.msra.mxu0 %v5715
    %6027 = vmatprep.subr.bf16.mxu0 0
    %6028 = vmatpush1.bf16.msra.mxu0 %v5716
    %6029 = vmatprep.subr.bf16.mxu0 0
    %6030 = vmatpush1.bf16.msra.mxu0 %v5717
    %6031 = vmatprep.subr.bf16.mxu0 0
    %6032 = vmatpush1.bf16.msra.mxu0 %v5718
    %6033 = vmatprep.subr.bf16.mxu0 0
    %6034 = vmatpush1.bf16.msra.mxu0 %v5719
    %6035 = vmatprep.subr.bf16.mxu0 0
    %6036 = vmatpush1.bf16.msra.mxu0 %v5720
    %6037 = vmatprep.subr.bf16.mxu0 0
    %6038 = vmatpush1.bf16.msra.mxu0 %v5721
    %6039 = vmatprep.subr.bf16.mxu0 0
    %6040 = vmatpush1.bf16.msra.mxu0 %v5722
    %6041 = vmatprep.subr.bf16.mxu0 0
    %6042 = vmatpush1.bf16.msra.mxu0 %v5723
    %6043 = vmatprep.subr.bf16.mxu0 0
    %6044 = vmatpush1.bf16.msra.mxu0 %v5724
    %6045 = vmatprep.subr.bf16.mxu0 0
    %6046 = vmatpush1.bf16.msra.mxu0 %v5725
    %6047 = vmatprep.subr.bf16.mxu0 0
    %6048 = vmatpush1.bf16.msra.mxu0 %v5726
    %6049 = vmatprep.mubr.bf16.mxu0 %v5173
    %6050 = vmatmul.mubr.bf16.gmra.mrb[0].mxu0 %v5172
    %v6051 = vpop.f32.mrb[0].mxu0
    %v6052 = vadd.f32 %v5955, %v6051
    %v6053 = vpop.f32.mrb[0].mxu0
    %v6054 = vpop.f32.mrb[0].mxu0
    %v6055 = vadd.f32 %v5958, %v6054
    %v6056 = vpop.f32.mrb[0].mxu0
    %6057 = vmatprep.mubr.bf16.mxu0 %v5182
    %6058 = vmatmul.mubr.bf16.gmra.mrb[0].mxu0 %v5181
    %v6059 = vpop.f32.mrb[0].mxu0
    %v6060 = vadd.f32 %v5963, %v6059
    %v6061 = vpop.f32.mrb[0].mxu0
    %v6062 = vpop.f32.mrb[0].mxu0
    %v6063 = vadd.f32 %v5966, %v6062
    %v6064 = vpop.f32.mrb[0].mxu0
    %6065 = vmatprep.mubr.bf16.mxu0 %v5191
    %6066 = vmatmul.mubr.bf16.gmra.mrb[0].mxu0 %v5190
    %v6067 = vpop.f32.mrb[0].mxu0
    %v6068 = vadd.f32 %v5971, %v6067
    %v6069 = vpop.f32.mrb[0].mxu0
    %v6070 = vpop.f32.mrb[0].mxu0
    %v6071 = vadd.f32 %v5974, %v6070
    %v6072 = vpop.f32.mrb[0].mxu0
    %6073 = vmatprep.mubr.bf16.mxu0 %v5200
    %6074 = vmatmul.mubr.bf16.gmra.mrb[0].mxu0 %v5199
    %v6075 = vpop.f32.mrb[0].mxu0
    %v6076 = vadd.f32 %v5979, %v6075
    %v6077 = vpop.f32.mrb[0].mxu0
    %v6078 = vpop.f32.mrb[0].mxu0
    %v6079 = vadd.f32 %v5982, %v6078
    %v6080 = vpop.f32.mrb[0].mxu0
    %6081 = vmatprep.mubr.bf16.mxu0 %v5209
    %6082 = vmatmul.mubr.bf16.gmra.mrb[0].mxu0 %v5208
    %v6083 = vpop.f32.mrb[0].mxu0
    %v6084 = vadd.f32 %v5987, %v6083
    %v6085 = vpop.f32.mrb[0].mxu0
    %v6086 = vpop.f32.mrb[0].mxu0
    %v6087 = vadd.f32 %v5990, %v6086
    %v6088 = vpop.f32.mrb[0].mxu0
    %6089 = vmatprep.mubr.bf16.mxu0 %v5218
    %6090 = vmatmul.mubr.bf16.gmra.mrb[0].mxu0 %v5217
    %v6091 = vpop.f32.mrb[0].mxu0
    %v6092 = vadd.f32 %v5995, %v6091
    %v6093 = vpop.f32.mrb[0].mxu0
    %v6094 = vpop.f32.mrb[0].mxu0
    %v6095 = vadd.f32 %v5998, %v6094
    %v6096 = vpop.f32.mrb[0].mxu0
    %6097 = vmatprep.mubr.bf16.mxu0 %v5227
    %6098 = vmatmul.mubr.bf16.gmra.mrb[0].mxu0 %v5226
    %v6099 = vpop.f32.mrb[0].mxu0
    %v6100 = vadd.f32 %v6003, %v6099
    %v6101 = vpop.f32.mrb[0].mxu0
    %v6102 = vpop.f32.mrb[0].mxu0
    %v6103 = vadd.f32 %v6006, %v6102
    %v6104 = vpop.f32.mrb[0].mxu0
    %6105 = vmatprep.mubr.bf16.mxu0 %v5236
    %6106 = vmatmul.mubr.bf16.gmra.mrb[0].mxu0 %v5235
    %v6107 = vpop.f32.mrb[0].mxu0
    %v6108 = vadd.f32 %v6011, %v6107
    %v6109 = vpop.f32.mrb[0].mxu0
    %v6110 = vpop.f32.mrb[0].mxu0
    %v6111 = vadd.f32 %v6014, %v6110
    %v6112 = vpop.f32.mrb[0].mxu0
    %6113 = vdwg.mxu0
    %6114 = vmatprep.subr.bf16.mxu0 0
    %6115 = vmatpush1.bf16.msra.mxu0 %v5727
    %6116 = vmatprep.subr.bf16.mxu0 0
    %6117 = vmatpush1.bf16.msra.mxu0 %v5728
    %6118 = vmatprep.subr.bf16.mxu0 0
    %6119 = vmatpush1.bf16.msra.mxu0 %v5729
    %6120 = vmatprep.subr.bf16.mxu0 0
    %6121 = vmatpush1.bf16.msra.mxu0 %v5730
    %6122 = vmatprep.subr.bf16.mxu0 0
    %6123 = vmatpush1.bf16.msra.mxu0 %v5731
    %6124 = vmatprep.subr.bf16.mxu0 0
    %6125 = vmatpush1.bf16.msra.mxu0 %v5732
    %6126 = vmatprep.subr.bf16.mxu0 0
    %6127 = vmatpush1.bf16.msra.mxu0 %v5733
    %6128 = vmatprep.subr.bf16.mxu0 0
    %6129 = vmatpush1.bf16.msra.mxu0 %v5734
    %6130 = vmatprep.subr.bf16.mxu0 0
    %6131 = vmatpush1.bf16.msra.mxu0 %v5735
    %6132 = vmatprep.subr.bf16.mxu0 0
    %6133 = vmatpush1.bf16.msra.mxu0 %v5736
    %6134 = vmatprep.subr.bf16.mxu0 0
    %6135 = vmatpush1.bf16.msra.mxu0 %v5737
    %6136 = vmatprep.subr.bf16.mxu0 0
    %6137 = vmatpush1.bf16.msra.mxu0 %v5738
    %6138 = vmatprep.subr.bf16.mxu0 0
    %6139 = vmatpush1.bf16.msra.mxu0 %v5739
    %6140 = vmatprep.subr.bf16.mxu0 0
    %6141 = vmatpush1.bf16.msra.mxu0 %v5740
    %6142 = vmatprep.subr.bf16.mxu0 0
    %6143 = vmatpush1.bf16.msra.mxu0 %v5741
    %6144 = vmatprep.subr.bf16.mxu0 0
    %6145 = vmatpush1.bf16.msra.mxu0 %v5742
    %6146 = vmatprep.mubr.bf16.mxu0 %v5175
    %6147 = vmatmul.mubr.bf16.gmra.mrb[0].mxu0 %v5174
    %v6148 = vpop.f32.mrb[0].mxu0
    %v6149 = vadd.f32 %v6052, %v6148
    %v6150 = vpop.f32.mrb[0].mxu0
    %v6151 = vpop.f32.mrb[0].mxu0
    %v6152 = vadd.f32 %v6055, %v6151
    %v6153 = vpop.f32.mrb[0].mxu0
    %6154 = vmatprep.mubr.bf16.mxu0 %v5184
    %6155 = vmatmul.mubr.bf16.gmra.mrb[0].mxu0 %v5183
    %v6156 = vpop.f32.mrb[0].mxu0
    %v6157 = vadd.f32 %v6060, %v6156
    %v6158 = vpop.f32.mrb[0].mxu0
    %v6159 = vpop.f32.mrb[0].mxu0
    %v6160 = vadd.f32 %v6063, %v6159
    %v6161 = vpop.f32.mrb[0].mxu0
    %6162 = vmatprep.mubr.bf16.mxu0 %v5193
    %6163 = vmatmul.mubr.bf16.gmra.mrb[0].mxu0 %v5192
    %v6164 = vpop.f32.mrb[0].mxu0
    %v6165 = vadd.f32 %v6068, %v6164
    %v6166 = vpop.f32.mrb[0].mxu0
    %v6167 = vpop.f32.mrb[0].mxu0
    %v6168 = vadd.f32 %v6071, %v6167
    %v6169 = vpop.f32.mrb[0].mxu0
    %6170 = vmatprep.mubr.bf16.mxu0 %v5202
    %6171 = vmatmul.mubr.bf16.gmra.mrb[0].mxu0 %v5201
    %v6172 = vpop.f32.mrb[0].mxu0
    %v6173 = vadd.f32 %v6076, %v6172
    %v6174 = vpop.f32.mrb[0].mxu0
    %v6175 = vpop.f32.mrb[0].mxu0
    %v6176 = vadd.f32 %v6079, %v6175
    %v6177 = vpop.f32.mrb[0].mxu0
    %6178 = vmatprep.mubr.bf16.mxu0 %v5211
    %6179 = vmatmul.mubr.bf16.gmra.mrb[0].mxu0 %v5210
    %v6180 = vpop.f32.mrb[0].mxu0
    %v6181 = vadd.f32 %v6084, %v6180
    %v6182 = vpop.f32.mrb[0].mxu0
    %v6183 = vpop.f32.mrb[0].mxu0
    %v6184 = vadd.f32 %v6087, %v6183
    %v6185 = vpop.f32.mrb[0].mxu0
    %6186 = vmatprep.mubr.bf16.mxu0 %v5220
    %6187 = vmatmul.mubr.bf16.gmra.mrb[0].mxu0 %v5219
    %v6188 = vpop.f32.mrb[0].mxu0
    %v6189 = vadd.f32 %v6092, %v6188
    %v6190 = vpop.f32.mrb[0].mxu0
    %v6191 = vpop.f32.mrb[0].mxu0
    %v6192 = vadd.f32 %v6095, %v6191
    %v6193 = vpop.f32.mrb[0].mxu0
    %6194 = vmatprep.mubr.bf16.mxu0 %v5229
    %6195 = vmatmul.mubr.bf16.gmra.mrb[0].mxu0 %v5228
    %v6196 = vpop.f32.mrb[0].mxu0
    %v6197 = vadd.f32 %v6100, %v6196
    %v6198 = vpop.f32.mrb[0].mxu0
    %v6199 = vpop.f32.mrb[0].mxu0
    %v6200 = vadd.f32 %v6103, %v6199
    %v6201 = vpop.f32.mrb[0].mxu0
    %6202 = vmatprep.mubr.bf16.mxu0 %v5238
    %6203 = vmatmul.mubr.bf16.gmra.mrb[0].mxu0 %v5237
    %v6204 = vpop.f32.mrb[0].mxu0
    %v6205 = vadd.f32 %v6108, %v6204
    %v6206 = vpop.f32.mrb[0].mxu0
    %v6207 = vpop.f32.mrb[0].mxu0
    %v6208 = vadd.f32 %v6111, %v6207
    %v6209 = vpop.f32.mrb[0].mxu0
    %6210 = vdwg.mxu0
    %6211 = vmatprep.subr.bf16.mxu0 0
    %6212 = vmatpush1.bf16.msra.mxu0 %v5743
    %6213 = vmatprep.subr.bf16.mxu0 0
    %6214 = vmatpush1.bf16.msra.mxu0 %v5744
    %6215 = vmatprep.subr.bf16.mxu0 0
    %6216 = vmatpush1.bf16.msra.mxu0 %v5745
    %6217 = vmatprep.subr.bf16.mxu0 0
    %6218 = vmatpush1.bf16.msra.mxu0 %v5746
    %6219 = vmatprep.subr.bf16.mxu0 0
    %6220 = vmatpush1.bf16.msra.mxu0 %v5747
    %6221 = vmatprep.subr.bf16.mxu0 0
    %6222 = vmatpush1.bf16.msra.mxu0 %v5748
    %6223 = vmatprep.subr.bf16.mxu0 0
    %6224 = vmatpush1.bf16.msra.mxu0 %v5749
    %6225 = vmatprep.subr.bf16.mxu0 0
    %6226 = vmatpush1.bf16.msra.mxu0 %v5750
    %6227 = vmatprep.subr.bf16.mxu0 0
    %6228 = vmatpush1.bf16.msra.mxu0 0
    %6229 = vmatprep.subr.bf16.mxu0 0
    %6230 = vmatpush1.bf16.msra.mxu0 0
    %6231 = vmatprep.subr.bf16.mxu0 0
    %6232 = vmatpush1.bf16.msra.mxu0 0
    %6233 = vmatprep.subr.bf16.mxu0 0
    %6234 = vmatpush1.bf16.msra.mxu0 0
    %6235 = vmatprep.subr.bf16.mxu0 0
    %6236 = vmatpush1.bf16.msra.mxu0 0
    %6237 = vmatprep.subr.bf16.mxu0 0
    %6238 = vmatpush1.bf16.msra.mxu0 0
    %6239 = vmatprep.subr.bf16.mxu0 0
    %6240 = vmatpush1.bf16.msra.mxu0 0
    %6241 = vmatprep.subr.bf16.mxu0 0
    %6242 = vmatpush1.bf16.msra.mxu0 0
    %6243 = vmatprep.mubr.bf16.mxu0 0
    %6244 = vmatmul.mubr.bf16.gmra.mrb[0].mxu0 %v5176
    %v6245 = vpop.f32.mrb[0].mxu0
    %v6246 = vadd.f32 %v6149, %v6245
    %v6247 = vpop.f32.mrb[0].mxu0
    %v6248 = vpop.f32.mrb[0].mxu0
    %v6249 = vadd.f32 %v6152, %v6248
    %v6250 = vpop.f32.mrb[0].mxu0
    %6251 = vmatprep.mubr.bf16.mxu0 0
    %6252 = vmatmul.mubr.bf16.gmra.mrb[0].mxu0 %v5185
    %v6253 = vpop.f32.mrb[0].mxu0
    %v6254 = vadd.f32 %v6157, %v6253
    %v6255 = vpop.f32.mrb[0].mxu0
    %v6256 = vpop.f32.mrb[0].mxu0
    %v6257 = vadd.f32 %v6160, %v6256
    %v6258 = vpop.f32.mrb[0].mxu0
    %6259 = vmatprep.mubr.bf16.mxu0 0
    %6260 = vmatmul.mubr.bf16.gmra.mrb[0].mxu0 %v5194
    %v6261 = vpop.f32.mrb[0].mxu0
    %v6262 = vadd.f32 %v6165, %v6261
    %v6263 = vpop.f32.mrb[0].mxu0
    %v6264 = vpop.f32.mrb[0].mxu0
    %v6265 = vadd.f32 %v6168, %v6264
    %v6266 = vpop.f32.mrb[0].mxu0
    %6267 = vmatprep.mubr.bf16.mxu0 0
    %6268 = vmatmul.mubr.bf16.gmra.mrb[0].mxu0 %v5203
    %v6269 = vpop.f32.mrb[0].mxu0
    %v6270 = vadd.f32 %v6173, %v6269
    %v6271 = vpop.f32.mrb[0].mxu0
    %v6272 = vpop.f32.mrb[0].mxu0
    %v6273 = vadd.f32 %v6176, %v6272
    %v6274 = vpop.f32.mrb[0].mxu0
    %6275 = vmatprep.mubr.bf16.mxu0 0
    %6276 = vmatmul.mubr.bf16.gmra.mrb[0].mxu0 %v5212
    %v6277 = vpop.f32.mrb[0].mxu0
    %v6278 = vadd.f32 %v6181, %v6277
    %v6279 = vpop.f32.mrb[0].mxu0
    %v6280 = vpop.f32.mrb[0].mxu0
    %v6281 = vadd.f32 %v6184, %v6280
    %v6282 = vpop.f32.mrb[0].mxu0
    %6283 = vmatprep.mubr.bf16.mxu0 0
    %6284 = vmatmul.mubr.bf16.gmra.mrb[0].mxu0 %v5221
    %v6285 = vpop.f32.mrb[0].mxu0
    %v6286 = vadd.f32 %v6189, %v6285
    %v6287 = vpop.f32.mrb[0].mxu0
    %v6288 = vpop.f32.mrb[0].mxu0
    %v6289 = vadd.f32 %v6192, %v6288
    %v6290 = vpop.f32.mrb[0].mxu0
    %6291 = vmatprep.mubr.bf16.mxu0 0
    %6292 = vmatmul.mubr.bf16.gmra.mrb[0].mxu0 %v5230
    %v6293 = vpop.f32.mrb[0].mxu0
    %v6294 = vadd.f32 %v6197, %v6293
    %v6295 = vpop.f32.mrb[0].mxu0
    %v6296 = vpop.f32.mrb[0].mxu0
    %v6297 = vadd.f32 %v6200, %v6296
    %v6298 = vpop.f32.mrb[0].mxu0
    %6299 = vmatprep.mubr.bf16.mxu0 0
    %6300 = vmatmul.mubr.bf16.gmra.mrb[0].mxu0 %v5239
    %v6301 = vpop.f32.mrb[0].mxu0
    %v6302 = vadd.f32 %v6205, %v6301
    %v6303 = vpop.f32.mrb[0].mxu0
    %v6304 = vpop.f32.mrb[0].mxu0
    %v6305 = vadd.f32 %v6208, %v6304
    %v6306 = vpop.f32.mrb[0].mxu0
    %6307 = vdwg.mxu0
    %v6308 = vmax.f32 %v6246, 0.0
    %v6309 = vmax.f32 %v6249, 0.0
    %v6310 = vmax.f32 %v6254, 0.0
    %v6311 = vmax.f32 %v6257, 0.0
    %v6312 = vmax.f32 %v6262, 0.0
    %v6313 = vmax.f32 %v6265, 0.0
    %v6314 = vmax.f32 %v6270, 0.0
    %v6315 = vmax.f32 %v6273, 0.0
    %v6316 = vmax.f32 %v6278, 0.0
    %v6317 = vmax.f32 %v6281, 0.0
    %v6318 = vmax.f32 %v6286, 0.0
    %v6319 = vmax.f32 %v6289, 0.0
    %v6320 = vmax.f32 %v6294, 0.0
    %v6321 = vmax.f32 %v6297, 0.0
    %v6322 = vmax.f32 %v6302, 0.0
    %v6323 = vmax.f32 %v6305, 0.0
    %v6324 = vadd.f32 %v6308, %v6309
    %v6325 = vadd.f32 %v6324, %v6310
    %v6326 = vadd.f32 %v6325, %v6311
    %v6327 = vadd.f32 %v6326, %v6312
    %v6328 = vadd.f32 %v6327, %v6313
    %v6329 = vadd.f32 %v6328, %v6314
    %v6330 = vadd.f32 %v6329, %v6315
    %v6331 = vadd.f32 %v6330, %v6316
    %v6332 = vadd.f32 %v6331, %v6317
    %v6333 = vadd.f32 %v6332, %v6318
    %v6334 = vadd.f32 %v6333, %v6319
    %v6335 = vadd.f32 %v6334, %v6320
    %v6336 = vadd.f32 %v6335, %v6321
    %v6337 = vadd.f32 %v6336, %v6322
    %v6338 = vadd.f32 %v6337, %v6323
    %v6339 = vrot.slane %v6338, 4
    %v6340 = vadd.f32 %v6338, %v6339
    %v6341 = vrot.slane %v6340, 2
    %v6342 = vadd.f32 %v6340, %v6341
    %v6343 = vrot.slane %v6342, 1
    %v6344 = vadd.f32 %v6342, %v6343
    %v6345 = vmul.f32 %v6344, %v3166
    %v6346 = vsub.f32 %v6308, %v6345
    %v6347 = vsub.f32 %v6309, %v6345
    %v6348 = vsub.f32 %v6310, %v6345
    %v6349 = vsub.f32 %v6311, %v6345
    %v6350 = vsub.f32 %v6312, %v6345
    %v6351 = vsub.f32 %v6313, %v6345
    %v6352 = vsub.f32 %v6314, %v6345
    %v6353 = vsub.f32 %v6315, %v6345
    %v6354 = vsub.f32 %v6316, %v6345
    %v6355 = vsub.f32 %v6317, %v6345
    %v6356 = vsub.f32 %v6318, %v6345
    %v6357 = vsub.f32 %v6319, %v6345
    %v6358 = vsub.f32 %v6320, %v6345
    %v6359 = vsub.f32 %v6321, %v6345
    %v6360 = vsub.f32 %v6322, %v6345
    %v6361 = vsub.f32 %v6323, %v6345
    %v6362 = vmul.f32 %v6346, %v6346
    %v6363 = vmul.f32 %v6347, %v6347
    %v6364 = vmul.f32 %v6348, %v6348
    %v6365 = vmul.f32 %v6349, %v6349
    %v6366 = vmul.f32 %v6350, %v6350
    %v6367 = vmul.f32 %v6351, %v6351
    %v6368 = vmul.f32 %v6352, %v6352
    %v6369 = vmul.f32 %v6353, %v6353
    %v6370 = vmul.f32 %v6354, %v6354
    %v6371 = vmul.f32 %v6355, %v6355
    %v6372 = vmul.f32 %v6356, %v6356
    %v6373 = vmul.f32 %v6357, %v6357
    %v6374 = vmul.f32 %v6358, %v6358
    %v6375 = vmul.f32 %v6359, %v6359
    %v6376 = vmul.f32 %v6360, %v6360
    %v6377 = vmul.f32 %v6361, %v6361
    %v6378 = vadd.f32 %v6362, %v6363
    %v6379 = vadd.f32 %v6378, %v6364
    %v6380 = vadd.f32 %v6379, %v6365
    %v6381 = vadd.f32 %v6380, %v6366
    %v6382 = vadd.f32 %v6381, %v6367
    %v6383 = vadd.f32 %v6382, %v6368
    %v6384 = vadd.f32 %v6383, %v6369
    %v6385 = vadd.f32 %v6384, %v6370
    %v6386 = vadd.f32 %v6385, %v6371
    %v6387 = vadd.f32 %v6386, %v6372
    %v6388 = vadd.f32 %v6387, %v6373
    %v6389 = vadd.f32 %v6388, %v6374
    %v6390 = vadd.f32 %v6389, %v6375
    %v6391 = vadd.f32 %v6390, %v6376
    %v6392 = vadd.f32 %v6391, %v6377
    %v6393 = vrot.slane %v6392, 4
    %v6394 = vadd.f32 %v6392, %v6393
    %v6395 = vrot.slane %v6394, 2
    %v6396 = vadd.f32 %v6394, %v6395
    %v6397 = vrot.slane %v6396, 1
    %v6398 = vadd.f32 %v6396, %v6397
    %v6399 = vmul.f32 %v6398, %v3166
    %v6400 = vadd.f32 %v6399, 1e-05
    %v6401 = vrsqrt.pop %v6400
    %v6402 = vmul.f32 %v6346, %v6401
    %v6403 = vmul.f32 %v6347, %v6401
    %v6404 = vmul.f32 %v6348, %v6401
    %v6405 = vmul.f32 %v6349, %v6401
    %v6406 = vmul.f32 %v6350, %v6401
    %v6407 = vmul.f32 %v6351, %v6401
    %v6408 = vmul.f32 %v6352, %v6401
    %v6409 = vmul.f32 %v6353, %v6401
    %v6410 = vmul.f32 %v6354, %v6401
    %v6411 = vmul.f32 %v6355, %v6401
    %v6412 = vmul.f32 %v6356, %v6401
    %v6413 = vmul.f32 %v6357, %v6401
    %v6414 = vmul.f32 %v6358, %v6401
    %v6415 = vmul.f32 %v6359, %v6401
    %v6416 = vmul.f32 %v6360, %v6401
    %v6417 = vmul.f32 %v6361, %v6401
    %v6418 = vpack.c.bf16 %v6403, %v6402
    %v6419 = vpack.c.bf16 %v6405, %v6404
    %v6420 = vpack.c.bf16 %v6407, %v6406
    %v6421 = vpack.c.bf16 %v6409, %v6408
    %v6422 = vpack.c.bf16 %v6411, %v6410
    %v6423 = vpack.c.bf16 %v6413, %v6412
    %v6424 = vpack.c.bf16 %v6415, %v6414
    %v6425 = vpack.c.bf16 %v6417, %v6416
    %v6426 = vld [vmem:[%s5] sm:$0xff]
    %v6427 = vld [vmem:[%s5 + $0x8] sm:$0xff]
    %v6428 = vld [vmem:[%s5 + $0x10] sm:$0xff]
    %v6429 = vld [vmem:[%s5 + $0x18] sm:$0xff]
    %v6430 = vld [vmem:[%s5 + $0x20] sm:$0xff]
    %v6431 = vld [vmem:[%s5 + $0x28] sm:$0xff]
    %v6432 = vld [vmem:[%s5 + $0x30] sm:$0xff]
    %v6433 = vld [vmem:[%s5 + $0x38] sm:$0xff]
    %v6434 = vld [vmem:[%s5 + $0x40] sm:$0xff]
    %v6435 = vld [vmem:[%s5 + $0x48] sm:$0xff]
    %v6436 = vld [vmem:[%s5 + $0x50] sm:$0xff]
    %v6437 = vld [vmem:[%s5 + $0x58] sm:$0xff]
    %v6438 = vld [vmem:[%s5 + $0x60] sm:$0xff]
    %v6439 = vld [vmem:[%s5 + $0x68] sm:$0xff]
    %v6440 = vld [vmem:[%s5 + $0x70] sm:$0xff]
    %v6441 = vld [vmem:[%s5 + $0x78] sm:$0xff]
    %v6442 = vld [vmem:[%s6] sm:$0x3]
    %v6444 = vlaneseq
    %v6445 = vshrl.u32 %v6444, 7
    %v6446 = vsub.s32 0, %v6445
    %v6447 = vrot.slane %v6442, %v6446
    %v6448 = vlaneseq
    %v6449 = vshrl.u32 %v6448, 7
    %v6450 = vsub.s32 1, %v6449
    %v6451 = vrot.slane %v6442, %v6450
    %v6470 = vunpack.c.l.b16 %v6426
    %v6471 = vunpack.c.h.b16 %v6426
    %v6472 = vunpack.c.l.b16 %v6427
    %v6473 = vunpack.c.h.b16 %v6427
    %v6474 = vunpack.c.l.b16 %v6428
    %v6475 = vunpack.c.h.b16 %v6428
    %v6476 = vunpack.c.l.b16 %v6429
    %v6477 = vunpack.c.h.b16 %v6429
    %v6478 = vunpack.c.l.b16 %v6430
    %v6479 = vunpack.c.h.b16 %v6430
    %v6480 = vunpack.c.l.b16 %v6431
    %v6481 = vunpack.c.h.b16 %v6431
    %v6482 = vunpack.c.l.b16 %v6432
    %v6483 = vunpack.c.h.b16 %v6432
    %v6484 = vunpack.c.l.b16 %v6433
    %v6485 = vunpack.c.h.b16 %v6433
    %v6486 = vunpack.c.l.b16 %v6434
    %v6487 = vunpack.c.h.b16 %v6434
    %v6488 = vunpack.c.l.b16 %v6435
    %v6489 = vunpack.c.h.b16 %v6435
    %v6490 = vunpack.c.l.b16 %v6436
    %v6491 = vunpack.c.h.b16 %v6436
    %v6492 = vunpack.c.l.b16 %v6437
    %v6493 = vunpack.c.h.b16 %v6437
    %v6494 = vunpack.c.l.b16 %v6438
    %v6495 = vunpack.c.h.b16 %v6438
    %v6496 = vunpack.c.l.b16 %v6439
    %v6497 = vunpack.c.h.b16 %v6439
    %v6498 = vunpack.c.l.b16 %v6440
    %v6499 = vunpack.c.h.b16 %v6440
    %v6500 = vunpack.c.l.b16 %v6441
    %v6501 = vunpack.c.h.b16 %v6441
    %v6502 = vpack.c.b16 %v6472, %v6470
    %v6503 = vpack.c.b16 %v6473, %v6471
    %v6504 = vpack.c.b16 %v6476, %v6474
    %v6505 = vpack.c.b16 %v6477, %v6475
    %v6506 = vpack.c.b16 %v6480, %v6478
    %v6507 = vpack.c.b16 %v6481, %v6479
    %v6508 = vpack.c.b16 %v6484, %v6482
    %v6509 = vpack.c.b16 %v6485, %v6483
    %v6510 = vpack.c.b16 %v6488, %v6486
    %v6511 = vpack.c.b16 %v6489, %v6487
    %v6512 = vpack.c.b16 %v6492, %v6490
    %v6513 = vpack.c.b16 %v6493, %v6491
    %v6514 = vpack.c.b16 %v6496, %v6494
    %v6515 = vpack.c.b16 %v6497, %v6495
    %v6516 = vpack.c.b16 %v6500, %v6498
    %v6517 = vpack.c.b16 %v6501, %v6499
    %6534 = vmatprep.subr.bf16.mxu0 %v6503
    %6535 = vmatpush1.bf16.msra.mxu0 %v6502
    %6536 = vmatprep.subr.bf16.mxu0 %v6505
    %6537 = vmatpush1.bf16.msra.mxu0 %v6504
    %6538 = vmatprep.subr.bf16.mxu0 %v6507
    %6539 = vmatpush1.bf16.msra.mxu0 %v6506
    %6540 = vmatprep.subr.bf16.mxu0 %v6509
    %6541 = vmatpush1.bf16.msra.mxu0 %v6508
    %6542 = vmatprep.subr.bf16.mxu0 %v6511
    %6543 = vmatpush1.bf16.msra.mxu0 %v6510
    %6544 = vmatprep.subr.bf16.mxu0 %v6513
    %6545 = vmatpush1.bf16.msra.mxu0 %v6512
    %6546 = vmatprep.subr.bf16.mxu0 %v6515
    %6547 = vmatpush1.bf16.msra.mxu0 %v6514
    %6548 = vmatprep.subr.bf16.mxu0 %v6517
    %6549 = vmatpush1.bf16.msra.mxu0 %v6516
    %6550 = vmatprep.subr.bf16.mxu0 0
    %6551 = vmatpush1.bf16.msra.mxu0 0
    %6552 = vmatprep.subr.bf16.mxu0 0
    %6553 = vmatpush1.bf16.msra.mxu0 0
    %6554 = vmatprep.subr.bf16.mxu0 0
    %6555 = vmatpush1.bf16.msra.mxu0 0
    %6556 = vmatprep.subr.bf16.mxu0 0
    %6557 = vmatpush1.bf16.msra.mxu0 0
    %6558 = vmatprep.subr.bf16.mxu0 0
    %6559 = vmatpush1.bf16.msra.mxu0 0
    %6560 = vmatprep.subr.bf16.mxu0 0
    %6561 = vmatpush1.bf16.msra.mxu0 0
    %6562 = vmatprep.subr.bf16.mxu0 0
    %6563 = vmatpush1.bf16.msra.mxu0 0
    %6564 = vmatprep.subr.bf16.mxu0 0
    %6565 = vmatpush1.bf16.msra.mxu0 0
    %6566 = vmatprep.mubr.bf16.mxu0 0
    %6567 = vmatmul.mubr.bf16.gmra.mrb[0].mxu0 %v6418
    %v6568 = vpop.f32.mrb[0].mxu0
    %v6569 = vadd.f32 %v6447, %v6568
    %v6570 = vpop.f32.mrb[0].mxu0
    %v6571 = vadd.f32 %v6451, %v6570
    %v6572 = vpop.f32.mrb[0].mxu0
    %v6573 = vadd.f32 %v6447, %v6572
    %v6574 = vpop.f32.mrb[0].mxu0
    %v6575 = vadd.f32 %v6451, %v6574
    %6576 = vmatprep.mubr.bf16.mxu0 0
    %6577 = vmatmul.mubr.bf16.gmra.mrb[0].mxu0 %v6419
    %v6578 = vpop.f32.mrb[0].mxu0
    %v6579 = vadd.f32 %v6447, %v6578
    %v6580 = vpop.f32.mrb[0].mxu0
    %v6581 = vadd.f32 %v6451, %v6580
    %v6582 = vpop.f32.mrb[0].mxu0
    %v6583 = vadd.f32 %v6447, %v6582
    %v6584 = vpop.f32.mrb[0].mxu0
    %v6585 = vadd.f32 %v6451, %v6584
    %6586 = vmatprep.mubr.bf16.mxu0 0
    %6587 = vmatmul.mubr.bf16.gmra.mrb[0].mxu0 %v6420
    %v6588 = vpop.f32.mrb[0].mxu0
    %v6589 = vadd.f32 %v6447, %v6588
    %v6590 = vpop.f32.mrb[0].mxu0
    %v6591 = vadd.f32 %v6451, %v6590
    %v6592 = vpop.f32.mrb[0].mxu0
    %v6593 = vadd.f32 %v6447, %v6592
    %v6594 = vpop.f32.mrb[0].mxu0
    %v6595 = vadd.f32 %v6451, %v6594
    %6596 = vmatprep.mubr.bf16.mxu0 0
    %6597 = vmatmul.mubr.bf16.gmra.mrb[0].mxu0 %v6421
    %v6598 = vpop.f32.mrb[0].mxu0
    %v6599 = vadd.f32 %v6447, %v6598
    %v6600 = vpop.f32.mrb[0].mxu0
    %v6601 = vadd.f32 %v6451, %v6600
    %v6602 = vpop.f32.mrb[0].mxu0
    %v6603 = vadd.f32 %v6447, %v6602
    %v6604 = vpop.f32.mrb[0].mxu0
    %v6605 = vadd.f32 %v6451, %v6604
    %6606 = vmatprep.mubr.bf16.mxu0 0
    %6607 = vmatmul.mubr.bf16.gmra.mrb[0].mxu0 %v6422
    %v6608 = vpop.f32.mrb[0].mxu0
    %v6609 = vadd.f32 %v6447, %v6608
    %v6610 = vpop.f32.mrb[0].mxu0
    %v6611 = vadd.f32 %v6451, %v6610
    %v6612 = vpop.f32.mrb[0].mxu0
    %v6613 = vadd.f32 %v6447, %v6612
    %v6614 = vpop.f32.mrb[0].mxu0
    %v6615 = vadd.f32 %v6451, %v6614
    %6616 = vmatprep.mubr.bf16.mxu0 0
    %6617 = vmatmul.mubr.bf16.gmra.mrb[0].mxu0 %v6423
    %v6618 = vpop.f32.mrb[0].mxu0
    %v6619 = vadd.f32 %v6447, %v6618
    %v6620 = vpop.f32.mrb[0].mxu0
    %v6621 = vadd.f32 %v6451, %v6620
    %v6622 = vpop.f32.mrb[0].mxu0
    %v6623 = vadd.f32 %v6447, %v6622
    %v6624 = vpop.f32.mrb[0].mxu0
    %v6625 = vadd.f32 %v6451, %v6624
    %6626 = vmatprep.mubr.bf16.mxu0 0
    %6627 = vmatmul.mubr.bf16.gmra.mrb[0].mxu0 %v6424
    %v6628 = vpop.f32.mrb[0].mxu0
    %v6629 = vadd.f32 %v6447, %v6628
    %v6630 = vpop.f32.mrb[0].mxu0
    %v6631 = vadd.f32 %v6451, %v6630
    %v6632 = vpop.f32.mrb[0].mxu0
    %v6633 = vadd.f32 %v6447, %v6632
    %v6634 = vpop.f32.mrb[0].mxu0
    %v6635 = vadd.f32 %v6451, %v6634
    %6636 = vmatprep.mubr.bf16.mxu0 0
    %6637 = vmatmul.mubr.bf16.gmra.mrb[0].mxu0 %v6425
    %v6638 = vpop.f32.mrb[0].mxu0
    %v6639 = vadd.f32 %v6447, %v6638
    %v6640 = vpop.f32.mrb[0].mxu0
    %v6641 = vadd.f32 %v6451, %v6640
    %v6642 = vpop.f32.mrb[0].mxu0
    %v6643 = vadd.f32 %v6447, %v6642
    %v6644 = vpop.f32.mrb[0].mxu0
    %v6645 = vadd.f32 %v6451, %v6644
    %6646 = vdwg.mxu0
    %v6647 = vmax.f32 %v6569, 0.0
    %v6648 = vmax.f32 %v6571, 0.0
    %v6649 = vmax.f32 %v6573, 0.0
    %v6650 = vmax.f32 %v6575, 0.0
    %v6651 = vmax.f32 %v6579, 0.0
    %v6652 = vmax.f32 %v6581, 0.0
    %v6653 = vmax.f32 %v6583, 0.0
    %v6654 = vmax.f32 %v6585, 0.0
    %v6655 = vmax.f32 %v6589, 0.0
    %v6656 = vmax.f32 %v6591, 0.0
    %v6657 = vmax.f32 %v6593, 0.0
    %v6658 = vmax.f32 %v6595, 0.0
    %v6659 = vmax.f32 %v6599, 0.0
    %v6660 = vmax.f32 %v6601, 0.0
    %v6661 = vmax.f32 %v6603, 0.0
    %v6662 = vmax.f32 %v6605, 0.0
    %v6663 = vmax.f32 %v6609, 0.0
    %v6664 = vmax.f32 %v6611, 0.0
    %v6665 = vmax.f32 %v6613, 0.0
    %v6666 = vmax.f32 %v6615, 0.0
    %v6667 = vmax.f32 %v6619, 0.0
    %v6668 = vmax.f32 %v6621, 0.0
    %v6669 = vmax.f32 %v6623, 0.0
    %v6670 = vmax.f32 %v6625, 0.0
    %v6671 = vmax.f32 %v6629, 0.0
    %v6672 = vmax.f32 %v6631, 0.0
    %v6673 = vmax.f32 %v6633, 0.0
    %v6674 = vmax.f32 %v6635, 0.0
    %v6675 = vmax.f32 %v6639, 0.0
    %v6676 = vmax.f32 %v6641, 0.0
    %v6677 = vmax.f32 %v6643, 0.0
    %v6678 = vmax.f32 %v6645, 0.0
    %v6679 = vpack.c.bf16 %v6649, %v6647
    %v6680 = vpack.c.bf16 %v6650, %v6648
    %v6681 = vpack.c.bf16 %v6653, %v6651
    %v6682 = vpack.c.bf16 %v6654, %v6652
    %v6683 = vpack.c.bf16 %v6657, %v6655
    %v6684 = vpack.c.bf16 %v6658, %v6656
    %v6685 = vpack.c.bf16 %v6661, %v6659
    %v6686 = vpack.c.bf16 %v6662, %v6660
    %v6687 = vpack.c.bf16 %v6665, %v6663
    %v6688 = vpack.c.bf16 %v6666, %v6664
    %v6689 = vpack.c.bf16 %v6669, %v6667
    %v6690 = vpack.c.bf16 %v6670, %v6668
    %v6691 = vpack.c.bf16 %v6673, %v6671
    %v6692 = vpack.c.bf16 %v6674, %v6672
    %v6693 = vpack.c.bf16 %v6677, %v6675
    %v6694 = vpack.c.bf16 %v6678, %v6676
    %v6711 = vunpack.c.l.b16 %v6679
    %v6712 = vunpack.c.l.b16 %v6680
    %v6713 = vunpack.c.h.b16 %v6679
    %v6714 = vunpack.c.h.b16 %v6680
    %v6715 = vunpack.c.l.b16 %v6681
    %v6716 = vunpack.c.l.b16 %v6682
    %v6717 = vunpack.c.h.b16 %v6681
    %v6718 = vunpack.c.h.b16 %v6682
    %v6719 = vunpack.c.l.b16 %v6683
    %v6720 = vunpack.c.l.b16 %v6684
    %v6721 = vunpack.c.h.b16 %v6683
    %v6722 = vunpack.c.h.b16 %v6684
    %v6723 = vunpack.c.l.b16 %v6685
    %v6724 = vunpack.c.l.b16 %v6686
    %v6725 = vunpack.c.h.b16 %v6685
    %v6726 = vunpack.c.h.b16 %v6686
    %v6727 = vunpack.c.l.b16 %v6687
    %v6728 = vunpack.c.l.b16 %v6688
    %v6729 = vunpack.c.h.b16 %v6687
    %v6730 = vunpack.c.h.b16 %v6688
    %v6731 = vunpack.c.l.b16 %v6689
    %v6732 = vunpack.c.l.b16 %v6690
    %v6733 = vunpack.c.h.b16 %v6689
    %v6734 = vunpack.c.h.b16 %v6690
    %v6735 = vunpack.c.l.b16 %v6691
    %v6736 = vunpack.c.l.b16 %v6692
    %v6737 = vunpack.c.h.b16 %v6691
    %v6738 = vunpack.c.h.b16 %v6692
    %v6739 = vunpack.c.l.b16 %v6693
    %v6740 = vunpack.c.l.b16 %v6694
    %v6741 = vunpack.c.h.b16 %v6693
    %v6742 = vunpack.c.h.b16 %v6694
    %v6743 = vpack.c.b16 %v6712, %v6711
    %v6744 = vpack.c.b16 %v6714, %v6713
    %v6745 = vpack.c.b16 %v6716, %v6715
    %v6746 = vpack.c.b16 %v6718, %v6717
    %v6747 = vpack.c.b16 %v6720, %v6719
    %v6748 = vpack.c.b16 %v6722, %v6721
    %v6749 = vpack.c.b16 %v6724, %v6723
    %v6750 = vpack.c.b16 %v6726, %v6725
    %v6751 = vpack.c.b16 %v6728, %v6727
    %v6752 = vpack.c.b16 %v6730, %v6729
    %v6753 = vpack.c.b16 %v6732, %v6731
    %v6754 = vpack.c.b16 %v6734, %v6733
    %v6755 = vpack.c.b16 %v6736, %v6735
    %v6756 = vpack.c.b16 %v6738, %v6737
    %v6757 = vpack.c.b16 %v6740, %v6739
    %v6758 = vpack.c.b16 %v6742, %v6741
    %6775 = vst [vmem:[%s7] sm:$0xff] %v6743
    %6776 = vst [vmem:[%s7 + $0x8] sm:$0xff] %v6744
    %6777 = vst [vmem:[%s7 + $0x10] sm:$0xff] %v6745
    %6778 = vst [vmem:[%s7 + $0x18] sm:$0xff] %v6746
    %6779 = vst [vmem:[%s7 + $0x20] sm:$0xff] %v6747
    %6780 = vst [vmem:[%s7 + $0x28] sm:$0xff] %v6748
    %6781 = vst [vmem:[%s7 + $0x30] sm:$0xff] %v6749
    %6782 = vst [vmem:[%s7 + $0x38] sm:$0xff] %v6750
    %6783 = vst [vmem:[%s7 + $0x40] sm:$0xff] %v6751
    %6784 = vst [vmem:[%s7 + $0x48] sm:$0xff] %v6752
    %6785 = vst [vmem:[%s7 + $0x50] sm:$0xff] %v6753
    %6786 = vst [vmem:[%s7 + $0x58] sm:$0xff] %v6754
    %6787 = vst [vmem:[%s7 + $0x60] sm:$0xff] %v6755
    %6788 = vst [vmem:[%s7 + $0x68] sm:$0xff] %v6756
    %6789 = vst [vmem:[%s7 + $0x70] sm:$0xff] %v6757
    %6790 = vst [vmem:[%s7 + $0x78] sm:$0xff] %v6758
    // Predicated region
    $region38: #{decoder_block_forward.1} parent=1 // pred_check
      _
    $region39: #{decoder_block_forward.1} parent=1 // pred_check_branch
      %6792 = sbr.rel (0) target = $region41
    $region40: #{decoder_block_forward.1} parent=1 // pred_region
      _
    $region41: #{decoder_block_forward.1} parent=1 // pred_fallthru
      _
    // Predicated region
    $region42: #{decoder_block_forward.1} parent=1 // pred_check
      _
    $region43: #{decoder_block_forward.1} parent=1 // pred_check_branch
      %6794 = sbr.rel (0) target = $region45
    $region44: #{decoder_block_forward.1} parent=1 // pred_region
      _
    $region45: #{decoder_block_forward.1} parent=1 // pred_fallthru
      _
    %6795 = vsyncpa [#allocation5], 1
    %6796 = vsyncpa [#allocation7], 1

</llo_original>
